<compile_context>
chip_gen: v5e
topology: v5e:2x2
jax: 0.10.0
libtpu: 0.0.40
codegen_flags: <defaults>
</compile_context>

<pallas_src>
import jax
import jax.numpy as jnp
from jax.experimental import pallas as pl
from jax.experimental.pallas import tpu as pltpu

_EPS = 1e-5  # nn.InstanceNorm2d default eps (affine=False, no running stats)


# ---------------------------------------------------------------------------
# One-time parameter preparation (hoisted out of the per-call forward).
# ---------------------------------------------------------------------------
def _tconv_band_matrix(w, h_in):
    """ConvTranspose2d((25,1), stride=1) as a banded matrix B:
       y[w, h1*Co+co] = sum_{h0,ci} x[w, h0*Ci+ci] * B[h0*Ci+ci, h1*Co+co]."""
    ci, co, kh, _ = w.shape
    h_out = h_in + kh - 1
    d = jnp.arange(h_out)[None, :] - jnp.arange(h_in)[:, None]      # h1 - h0
    valid = (d >= 0) & (d < kh)
    g = w[:, :, :, 0][:, :, jnp.clip(d, 0, kh - 1)]                 # (Ci,Co,h_in,h_out)
    g = jnp.where(valid[None, None], g, 0.0)
    return jnp.transpose(g, (2, 0, 3, 1)).reshape(h_in * ci, h_out * co)


def _dw_lane_weights(w, h):
    """Depthwise 3x3 weights as 9 per-lane vectors for the (W, h*C) layout."""
    c = w.shape[0]
    k = jnp.transpose(w[:, 0], (1, 2, 0)).reshape(9, 1, c)          # (9, 1, C)
    return jnp.tile(k, (1, h, 1)).reshape(9, h * c)                 # (9, h*C)


def _pw_block(w, h):
    """1x1 Conv2d as a block-diagonal matmul for the (W, h*C) layout."""
    small = jnp.transpose(w[:, :, 0, 0], (1, 0))                    # (Ci, Co)
    return jnp.kron(jnp.eye(h, dtype=small.dtype), small)           # (h*Ci, h*Co)


def prepare_params(params, h_in):
    f32 = jnp.float32
    c = params["tconv1_w"].shape[0]
    h1 = h_in + params["tconv1_w"].shape[2] - 1
    h2 = h1 + params["tconv2_w"].shape[2] - 1
    eye_c = jnp.eye(c, dtype=f32)
    return {
        "B1": _tconv_band_matrix(params["tconv1_w"].astype(f32), h_in),
        "b1": jnp.tile(params["tconv1_b"].astype(f32), h1)[None, :],
        "B2": _tconv_band_matrix(params["tconv2_w"].astype(f32), h1),
        "b2": jnp.tile(params["tconv2_b"].astype(f32), h2)[None, :],
        "K1": _dw_lane_weights(params["ds1_dw"].astype(f32), h2),
        "PW1": _pw_block(params["ds1_pw"].astype(f32), h2),
        "K2": _dw_lane_weights(params["ds2_dw"].astype(f32), h2),
        "PW2": _pw_block(params["ds2_pw"].astype(f32), h2),
        "CLS": _pw_block(params["cls_w"].astype(f32), h2),
        "clsb": jnp.tile(params["cls_b"].astype(f32), h2)[None, :],
        "S": jnp.tile(eye_c, (h2, 1)),   # (h2*C, C)  per-channel reduce
        "ST": jnp.tile(eye_c, (1, h2)),  # (C, h2*C)  per-channel broadcast
    }


# ---------------------------------------------------------------------------
# Fused kernel: one grid step per sample, everything in VMEM.
# ---------------------------------------------------------------------------
def _fused_kernel(x_ref, b1m_ref, b1b_ref, b2m_ref, b2b_ref,
                  k1_ref, pw1_ref, k2_ref, pw2_ref,
                  cls_ref, clsb_ref, s_ref, st_ref, o_ref):
    f32 = jnp.float32
    w_rows = x_ref.shape[1]              # W
    hc = b2m_ref.shape[1]                # H2 * C
    c = s_ref.shape[1]                   # C
    inv_n = 1.0 / float(w_rows * (hc // c))

    x0 = x_ref[0]                        # (W, H0*C)

    # --- tconv1 + tconv2: each whole 25-tap transposed conv is ONE matmul ---
    y = jnp.dot(x0, b1m_ref[...], preferred_element_type=f32) + b1b_ref[...]
    y = jnp.dot(y, b2m_ref[...], preferred_element_type=f32) + b2b_ref[...]   # (W, H2*C)

    def instnorm_relu(v):
        # single-pass per-channel stats: sum over W (sublanes), then over h via S.
        col = jnp.concatenate(
            [jnp.sum(v, axis=0, keepdims=True),
             jnp.sum(v * v, axis=0, keepdims=True)], axis=0)                  # (2, HC)
        ch = jnp.dot(col, s_ref[...], preferred_element_type=f32) * inv_n     # (2, C)
        mean = ch[0:1, :]
        var = ch[1:2, :] - mean * mean
        inv_std = jax.lax.rsqrt(var + _EPS)
        aff = jnp.concatenate([inv_std, -mean * inv_std], axis=0)             # (2, C)
        affl = jnp.dot(aff, st_ref[...], preferred_element_type=f32)          # (2, HC)
        return jnp.maximum(v * affl[0:1, :] + affl[1:2, :], 0.0)

    def depthwise3x3(v, kv):
        # zero halo built once in VMEM; 9 statically-shifted windows * per-lane taps
        zc = jnp.zeros((w_rows, c), f32)
        zr = jnp.zeros((1, hc + 2 * c), f32)
        vp = jnp.concatenate(
            [zr, jnp.concatenate([zc, v, zc], axis=1), zr], axis=0)           # (W+2, HC+2C)
        acc = None
        for i in range(3):      # h offset -> lane shift by i*C
            for j in range(3):  # w offset -> sublane shift by j
                win = vp[j:j + w_rows, i * c:i * c + hc]
                contrib = win * kv[i * 3 + j:i * 3 + j + 1, :]
                acc = contrib if acc is None else acc + contrib
        return acc

    def dsconv(v, kv, pwb):
        d = instnorm_relu(depthwise3x3(v, kv))
        p = jnp.dot(d, pwb, preferred_element_type=f32)
        return instnorm_relu(p)

    z = dsconv(y, k1_ref[...], pw1_ref[...])
    z = dsconv(z, k2_ref[...], pw2_ref[...])

    # TODO(synk): nn.Dropout(0.1) is the identity at inference; train-mode RNG dropout not implemented.
    out = jnp.dot(z, cls_ref[...], preferred_element_type=f32) + clsb_ref[...]
    o_ref[0] = out


def _fused_pallas(x_whc, prep):
    n, w, h0c = x_whc.shape
    hk = prep["clsb"].shape[1]
    full2d = lambda a: pl.BlockSpec(a.shape, lambda i: (0, 0))
    return pl.pallas_call(
        _fused_kernel,
        out_shape=jax.ShapeDtypeStruct((n, w, hk), jnp.float32),
        grid=(n,),
        in_specs=[
            pl.BlockSpec((1, w, h0c), lambda i: (i, 0, 0)),
            full2d(prep["B1"]), full2d(prep["b1"]),
            full2d(prep["B2"]), full2d(prep["b2"]),
            full2d(prep["K1"]), full2d(prep["PW1"]),
            full2d(prep["K2"]), full2d(prep["PW2"]),
            full2d(prep["CLS"]), full2d(prep["clsb"]),
            full2d(prep["S"]), full2d(prep["ST"]),
        ],
        out_specs=pl.BlockSpec((1, w, hk), lambda i: (i, 0, 0)),
        compiler_params=pltpu.CompilerParams(
            dimension_semantics=("parallel",)),
    )(x_whc, prep["B1"], prep["b1"], prep["B2"], prep["b2"],
      prep["K1"], prep["PW1"], prep["K2"], prep["PW2"],
      prep["CLS"], prep["clsb"], prep["S"], prep["ST"])


@jax.jit
def transposed_classifier_forward(x_nchw, prep):
    n, c, h, w = x_nchw.shape
    # NCHW -> (N, W, H*C): x[n, w, h*C + c] = x_nchw[n, c, h, w]
    x = jnp.transpose(x_nchw, (0, 3, 2, 1)).reshape(n, w, h * c).astype(jnp.float32)
    out_flat = _fused_pallas(x, prep)                      # (N, W, H2*K)
    h2 = prep["B2"].shape[1] // prep["S"].shape[1]
    k = prep["clsb"].shape[1] // h2
    out = out_flat.reshape(n, w, h2, k)
    return jnp.transpose(out, (0, 3, 2, 1))                # NCHW (N, K, H2, W)


# --------------------- pure-JAX reference (for checking) --------------------
def _ref_inorm(x):
    m = jnp.mean(x, axis=(2, 3), keepdims=True)
    v = jnp.mean((x - m) ** 2, axis=(2, 3), keepdims=True)
    return (x - m) * jax.lax.rsqrt(v + _EPS)


def reference_forward(x, p):
    hi = jax.lax.Precision.HIGHEST

    def conv_t(x, w, b):
        kh, kw = w.shape[2], w.shape[3]
        wf = jnp.transpose(jnp.flip(w, axis=(2, 3)), (1, 0, 2, 3))
        y = jax.lax.conv_general_dilated(
            x, wf, (1, 1), ((kh - 1, kh - 1), (kw - 1, kw - 1)),
            dimension_numbers=("NCHW", "OIHW", "NCHW"), precision=hi)
        return y + b[None, :, None, None]

    def ds(x, wd, wp):
        c = x.shape[1]
        y = jax.lax.conv_general_dilated(
            x, wd, (1, 1), ((1, 1), (1, 1)),
            dimension_numbers=("NCHW", "OIHW", "NCHW"),
            feature_group_count=c, precision=hi)
        y = jnp.maximum(_ref_inorm(y), 0.0)
        y = jax.lax.conv_general_dilated(
            y, wp, (1, 1), ((0, 0), (0, 0)),
            dimension_numbers=("NCHW", "OIHW", "NCHW"), precision=hi)
        return jnp.maximum(_ref_inorm(y), 0.0)

    y = conv_t(x, p["tconv1_w"], p["tconv1_b"])
    y = conv_t(y, p["tconv2_w"], p["tconv2_b"])
    y = ds(y, p["ds1_dw"], p["ds1_pw"])
    y = ds(y, p["ds2_dw"], p["ds2_pw"])
    y = jax.lax.conv_general_dilated(
        y, p["cls_w"], (1, 1), ((0, 0), (0, 0)),
        dimension_numbers=("NCHW", "OIHW", "NCHW"), precision=hi)
    return y + p["cls_b"][None, :, None, None]


if __name__ == "__main__":
    key = jax.random.PRNGKey(0)
    ks = jax.random.split(key, 11)
    N, C, H, W = 2, 4, 16, 16
    NUM_CLASSES = 3

    params = {
        "tconv1_w": 0.1 * jax.random.normal(ks[0], (C, C, 25, 1), jnp.float32),
        "tconv1_b": 0.1 * jax.random.normal(ks[1], (C,), jnp.float32),
        "tconv2_w": 0.1 * jax.random.normal(ks[2], (C, C, 25, 1), jnp.float32),
        "tconv2_b": 0.1 * jax.random.normal(ks[3], (C,), jnp.float32),
        "ds1_dw": 0.2 * jax.random.normal(ks[4], (C, 1, 3, 3), jnp.float32),
        "ds1_pw": 0.2 * jax.random.normal(ks[5], (C, C, 1, 1), jnp.float32),
        "ds2_dw": 0.2 * jax.random.normal(ks[6], (C, 1, 3, 3), jnp.float32),
        "ds2_pw": 0.2 * jax.random.normal(ks[7], (C, C, 1, 1), jnp.float32),
        "cls_w": 0.2 * jax.random.normal(ks[8], (NUM_CLASSES, C, 1, 1), jnp.float32),
        "cls_b": 0.1 * jax.random.normal(ks[9], (NUM_CLASSES,), jnp.float32),
    }
    x = jax.random.normal(ks[10], (N, C, H, W), jnp.float32)

    prep = prepare_params(params, H)          # one-time weight re-layout
    out = jax.block_until_ready(transposed_classifier_forward(x, prep))
    assert out.shape == (N, NUM_CLASSES, H + 48, W), out.shape
    assert bool(jnp.all(jnp.isfinite(out)))

    ref = reference_forward(x, params)
    max_err = float(jnp.max(jnp.abs(out - ref)))
    assert max_err < 1e-2, f"mismatch vs reference, max abs err = {max_err}"

    print("KERNEL_OK")
</pallas_src>

<mosaic_0001>
module attributes {stable_mosaic.version = 11 : i64} {
  func.func @_fused_kernel(%arg0: i32, %arg1: memref<1x16x64xf32, #tpu.memory_space<vmem>>, %arg2: memref<64x160xf32, #tpu.memory_space<vmem>>, %arg3: memref<1x160xf32, #tpu.memory_space<vmem>>, %arg4: memref<160x256xf32, #tpu.memory_space<vmem>>, %arg5: memref<1x256xf32, #tpu.memory_space<vmem>>, %arg6: memref<9x256xf32, #tpu.memory_space<vmem>>, %arg7: memref<256x256xf32, #tpu.memory_space<vmem>>, %arg8: memref<9x256xf32, #tpu.memory_space<vmem>>, %arg9: memref<256x256xf32, #tpu.memory_space<vmem>>, %arg10: memref<256x192xf32, #tpu.memory_space<vmem>>, %arg11: memref<1x192xf32, #tpu.memory_space<vmem>>, %arg12: memref<256x4xf32, #tpu.memory_space<vmem>>, %arg13: memref<4x256xf32, #tpu.memory_space<vmem>>, %arg14: memref<1x16x192xf32, #tpu.memory_space<vmem>>) attributes {dimension_semantics = [#tpu.dimension_semantics<parallel>], iteration_bounds = array<i64: 2>, scalar_prefetch = 0 : i64, scratch_operands = 0 : i64, tpu.core_type = #tpu.core_type<tc>, window_params = [{transform_indices = @transform_0, window_bounds = array<i64: 1, 16, 64>}, {pipeline_mode = #tpu.pipeline_mode<synchronous>, transform_indices = @transform_1, window_bounds = array<i64: 64, 160>}, {pipeline_mode = #tpu.pipeline_mode<synchronous>, transform_indices = @transform_2, window_bounds = array<i64: 1, 160>}, {pipeline_mode = #tpu.pipeline_mode<synchronous>, transform_indices = @transform_3, window_bounds = array<i64: 160, 256>}, {pipeline_mode = #tpu.pipeline_mode<synchronous>, transform_indices = @transform_4, window_bounds = array<i64: 1, 256>}, {pipeline_mode = #tpu.pipeline_mode<synchronous>, transform_indices = @transform_5, window_bounds = array<i64: 9, 256>}, {pipeline_mode = #tpu.pipeline_mode<synchronous>, transform_indices = @transform_6, window_bounds = array<i64: 256, 256>}, {pipeline_mode = #tpu.pipeline_mode<synchronous>, transform_indices = @transform_7, window_bounds = array<i64: 9, 256>}, {pipeline_mode = #tpu.pipeline_mode<synchronous>, transform_indices = @transform_8, window_bounds = array<i64: 256, 256>}, {pipeline_mode = #tpu.pipeline_mode<synchronous>, transform_indices = @transform_9, window_bounds = array<i64: 256, 192>}, {pipeline_mode = #tpu.pipeline_mode<synchronous>, transform_indices = @transform_10, window_bounds = array<i64: 1, 192>}, {pipeline_mode = #tpu.pipeline_mode<synchronous>, transform_indices = @transform_11, window_bounds = array<i64: 256, 4>}, {pipeline_mode = #tpu.pipeline_mode<synchronous>, transform_indices = @transform_12, window_bounds = array<i64: 4, 256>}, {transform_indices = @transform_13, window_bounds = array<i64: 1, 16, 192>}]} {
    %c0 = arith.constant 0 : index
    %c0_0 = arith.constant 0 : index
    %c0_1 = arith.constant 0 : index
    %0 = vector.load %arg1[%c0, %c0_0, %c0_1] : memref<1x16x64xf32, #tpu.memory_space<vmem>>, vector<1x16x64xf32>
    %1 = vector.shape_cast %0 : vector<1x16x64xf32> to vector<16x64xf32>
    %c0_2 = arith.constant 0 : index
    %c0_3 = arith.constant 0 : index
    %2 = vector.load %arg2[%c0_2, %c0_3] : memref<64x160xf32, #tpu.memory_space<vmem>>, vector<64x160xf32>
    %cst = arith.constant dense<0.000000e+00> : vector<16x160xf32>
    %3 = tpu.matmul %1, %2, %cst {dimension_numbers = #tpu.dot_dimension_numbers<[1], [0], [0], [1], [0, 0, 1, 1], [], []>} : vector<16x64xf32>, vector<64x160xf32>, vector<16x160xf32> -> vector<16x160xf32>
    %c0_4 = arith.constant 0 : index
    %c0_5 = arith.constant 0 : index
    %4 = vector.load %arg3[%c0_4, %c0_5] : memref<1x160xf32, #tpu.memory_space<vmem>>, vector<1x160xf32>
    %5 = vector.broadcast %4 : vector<1x160xf32> to vector<16x160xf32>
    %6 = arith.addf %3, %5 : vector<16x160xf32>
    %c0_6 = arith.constant 0 : index
    %c0_7 = arith.constant 0 : index
    %7 = vector.load %arg4[%c0_6, %c0_7] : memref<160x256xf32, #tpu.memory_space<vmem>>, vector<160x256xf32>
    %cst_8 = arith.constant dense<0.000000e+00> : vector<16x256xf32>
    %8 = tpu.matmul %6, %7, %cst_8 {dimension_numbers = #tpu.dot_dimension_numbers<[1], [0], [0], [1], [0, 0, 1, 1], [], []>} : vector<16x160xf32>, vector<160x256xf32>, vector<16x256xf32> -> vector<16x256xf32>
    %c0_9 = arith.constant 0 : index
    %c0_10 = arith.constant 0 : index
    %9 = vector.load %arg5[%c0_9, %c0_10] : memref<1x256xf32, #tpu.memory_space<vmem>>, vector<1x256xf32>
    %10 = vector.broadcast %9 : vector<1x256xf32> to vector<16x256xf32>
    %11 = arith.addf %8, %10 : vector<16x256xf32>
    %c0_11 = arith.constant 0 : index
    %c0_12 = arith.constant 0 : index
    %12 = vector.load %arg6[%c0_11, %c0_12] : memref<9x256xf32, #tpu.memory_space<vmem>>, vector<9x256xf32>
    %c0_13 = arith.constant 0 : index
    %c0_14 = arith.constant 0 : index
    %13 = vector.load %arg7[%c0_13, %c0_14] : memref<256x256xf32, #tpu.memory_space<vmem>>, vector<256x256xf32>
    %cst_15 = arith.constant 0.000000e+00 : f32
    %14 = vector.broadcast %cst_15 : f32 to vector<16x4xf32>
    %cst_16 = arith.constant 0.000000e+00 : f32
    %15 = vector.broadcast %cst_16 : f32 to vector<1x264xf32>
    %16 = tpu.concatenate %14, %11, %14 in 1 : vector<16x4xf32>, vector<16x256xf32>, vector<16x4xf32> -> vector<16x264xf32>
    %17 = tpu.concatenate %15, %16, %15 in 0 : vector<1x264xf32>, vector<16x264xf32>, vector<1x264xf32> -> vector<18x264xf32>
    %18 = vector.extract_strided_slice %17 {offsets = [0, 0], sizes = [16, 256], strides = [1, 1]} : vector<18x264xf32> to vector<16x256xf32>
    %19 = vector.extract_strided_slice %12 {offsets = [0, 0], sizes = [1, 256], strides = [1, 1]} : vector<9x256xf32> to vector<1x256xf32>
    %20 = vector.broadcast %19 : vector<1x256xf32> to vector<16x256xf32>
    %21 = arith.mulf %18, %20 : vector<16x256xf32>
    %22 = vector.extract_strided_slice %17 {offsets = [1, 0], sizes = [16, 256], strides = [1, 1]} : vector<18x264xf32> to vector<16x256xf32>
    %23 = vector.extract_strided_slice %12 {offsets = [1, 0], sizes = [1, 256], strides = [1, 1]} : vector<9x256xf32> to vector<1x256xf32>
    %24 = vector.broadcast %23 : vector<1x256xf32> to vector<16x256xf32>
    %25 = arith.mulf %22, %24 : vector<16x256xf32>
    %26 = arith.addf %21, %25 : vector<16x256xf32>
    %27 = vector.extract_strided_slice %17 {offsets = [2, 0], sizes = [16, 256], strides = [1, 1]} : vector<18x264xf32> to vector<16x256xf32>
    %28 = vector.extract_strided_slice %12 {offsets = [2, 0], sizes = [1, 256], strides = [1, 1]} : vector<9x256xf32> to vector<1x256xf32>
    %29 = vector.broadcast %28 : vector<1x256xf32> to vector<16x256xf32>
    %30 = arith.mulf %27, %29 : vector<16x256xf32>
    %31 = arith.addf %26, %30 : vector<16x256xf32>
    %32 = vector.extract_strided_slice %17 {offsets = [0, 4], sizes = [16, 256], strides = [1, 1]} : vector<18x264xf32> to vector<16x256xf32>
    %33 = vector.extract_strided_slice %12 {offsets = [3, 0], sizes = [1, 256], strides = [1, 1]} : vector<9x256xf32> to vector<1x256xf32>
    %34 = vector.broadcast %33 : vector<1x256xf32> to vector<16x256xf32>
    %35 = arith.mulf %32, %34 : vector<16x256xf32>
    %36 = arith.addf %31, %35 : vector<16x256xf32>
    %37 = vector.extract_strided_slice %17 {offsets = [1, 4], sizes = [16, 256], strides = [1, 1]} : vector<18x264xf32> to vector<16x256xf32>
    %38 = vector.extract_strided_slice %12 {offsets = [4, 0], sizes = [1, 256], strides = [1, 1]} : vector<9x256xf32> to vector<1x256xf32>
    %39 = vector.broadcast %38 : vector<1x256xf32> to vector<16x256xf32>
    %40 = arith.mulf %37, %39 : vector<16x256xf32>
    %41 = arith.addf %36, %40 : vector<16x256xf32>
    %42 = vector.extract_strided_slice %17 {offsets = [2, 4], sizes = [16, 256], strides = [1, 1]} : vector<18x264xf32> to vector<16x256xf32>
    %43 = vector.extract_strided_slice %12 {offsets = [5, 0], sizes = [1, 256], strides = [1, 1]} : vector<9x256xf32> to vector<1x256xf32>
    %44 = vector.broadcast %43 : vector<1x256xf32> to vector<16x256xf32>
    %45 = arith.mulf %42, %44 : vector<16x256xf32>
    %46 = arith.addf %41, %45 : vector<16x256xf32>
    %47 = vector.extract_strided_slice %17 {offsets = [0, 8], sizes = [16, 256], strides = [1, 1]} : vector<18x264xf32> to vector<16x256xf32>
    %48 = vector.extract_strided_slice %12 {offsets = [6, 0], sizes = [1, 256], strides = [1, 1]} : vector<9x256xf32> to vector<1x256xf32>
    %49 = vector.broadcast %48 : vector<1x256xf32> to vector<16x256xf32>
    %50 = arith.mulf %47, %49 : vector<16x256xf32>
    %51 = arith.addf %46, %50 : vector<16x256xf32>
    %52 = vector.extract_strided_slice %17 {offsets = [1, 8], sizes = [16, 256], strides = [1, 1]} : vector<18x264xf32> to vector<16x256xf32>
    %53 = vector.extract_strided_slice %12 {offsets = [7, 0], sizes = [1, 256], strides = [1, 1]} : vector<9x256xf32> to vector<1x256xf32>
    %54 = vector.broadcast %53 : vector<1x256xf32> to vector<16x256xf32>
    %55 = arith.mulf %52, %54 : vector<16x256xf32>
    %56 = arith.addf %51, %55 : vector<16x256xf32>
    %57 = vector.extract_strided_slice %17 {offsets = [2, 8], sizes = [16, 256], strides = [1, 1]} : vector<18x264xf32> to vector<16x256xf32>
    %58 = vector.extract_strided_slice %12 {offsets = [8, 0], sizes = [1, 256], strides = [1, 1]} : vector<9x256xf32> to vector<1x256xf32>
    %59 = vector.broadcast %58 : vector<1x256xf32> to vector<16x256xf32>
    %60 = arith.mulf %57, %59 : vector<16x256xf32>
    %61 = arith.addf %56, %60 : vector<16x256xf32>
    %cst_17 = arith.constant dense<0.000000e+00> : vector<256xf32>
    %62 = vector.multi_reduction <add>, %61, %cst_17 [0] : vector<16x256xf32> to vector<256xf32>
    %63 = vector.shape_cast %62 : vector<256xf32> to vector<1x256xf32>
    %64 = arith.mulf %61, %61 : vector<16x256xf32>
    %cst_18 = arith.constant dense<0.000000e+00> : vector<256xf32>
    %65 = vector.multi_reduction <add>, %64, %cst_18 [0] : vector<16x256xf32> to vector<256xf32>
    %66 = vector.shape_cast %65 : vector<256xf32> to vector<1x256xf32>
    %67 = tpu.concatenate %63, %66 in 0 : vector<1x256xf32>, vector<1x256xf32> -> vector<2x256xf32>
    %c0_19 = arith.constant 0 : index
    %c0_20 = arith.constant 0 : index
    %68 = vector.load %arg12[%c0_19, %c0_20] : memref<256x4xf32, #tpu.memory_space<vmem>>, vector<256x4xf32>
    %cst_21 = arith.constant dense<0.000000e+00> : vector<2x4xf32>
    %69 = tpu.matmul %67, %68, %cst_21 {dimension_numbers = #tpu.dot_dimension_numbers<[1], [0], [0], [1], [0, 0, 1, 1], [], []>} : vector<2x256xf32>, vector<256x4xf32>, vector<2x4xf32> -> vector<2x4xf32>
    %cst_22 = arith.constant 9.765625E-4 : f32
    %70 = vector.broadcast %cst_22 : f32 to vector<2x4xf32>
    %71 = arith.mulf %69, %70 : vector<2x4xf32>
    %72 = vector.extract_strided_slice %71 {offsets = [0, 0], sizes = [1, 4], strides = [1, 1]} : vector<2x4xf32> to vector<1x4xf32>
    %73 = vector.extract_strided_slice %71 {offsets = [1, 0], sizes = [1, 4], strides = [1, 1]} : vector<2x4xf32> to vector<1x4xf32>
    %74 = arith.mulf %72, %72 : vector<1x4xf32>
    %75 = arith.subf %73, %74 : vector<1x4xf32>
    %cst_23 = arith.constant 9.99999974E-6 : f32
    %76 = vector.broadcast %cst_23 : f32 to vector<1x4xf32>
    %77 = arith.addf %75, %76 : vector<1x4xf32>
    %78 = math.rsqrt %77 : vector<1x4xf32>
    %cst_24 = arith.constant 0.000000e+00 : f32
    %79 = vector.broadcast %cst_24 : f32 to vector<1x4xf32>
    %80 = arith.subf %79, %72 : vector<1x4xf32>
    %81 = arith.mulf %80, %78 : vector<1x4xf32>
    %82 = tpu.concatenate %78, %81 in 0 : vector<1x4xf32>, vector<1x4xf32> -> vector<2x4xf32>
    %c0_25 = arith.constant 0 : index
    %c0_26 = arith.constant 0 : index
    %83 = vector.load %arg13[%c0_25, %c0_26] : memref<4x256xf32, #tpu.memory_space<vmem>>, vector<4x256xf32>
    %cst_27 = arith.constant dense<0.000000e+00> : vector<2x256xf32>
    %84 = tpu.matmul %82, %83, %cst_27 {dimension_numbers = #tpu.dot_dimension_numbers<[1], [0], [0], [1], [0, 0, 1, 1], [], []>} : vector<2x4xf32>, vector<4x256xf32>, vector<2x256xf32> -> vector<2x256xf32>
    %85 = vector.extract_strided_slice %84 {offsets = [0, 0], sizes = [1, 256], strides = [1, 1]} : vector<2x256xf32> to vector<1x256xf32>
    %86 = vector.broadcast %85 : vector<1x256xf32> to vector<16x256xf32>
    %87 = arith.mulf %61, %86 : vector<16x256xf32>
    %88 = vector.extract_strided_slice %84 {offsets = [1, 0], sizes = [1, 256], strides = [1, 1]} : vector<2x256xf32> to vector<1x256xf32>
    %89 = vector.broadcast %88 : vector<1x256xf32> to vector<16x256xf32>
    %90 = arith.addf %87, %89 : vector<16x256xf32>
    %cst_28 = arith.constant 0.000000e+00 : f32
    %91 = vector.broadcast %cst_28 : f32 to vector<16x256xf32>
    %92 = arith.maximumf %90, %91 : vector<16x256xf32>
    %cst_29 = arith.constant dense<0.000000e+00> : vector<16x256xf32>
    %93 = tpu.matmul %92, %13, %cst_29 {dimension_numbers = #tpu.dot_dimension_numbers<[1], [0], [0], [1], [0, 0, 1, 1], [], []>} : vector<16x256xf32>, vector<256x256xf32>, vector<16x256xf32> -> vector<16x256xf32>
    %cst_30 = arith.constant dense<0.000000e+00> : vector<256xf32>
    %94 = vector.multi_reduction <add>, %93, %cst_30 [0] : vector<16x256xf32> to vector<256xf32>
    %95 = vector.shape_cast %94 : vector<256xf32> to vector<1x256xf32>
    %96 = arith.mulf %93, %93 : vector<16x256xf32>
    %cst_31 = arith.constant dense<0.000000e+00> : vector<256xf32>
    %97 = vector.multi_reduction <add>, %96, %cst_31 [0] : vector<16x256xf32> to vector<256xf32>
    %98 = vector.shape_cast %97 : vector<256xf32> to vector<1x256xf32>
    %99 = tpu.concatenate %95, %98 in 0 : vector<1x256xf32>, vector<1x256xf32> -> vector<2x256xf32>
    %c0_32 = arith.constant 0 : index
    %c0_33 = arith.constant 0 : index
    %100 = vector.load %arg12[%c0_32, %c0_33] : memref<256x4xf32, #tpu.memory_space<vmem>>, vector<256x4xf32>
    %cst_34 = arith.constant dense<0.000000e+00> : vector<2x4xf32>
    %101 = tpu.matmul %99, %100, %cst_34 {dimension_numbers = #tpu.dot_dimension_numbers<[1], [0], [0], [1], [0, 0, 1, 1], [], []>} : vector<2x256xf32>, vector<256x4xf32>, vector<2x4xf32> -> vector<2x4xf32>
    %cst_35 = arith.constant 9.765625E-4 : f32
    %102 = vector.broadcast %cst_35 : f32 to vector<2x4xf32>
    %103 = arith.mulf %101, %102 : vector<2x4xf32>
    %104 = vector.extract_strided_slice %103 {offsets = [0, 0], sizes = [1, 4], strides = [1, 1]} : vector<2x4xf32> to vector<1x4xf32>
    %105 = vector.extract_strided_slice %103 {offsets = [1, 0], sizes = [1, 4], strides = [1, 1]} : vector<2x4xf32> to vector<1x4xf32>
    %106 = arith.mulf %104, %104 : vector<1x4xf32>
    %107 = arith.subf %105, %106 : vector<1x4xf32>
    %cst_36 = arith.constant 9.99999974E-6 : f32
    %108 = vector.broadcast %cst_36 : f32 to vector<1x4xf32>
    %109 = arith.addf %107, %108 : vector<1x4xf32>
    %110 = math.rsqrt %109 : vector<1x4xf32>
    %cst_37 = arith.constant 0.000000e+00 : f32
    %111 = vector.broadcast %cst_37 : f32 to vector<1x4xf32>
    %112 = arith.subf %111, %104 : vector<1x4xf32>
    %113 = arith.mulf %112, %110 : vector<1x4xf32>
    %114 = tpu.concatenate %110, %113 in 0 : vector<1x4xf32>, vector<1x4xf32> -> vector<2x4xf32>
    %c0_38 = arith.constant 0 : index
    %c0_39 = arith.constant 0 : index
    %115 = vector.load %arg13[%c0_38, %c0_39] : memref<4x256xf32, #tpu.memory_space<vmem>>, vector<4x256xf32>
    %cst_40 = arith.constant dense<0.000000e+00> : vector<2x256xf32>
    %116 = tpu.matmul %114, %115, %cst_40 {dimension_numbers = #tpu.dot_dimension_numbers<[1], [0], [0], [1], [0, 0, 1, 1], [], []>} : vector<2x4xf32>, vector<4x256xf32>, vector<2x256xf32> -> vector<2x256xf32>
    %117 = vector.extract_strided_slice %116 {offsets = [0, 0], sizes = [1, 256], strides = [1, 1]} : vector<2x256xf32> to vector<1x256xf32>
    %118 = vector.broadcast %117 : vector<1x256xf32> to vector<16x256xf32>
    %119 = arith.mulf %93, %118 : vector<16x256xf32>
    %120 = vector.extract_strided_slice %116 {offsets = [1, 0], sizes = [1, 256], strides = [1, 1]} : vector<2x256xf32> to vector<1x256xf32>
    %121 = vector.broadcast %120 : vector<1x256xf32> to vector<16x256xf32>
    %122 = arith.addf %119, %121 : vector<16x256xf32>
    %cst_41 = arith.constant 0.000000e+00 : f32
    %123 = vector.broadcast %cst_41 : f32 to vector<16x256xf32>
    %124 = arith.maximumf %122, %123 : vector<16x256xf32>
    %c0_42 = arith.constant 0 : index
    %c0_43 = arith.constant 0 : index
    %125 = vector.load %arg8[%c0_42, %c0_43] : memref<9x256xf32, #tpu.memory_space<vmem>>, vector<9x256xf32>
    %c0_44 = arith.constant 0 : index
    %c0_45 = arith.constant 0 : index
    %126 = vector.load %arg9[%c0_44, %c0_45] : memref<256x256xf32, #tpu.memory_space<vmem>>, vector<256x256xf32>
    %cst_46 = arith.constant 0.000000e+00 : f32
    %127 = vector.broadcast %cst_46 : f32 to vector<16x4xf32>
    %cst_47 = arith.constant 0.000000e+00 : f32
    %128 = vector.broadcast %cst_47 : f32 to vector<1x264xf32>
    %129 = tpu.concatenate %127, %124, %127 in 1 : vector<16x4xf32>, vector<16x256xf32>, vector<16x4xf32> -> vector<16x264xf32>
    %130 = tpu.concatenate %128, %129, %128 in 0 : vector<1x264xf32>, vector<16x264xf32>, vector<1x264xf32> -> vector<18x264xf32>
    %131 = vector.extract_strided_slice %130 {offsets = [0, 0], sizes = [16, 256], strides = [1, 1]} : vector<18x264xf32> to vector<16x256xf32>
    %132 = vector.extract_strided_slice %125 {offsets = [0, 0], sizes = [1, 256], strides = [1, 1]} : vector<9x256xf32> to vector<1x256xf32>
    %133 = vector.broadcast %132 : vector<1x256xf32> to vector<16x256xf32>
    %134 = arith.mulf %131, %133 : vector<16x256xf32>
    %135 = vector.extract_strided_slice %130 {offsets = [1, 0], sizes = [16, 256], strides = [1, 1]} : vector<18x264xf32> to vector<16x256xf32>
    %136 = vector.extract_strided_slice %125 {offsets = [1, 0], sizes = [1, 256], strides = [1, 1]} : vector<9x256xf32> to vector<1x256xf32>
    %137 = vector.broadcast %136 : vector<1x256xf32> to vector<16x256xf32>
    %138 = arith.mulf %135, %137 : vector<16x256xf32>
    %139 = arith.addf %134, %138 : vector<16x256xf32>
    %140 = vector.extract_strided_slice %130 {offsets = [2, 0], sizes = [16, 256], strides = [1, 1]} : vector<18x264xf32> to vector<16x256xf32>
    %141 = vector.extract_strided_slice %125 {offsets = [2, 0], sizes = [1, 256], strides = [1, 1]} : vector<9x256xf32> to vector<1x256xf32>
    %142 = vector.broadcast %141 : vector<1x256xf32> to vector<16x256xf32>
    %143 = arith.mulf %140, %142 : vector<16x256xf32>
    %144 = arith.addf %139, %143 : vector<16x256xf32>
    %145 = vector.extract_strided_slice %130 {offsets = [0, 4], sizes = [16, 256], strides = [1, 1]} : vector<18x264xf32> to vector<16x256xf32>
    %146 = vector.extract_strided_slice %125 {offsets = [3, 0], sizes = [1, 256], strides = [1, 1]} : vector<9x256xf32> to vector<1x256xf32>
    %147 = vector.broadcast %146 : vector<1x256xf32> to vector<16x256xf32>
    %148 = arith.mulf %145, %147 : vector<16x256xf32>
    %149 = arith.addf %144, %148 : vector<16x256xf32>
    %150 = vector.extract_strided_slice %130 {offsets = [1, 4], sizes = [16, 256], strides = [1, 1]} : vector<18x264xf32> to vector<16x256xf32>
    %151 = vector.extract_strided_slice %125 {offsets = [4, 0], sizes = [1, 256], strides = [1, 1]} : vector<9x256xf32> to vector<1x256xf32>
    %152 = vector.broadcast %151 : vector<1x256xf32> to vector<16x256xf32>
    %153 = arith.mulf %150, %152 : vector<16x256xf32>
    %154 = arith.addf %149, %153 : vector<16x256xf32>
    %155 = vector.extract_strided_slice %130 {offsets = [2, 4], sizes = [16, 256], strides = [1, 1]} : vector<18x264xf32> to vector<16x256xf32>
    %156 = vector.extract_strided_slice %125 {offsets = [5, 0], sizes = [1, 256], strides = [1, 1]} : vector<9x256xf32> to vector<1x256xf32>
    %157 = vector.broadcast %156 : vector<1x256xf32> to vector<16x256xf32>
    %158 = arith.mulf %155, %157 : vector<16x256xf32>
    %159 = arith.addf %154, %158 : vector<16x256xf32>
    %160 = vector.extract_strided_slice %130 {offsets = [0, 8], sizes = [16, 256], strides = [1, 1]} : vector<18x264xf32> to vector<16x256xf32>
    %161 = vector.extract_strided_slice %125 {offsets = [6, 0], sizes = [1, 256], strides = [1, 1]} : vector<9x256xf32> to vector<1x256xf32>
    %162 = vector.broadcast %161 : vector<1x256xf32> to vector<16x256xf32>
    %163 = arith.mulf %160, %162 : vector<16x256xf32>
    %164 = arith.addf %159, %163 : vector<16x256xf32>
    %165 = vector.extract_strided_slice %130 {offsets = [1, 8], sizes = [16, 256], strides = [1, 1]} : vector<18x264xf32> to vector<16x256xf32>
    %166 = vector.extract_strided_slice %125 {offsets = [7, 0], sizes = [1, 256], strides = [1, 1]} : vector<9x256xf32> to vector<1x256xf32>
    %167 = vector.broadcast %166 : vector<1x256xf32> to vector<16x256xf32>
    %168 = arith.mulf %165, %167 : vector<16x256xf32>
    %169 = arith.addf %164, %168 : vector<16x256xf32>
    %170 = vector.extract_strided_slice %130 {offsets = [2, 8], sizes = [16, 256], strides = [1, 1]} : vector<18x264xf32> to vector<16x256xf32>
    %171 = vector.extract_strided_slice %125 {offsets = [8, 0], sizes = [1, 256], strides = [1, 1]} : vector<9x256xf32> to vector<1x256xf32>
    %172 = vector.broadcast %171 : vector<1x256xf32> to vector<16x256xf32>
    %173 = arith.mulf %170, %172 : vector<16x256xf32>
    %174 = arith.addf %169, %173 : vector<16x256xf32>
    %cst_48 = arith.constant dense<0.000000e+00> : vector<256xf32>
    %175 = vector.multi_reduction <add>, %174, %cst_48 [0] : vector<16x256xf32> to vector<256xf32>
    %176 = vector.shape_cast %175 : vector<256xf32> to vector<1x256xf32>
    %177 = arith.mulf %174, %174 : vector<16x256xf32>
    %cst_49 = arith.constant dense<0.000000e+00> : vector<256xf32>
    %178 = vector.multi_reduction <add>, %177, %cst_49 [0] : vector<16x256xf32> to vector<256xf32>
    %179 = vector.shape_cast %178 : vector<256xf32> to vector<1x256xf32>
    %180 = tpu.concatenate %176, %179 in 0 : vector<1x256xf32>, vector<1x256xf32> -> vector<2x256xf32>
    %c0_50 = arith.constant 0 : index
    %c0_51 = arith.constant 0 : index
    %181 = vector.load %arg12[%c0_50, %c0_51] : memref<256x4xf32, #tpu.memory_space<vmem>>, vector<256x4xf32>
    %cst_52 = arith.constant dense<0.000000e+00> : vector<2x4xf32>
    %182 = tpu.matmul %180, %181, %cst_52 {dimension_numbers = #tpu.dot_dimension_numbers<[1], [0], [0], [1], [0, 0, 1, 1], [], []>} : vector<2x256xf32>, vector<256x4xf32>, vector<2x4xf32> -> vector<2x4xf32>
    %cst_53 = arith.constant 9.765625E-4 : f32
    %183 = vector.broadcast %cst_53 : f32 to vector<2x4xf32>
    %184 = arith.mulf %182, %183 : vector<2x4xf32>
    %185 = vector.extract_strided_slice %184 {offsets = [0, 0], sizes = [1, 4], strides = [1, 1]} : vector<2x4xf32> to vector<1x4xf32>
    %186 = vector.extract_strided_slice %184 {offsets = [1, 0], sizes = [1, 4], strides = [1, 1]} : vector<2x4xf32> to vector<1x4xf32>
    %187 = arith.mulf %185, %185 : vector<1x4xf32>
    %188 = arith.subf %186, %187 : vector<1x4xf32>
    %cst_54 = arith.constant 9.99999974E-6 : f32
    %189 = vector.broadcast %cst_54 : f32 to vector<1x4xf32>
    %190 = arith.addf %188, %189 : vector<1x4xf32>
    %191 = math.rsqrt %190 : vector<1x4xf32>
    %cst_55 = arith.constant 0.000000e+00 : f32
    %192 = vector.broadcast %cst_55 : f32 to vector<1x4xf32>
    %193 = arith.subf %192, %185 : vector<1x4xf32>
    %194 = arith.mulf %193, %191 : vector<1x4xf32>
    %195 = tpu.concatenate %191, %194 in 0 : vector<1x4xf32>, vector<1x4xf32> -> vector<2x4xf32>
    %c0_56 = arith.constant 0 : index
    %c0_57 = arith.constant 0 : index
    %196 = vector.load %arg13[%c0_56, %c0_57] : memref<4x256xf32, #tpu.memory_space<vmem>>, vector<4x256xf32>
    %cst_58 = arith.constant dense<0.000000e+00> : vector<2x256xf32>
    %197 = tpu.matmul %195, %196, %cst_58 {dimension_numbers = #tpu.dot_dimension_numbers<[1], [0], [0], [1], [0, 0, 1, 1], [], []>} : vector<2x4xf32>, vector<4x256xf32>, vector<2x256xf32> -> vector<2x256xf32>
    %198 = vector.extract_strided_slice %197 {offsets = [0, 0], sizes = [1, 256], strides = [1, 1]} : vector<2x256xf32> to vector<1x256xf32>
    %199 = vector.broadcast %198 : vector<1x256xf32> to vector<16x256xf32>
    %200 = arith.mulf %174, %199 : vector<16x256xf32>
    %201 = vector.extract_strided_slice %197 {offsets = [1, 0], sizes = [1, 256], strides = [1, 1]} : vector<2x256xf32> to vector<1x256xf32>
    %202 = vector.broadcast %201 : vector<1x256xf32> to vector<16x256xf32>
    %203 = arith.addf %200, %202 : vector<16x256xf32>
    %cst_59 = arith.constant 0.000000e+00 : f32
    %204 = vector.broadcast %cst_59 : f32 to vector<16x256xf32>
    %205 = arith.maximumf %203, %204 : vector<16x256xf32>
    %cst_60 = arith.constant dense<0.000000e+00> : vector<16x256xf32>
    %206 = tpu.matmul %205, %126, %cst_60 {dimension_numbers = #tpu.dot_dimension_numbers<[1], [0], [0], [1], [0, 0, 1, 1], [], []>} : vector<16x256xf32>, vector<256x256xf32>, vector<16x256xf32> -> vector<16x256xf32>
    %cst_61 = arith.constant dense<0.000000e+00> : vector<256xf32>
    %207 = vector.multi_reduction <add>, %206, %cst_61 [0] : vector<16x256xf32> to vector<256xf32>
    %208 = vector.shape_cast %207 : vector<256xf32> to vector<1x256xf32>
    %209 = arith.mulf %206, %206 : vector<16x256xf32>
    %cst_62 = arith.constant dense<0.000000e+00> : vector<256xf32>
    %210 = vector.multi_reduction <add>, %209, %cst_62 [0] : vector<16x256xf32> to vector<256xf32>
    %211 = vector.shape_cast %210 : vector<256xf32> to vector<1x256xf32>
    %212 = tpu.concatenate %208, %211 in 0 : vector<1x256xf32>, vector<1x256xf32> -> vector<2x256xf32>
    %c0_63 = arith.constant 0 : index
    %c0_64 = arith.constant 0 : index
    %213 = vector.load %arg12[%c0_63, %c0_64] : memref<256x4xf32, #tpu.memory_space<vmem>>, vector<256x4xf32>
    %cst_65 = arith.constant dense<0.000000e+00> : vector<2x4xf32>
    %214 = tpu.matmul %212, %213, %cst_65 {dimension_numbers = #tpu.dot_dimension_numbers<[1], [0], [0], [1], [0, 0, 1, 1], [], []>} : vector<2x256xf32>, vector<256x4xf32>, vector<2x4xf32> -> vector<2x4xf32>
    %cst_66 = arith.constant 9.765625E-4 : f32
    %215 = vector.broadcast %cst_66 : f32 to vector<2x4xf32>
    %216 = arith.mulf %214, %215 : vector<2x4xf32>
    %217 = vector.extract_strided_slice %216 {offsets = [0, 0], sizes = [1, 4], strides = [1, 1]} : vector<2x4xf32> to vector<1x4xf32>
    %218 = vector.extract_strided_slice %216 {offsets = [1, 0], sizes = [1, 4], strides = [1, 1]} : vector<2x4xf32> to vector<1x4xf32>
    %219 = arith.mulf %217, %217 : vector<1x4xf32>
    %220 = arith.subf %218, %219 : vector<1x4xf32>
    %cst_67 = arith.constant 9.99999974E-6 : f32
    %221 = vector.broadcast %cst_67 : f32 to vector<1x4xf32>
    %222 = arith.addf %220, %221 : vector<1x4xf32>
    %223 = math.rsqrt %222 : vector<1x4xf32>
    %cst_68 = arith.constant 0.000000e+00 : f32
    %224 = vector.broadcast %cst_68 : f32 to vector<1x4xf32>
    %225 = arith.subf %224, %217 : vector<1x4xf32>
    %226 = arith.mulf %225, %223 : vector<1x4xf32>
    %227 = tpu.concatenate %223, %226 in 0 : vector<1x4xf32>, vector<1x4xf32> -> vector<2x4xf32>
    %c0_69 = arith.constant 0 : index
    %c0_70 = arith.constant 0 : index
    %228 = vector.load %arg13[%c0_69, %c0_70] : memref<4x256xf32, #tpu.memory_space<vmem>>, vector<4x256xf32>
    %cst_71 = arith.constant dense<0.000000e+00> : vector<2x256xf32>
    %229 = tpu.matmul %227, %228, %cst_71 {dimension_numbers = #tpu.dot_dimension_numbers<[1], [0], [0], [1], [0, 0, 1, 1], [], []>} : vector<2x4xf32>, vector<4x256xf32>, vector<2x256xf32> -> vector<2x256xf32>
    %230 = vector.extract_strided_slice %229 {offsets = [0, 0], sizes = [1, 256], strides = [1, 1]} : vector<2x256xf32> to vector<1x256xf32>
    %231 = vector.broadcast %230 : vector<1x256xf32> to vector<16x256xf32>
    %232 = arith.mulf %206, %231 : vector<16x256xf32>
    %233 = vector.extract_strided_slice %229 {offsets = [1, 0], sizes = [1, 256], strides = [1, 1]} : vector<2x256xf32> to vector<1x256xf32>
    %234 = vector.broadcast %233 : vector<1x256xf32> to vector<16x256xf32>
    %235 = arith.addf %232, %234 : vector<16x256xf32>
    %cst_72 = arith.constant 0.000000e+00 : f32
    %236 = vector.broadcast %cst_72 : f32 to vector<16x256xf32>
    %237 = arith.maximumf %235, %236 : vector<16x256xf32>
    %c0_73 = arith.constant 0 : index
    %c0_74 = arith.constant 0 : index
    %238 = vector.load %arg10[%c0_73, %c0_74] : memref<256x192xf32, #tpu.memory_space<vmem>>, vector<256x192xf32>
    %cst_75 = arith.constant dense<0.000000e+00> : vector<16x192xf32>
    %239 = tpu.matmul %237, %238, %cst_75 {dimension_numbers = #tpu.dot_dimension_numbers<[1], [0], [0], [1], [0, 0, 1, 1], [], []>} : vector<16x256xf32>, vector<256x192xf32>, vector<16x192xf32> -> vector<16x192xf32>
    %c0_76 = arith.constant 0 : index
    %c0_77 = arith.constant 0 : index
    %240 = vector.load %arg11[%c0_76, %c0_77] : memref<1x192xf32, #tpu.memory_space<vmem>>, vector<1x192xf32>
    %241 = vector.broadcast %240 : vector<1x192xf32> to vector<16x192xf32>
    %242 = arith.addf %239, %241 : vector<16x192xf32>
    %c0_78 = arith.constant 0 : index
    %c0_79 = arith.constant 0 : index
    %c0_80 = arith.constant 0 : index
    %243 = vector.load %arg14[%c0_78, %c0_79, %c0_80] : memref<1x16x192xf32, #tpu.memory_space<vmem>>, vector<1x16x192xf32>
    %244 = vector.shape_cast %243 : vector<1x16x192xf32> to vector<16x192xf32>
    %245 = vector.shape_cast %242 : vector<16x192xf32> to vector<1x16x192xf32>
    tpu.vector_store %arg14[%c0_78, %c0_79, %c0_80], %245 {strides = array<i32>} : memref<1x16x192xf32, #tpu.memory_space<vmem>>, vector<1x16x192xf32>,
    return
  }
  func.func @transform_0(%arg0: i32) -> (i32, i32, i32) {
    %c0_i32 = arith.constant 0 : i32
    %c0_i32_0 = arith.constant 0 : i32
    %c0_i32_1 = arith.constant 0 : i32
    return %arg0, %c0_i32, %c0_i32_0 : i32, i32, i32
  }
  func.func @transform_1(%arg0: i32) -> (i32, i32) {
    %c0_i32 = arith.constant 0 : i32
    %c0_i32_0 = arith.constant 0 : i32
    %c0_i32_1 = arith.constant 0 : i32
    return %c0_i32, %c0_i32_0 : i32, i32
  }
  func.func @transform_2(%arg0: i32) -> (i32, i32) {
    %c0_i32 = arith.constant 0 : i32
    %c0_i32_0 = arith.constant 0 : i32
    %c0_i32_1 = arith.constant 0 : i32
    return %c0_i32, %c0_i32_0 : i32, i32
  }
  func.func @transform_3(%arg0: i32) -> (i32, i32) {
    %c0_i32 = arith.constant 0 : i32
    %c0_i32_0 = arith.constant 0 : i32
    %c0_i32_1 = arith.constant 0 : i32
    return %c0_i32, %c0_i32_0 : i32, i32
  }
  func.func @transform_4(%arg0: i32) -> (i32, i32) {
    %c0_i32 = arith.constant 0 : i32
    %c0_i32_0 = arith.constant 0 : i32
    %c0_i32_1 = arith.constant 0 : i32
    return %c0_i32, %c0_i32_0 : i32, i32
  }
  func.func @transform_5(%arg0: i32) -> (i32, i32) {
    %c0_i32 = arith.constant 0 : i32
    %c0_i32_0 = arith.constant 0 : i32
    %c0_i32_1 = arith.constant 0 : i32
    return %c0_i32, %c0_i32_0 : i32, i32
  }
  func.func @transform_6(%arg0: i32) -> (i32, i32) {
    %c0_i32 = arith.constant 0 : i32
    %c0_i32_0 = arith.constant 0 : i32
    %c0_i32_1 = arith.constant 0 : i32
    return %c0_i32, %c0_i32_0 : i32, i32
  }
  func.func @transform_7(%arg0: i32) -> (i32, i32) {
    %c0_i32 = arith.constant 0 : i32
    %c0_i32_0 = arith.constant 0 : i32
    %c0_i32_1 = arith.constant 0 : i32
    return %c0_i32, %c0_i32_0 : i32, i32
  }
  func.func @transform_8(%arg0: i32) -> (i32, i32) {
    %c0_i32 = arith.constant 0 : i32
    %c0_i32_0 = arith.constant 0 : i32
    %c0_i32_1 = arith.constant 0 : i32
    return %c0_i32, %c0_i32_0 : i32, i32
  }
  func.func @transform_9(%arg0: i32) -> (i32, i32) {
    %c0_i32 = arith.constant 0 : i32
    %c0_i32_0 = arith.constant 0 : i32
    %c0_i32_1 = arith.constant 0 : i32
    return %c0_i32, %c0_i32_0 : i32, i32
  }
  func.func @transform_10(%arg0: i32) -> (i32, i32) {
    %c0_i32 = arith.constant 0 : i32
    %c0_i32_0 = arith.constant 0 : i32
    %c0_i32_1 = arith.constant 0 : i32
    return %c0_i32, %c0_i32_0 : i32, i32
  }
  func.func @transform_11(%arg0: i32) -> (i32, i32) {
    %c0_i32 = arith.constant 0 : i32
    %c0_i32_0 = arith.constant 0 : i32
    %c0_i32_1 = arith.constant 0 : i32
    return %c0_i32, %c0_i32_0 : i32, i32
  }
  func.func @transform_12(%arg0: i32) -> (i32, i32) {
    %c0_i32 = arith.constant 0 : i32
    %c0_i32_0 = arith.constant 0 : i32
    %c0_i32_1 = arith.constant 0 : i32
    return %c0_i32, %c0_i32_0 : i32, i32
  }
  func.func @transform_13(%arg0: i32) -> (i32, i32, i32) {
    %c0_i32 = arith.constant 0 : i32
    %c0_i32_0 = arith.constant 0 : i32
    %c0_i32_1 = arith.constant 0 : i32
    return %arg0, %c0_i32, %c0_i32_0 : i32, i32, i32
  }
}

</mosaic_0001>

<llo_original>
// kernel: transposed_classifier_forward.1
$region0: #{transposed_classifier_forward.1}
  #allocation0 [shape = 'u32[]', space=smem, size = 0x4, offset = 0x4, fixed_abs, tag = 'smem constant byte address 0x4 - core index']
  #allocation1 [shape = 'u32[72,128]{1,0:T(1,128)}', space=vmem, size = 0x9000, scoped, tag = 'internal scratch']
  %s0 = inlined_call_operand.vmem [shape: f32[2,16,64], index: 0, kind: input, shape index: {}]
  %s1 = inlined_call_operand.vmem [shape: f32[64,160], index: 1, kind: input, shape index: {}]
  %s2 = inlined_call_operand.vmem [shape: f32[1,160], index: 2, kind: input, shape index: {}]
  %s3 = inlined_call_operand.hbm [shape: f32[160,256], index: 3, kind: input, shape index: {}]
  %s4 = inlined_call_operand.vmem [shape: f32[1,256], index: 4, kind: input, shape index: {}]
  %s5 = inlined_call_operand.vmem [shape: f32[9,256], index: 5, kind: input, shape index: {}]
  %s6 = inlined_call_operand.vmem [shape: f32[256,256], index: 6, kind: input, shape index: {}]
  %s7 = inlined_call_operand.hbm [shape: f32[9,256], index: 7, kind: input, shape index: {}]
  %s8 = inlined_call_operand.vmem [shape: f32[256,256], index: 8, kind: input, shape index: {}]
  %s9 = inlined_call_operand.vmem [shape: f32[256,192], index: 9, kind: input, shape index: {}]
  %s10 = inlined_call_operand.hbm [shape: f32[1,192], index: 10, kind: input, shape index: {}]
  %s11 = inlined_call_operand.vmem [shape: f32[256,4], index: 11, kind: input, shape index: {}]
  %s12 = inlined_call_operand.hbm [shape: f32[4,256], index: 12, kind: input, shape index: {}]
  %s13 = inlined_call_operand.vmem [shape: f32[2,16,192], index: 13, kind: output, shape index: {}]
  %s14 = sld [smem:[#allocation0]]
  $region101: #{transposed_classifier_forward.1} parent=0
    _
  %s16 = ssub.s32 1, %s14
  %s17 = scalar_select 0, %s16, %s14
  $region1: #{transposed_classifier_forward.1} parent=0
    #allocation2 [shape = 'u8[163840]{0}', space=vmem, size = 0x28000, scoped, tag = 'input window, operand 3, single buffered']
    #allocation3 [shape = 's32[2]{0}', space=sflag, size = 0x8, scoped, tag = 'scoped memory for transposed_classifier_forward.1']
    #allocation4 [shape = 'u8[16384]{0}', space=vmem, size = 0x4000, scoped, tag = 'input window, operand 7, single buffered']
    #allocation5 [shape = 's32[1]{0}', space=sflag, size = 0x4, scoped, tag = 'scoped memory for transposed_classifier_forward.1']
    #allocation6 [shape = 'u8[1024]{0}', space=vmem, size = 0x400, scoped, tag = 'input window, operand 10, single buffered']
    #allocation7 [shape = 'u8[4096]{0}', space=vmem, size = 0x1000, scoped, tag = 'input window, operand 12, single buffered']
    #allocation8 [shape = 's32[1]{0}', space=sflag, size = 0x4, scoped, tag = 'scoped memory for transposed_classifier_forward.1']
    %18 = vsyncpa [#allocation3], 0
    %19 = vsyncpa [#allocation5], 0
    %20 = vsyncpa [#allocation8], 0
    loop: start=0, step=1, limit=4
    $region2: #{transposed_classifier_forward.1} parent=1 // loop_pre_header
      _
    $region3: #{transposed_classifier_forward.1} parent=1 // loop_header
      %s22 = sphi 0, %s26
      %p23 = scmp.ge.s32.totalorder %s22, 4
      %s32 = sphi 0, %s34
      %s35 = sphi 0, %s32
      %s36 = sphi 0, %s35
      %s52 = sphi 0, %s36
      %s56 = sphi 0, %s56
      %s58 = sphi 0, %s56
      %s59 = sphi 0, %s58
      %s73 = sphi 0, %s59
      %s77 = sphi 0, %s77
      %s79 = sphi 0, %s77
      %s80 = sphi 0, %s79
      %s94 = sphi 0, %s80
      %s98 = sphi 0, %s98
      %s100 = sphi 0, %s98
      %s101 = sphi 0, %s100
      %s115 = sphi 0, %s101
      %s119 = sphi 0, %s119
      %s121 = sphi 0, %s119
      %s122 = sphi 0, %s121
      %s136 = sphi 0, %s122
      %s140 = sphi 0, %s140
      %s142 = sphi 0, %s140
      %s143 = sphi 0, %s142
      %s157 = sphi 0, %s143
      %s161 = sphi 0, %s161
      %s163 = sphi 0, %s161
      %s164 = sphi 0, %s163
      %s178 = sphi 0, %s164
      %s182 = sphi 0, %s182
      %s184 = sphi 0, %s182
      %s185 = sphi 0, %s184
      %s199 = sphi 0, %s185
      %s203 = sphi 0, %s203
      %s205 = sphi 0, %s203
      %s206 = sphi 0, %s205
      %s220 = sphi 0, %s206
      %s224 = sphi 0, %s224
      %s226 = sphi 0, %s224
      %s227 = sphi 0, %s226
      %s241 = sphi 0, %s227
      %s245 = sphi 0, %s245
      %s247 = sphi 0, %s245
      %s248 = sphi 0, %s247
      %s262 = sphi 0, %s248
      %s266 = sphi 0, %s266
      %s268 = sphi 0, %s266
      %s269 = sphi 0, %s268
      %s283 = sphi 0, %s269
      %s287 = sphi 0, %s287
      %s289 = sphi 0, %s287
      %s290 = sphi 0, %s289
      %s304 = sphi 0, %s290
      %s310 = sphi 0, %s312
      %s313 = sphi 0, %s310
      %s314 = sphi 0, %s313
      %s330 = sphi 0, %s314
    $region4: #{transposed_classifier_forward.1} parent=1 // loop_header_branch
      %25 = sbr.rel (%p23) target = $region8
    $region5: #{transposed_classifier_forward.1} parent=1 // loop_body
      %s27 = ssub.s32 %s22, 1
      %s28 = ssub.s32 %s22, 2
      %s29 = sadd.s32 %s22, 1
      %s30 = ssub.s32 %s22, %s29
      %p31 = scmp.eq.s32.totalorder %s30, 0
      %s33 = sadd.s32 %s32, 1
      %s34 = scalar_select %p31, %s32, %s33
      %p37 = pneg %p31
      %p38 = scmp.eq.s32.totalorder %s22, 1
      %p39 = por %p37, %p38
      %p40 = scmp.ne.s32.totalorder %s32, %s35
      %p41 = scmp.eq.s32.totalorder %s22, 0
      %p42 = por %p40, %p41
      %p43 = scmp.ne.s32.totalorder %s32, %s35
      %p44 = scmp.eq.s32.totalorder %s27, 1
      %p45 = por %p43, %p44
      %p46 = scmp.ne.s32.totalorder %s35, %s36
      %p47 = scmp.eq.s32.totalorder %s27, 0
      %p48 = por %p46, %p47
      %p49 = scmp.ne.s32.totalorder %s35, %s36
      %p50 = scmp.eq.s32.totalorder %s28, 1
      %p51 = por %p49, %p50
      %p53 = scmp.ne.s32.totalorder %s36, %s52
      %p54 = scmp.eq.s32.totalorder %s28, 0
      %p55 = por %p53, %p54
      %s57 = sadd.s32 %s56, 1
      %p60 = scmp.eq.s32.totalorder %s22, 1
      %p61 = scmp.ne.s32.totalorder %s56, %s58
      %p62 = scmp.eq.s32.totalorder %s22, 0
      %p63 = por %p61, %p62
      %p64 = scmp.ne.s32.totalorder %s56, %s58
      %p65 = scmp.eq.s32.totalorder %s27, 1
      %p66 = por %p64, %p65
      %p67 = scmp.ne.s32.totalorder %s58, %s59
      %p68 = scmp.eq.s32.totalorder %s27, 0
      %p69 = por %p67, %p68
      %p70 = scmp.ne.s32.totalorder %s58, %s59
      %p71 = scmp.eq.s32.totalorder %s28, 1
      %p72 = por %p70, %p71
      %p74 = scmp.ne.s32.totalorder %s59, %s73
      %p75 = scmp.eq.s32.totalorder %s28, 0
      %p76 = por %p74, %p75
      %s78 = sadd.s32 %s77, 1
      %p81 = scmp.eq.s32.totalorder %s22, 1
      %p82 = scmp.ne.s32.totalorder %s77, %s79
      %p83 = scmp.eq.s32.totalorder %s22, 0
      %p84 = por %p82, %p83
      %p85 = scmp.ne.s32.totalorder %s77, %s79
      %p86 = scmp.eq.s32.totalorder %s27, 1
      %p87 = por %p85, %p86
      %p88 = scmp.ne.s32.totalorder %s79, %s80
      %p89 = scmp.eq.s32.totalorder %s27, 0
      %p90 = por %p88, %p89
      %p91 = scmp.ne.s32.totalorder %s79, %s80
      %p92 = scmp.eq.s32.totalorder %s28, 1
      %p93 = por %p91, %p92
      %p95 = scmp.ne.s32.totalorder %s80, %s94
      %p96 = scmp.eq.s32.totalorder %s28, 0
      %p97 = por %p95, %p96
      %s99 = sadd.s32 %s98, 1
      %p102 = scmp.eq.s32.totalorder %s22, 1
      %p103 = scmp.ne.s32.totalorder %s98, %s100
      %p104 = scmp.eq.s32.totalorder %s22, 0
      %p105 = por %p103, %p104
      %p106 = scmp.ne.s32.totalorder %s98, %s100
      %p107 = scmp.eq.s32.totalorder %s27, 1
      %p108 = por %p106, %p107
      %p109 = scmp.ne.s32.totalorder %s100, %s101
      %p110 = scmp.eq.s32.totalorder %s27, 0
      %p111 = por %p109, %p110
      %p112 = scmp.ne.s32.totalorder %s100, %s101
      %p113 = scmp.eq.s32.totalorder %s28, 1
      %p114 = por %p112, %p113
      %p116 = scmp.ne.s32.totalorder %s101, %s115
      %p117 = scmp.eq.s32.totalorder %s28, 0
      %p118 = por %p116, %p117
      %s120 = sadd.s32 %s119, 1
      %p123 = scmp.eq.s32.totalorder %s22, 1
      %p124 = scmp.ne.s32.totalorder %s119, %s121
      %p125 = scmp.eq.s32.totalorder %s22, 0
      %p126 = por %p124, %p125
      %p127 = scmp.ne.s32.totalorder %s119, %s121
      %p128 = scmp.eq.s32.totalorder %s27, 1
      %p129 = por %p127, %p128
      %p130 = scmp.ne.s32.totalorder %s121, %s122
      %p131 = scmp.eq.s32.totalorder %s27, 0
      %p132 = por %p130, %p131
      %p133 = scmp.ne.s32.totalorder %s121, %s122
      %p134 = scmp.eq.s32.totalorder %s28, 1
      %p135 = por %p133, %p134
      %p137 = scmp.ne.s32.totalorder %s122, %s136
      %p138 = scmp.eq.s32.totalorder %s28, 0
      %p139 = por %p137, %p138
      %s141 = sadd.s32 %s140, 1
      %p144 = scmp.eq.s32.totalorder %s22, 1
      %p145 = scmp.ne.s32.totalorder %s140, %s142
      %p146 = scmp.eq.s32.totalorder %s22, 0
      %p147 = por %p145, %p146
      %p148 = scmp.ne.s32.totalorder %s140, %s142
      %p149 = scmp.eq.s32.totalorder %s27, 1
      %p150 = por %p148, %p149
      %p151 = scmp.ne.s32.totalorder %s142, %s143
      %p152 = scmp.eq.s32.totalorder %s27, 0
      %p153 = por %p151, %p152
      %p154 = scmp.ne.s32.totalorder %s142, %s143
      %p155 = scmp.eq.s32.totalorder %s28, 1
      %p156 = por %p154, %p155
      %p158 = scmp.ne.s32.totalorder %s143, %s157
      %p159 = scmp.eq.s32.totalorder %s28, 0
      %p160 = por %p158, %p159
      %s162 = sadd.s32 %s161, 1
      %p165 = scmp.eq.s32.totalorder %s22, 1
      %p166 = scmp.ne.s32.totalorder %s161, %s163
      %p167 = scmp.eq.s32.totalorder %s22, 0
      %p168 = por %p166, %p167
      %p169 = scmp.ne.s32.totalorder %s161, %s163
      %p170 = scmp.eq.s32.totalorder %s27, 1
      %p171 = por %p169, %p170
      %p172 = scmp.ne.s32.totalorder %s163, %s164
      %p173 = scmp.eq.s32.totalorder %s27, 0
      %p174 = por %p172, %p173
      %p175 = scmp.ne.s32.totalorder %s163, %s164
      %p176 = scmp.eq.s32.totalorder %s28, 1
      %p177 = por %p175, %p176
      %p179 = scmp.ne.s32.totalorder %s164, %s178
      %p180 = scmp.eq.s32.totalorder %s28, 0
      %p181 = por %p179, %p180
      %s183 = sadd.s32 %s182, 1
      %p186 = scmp.eq.s32.totalorder %s22, 1
      %p187 = scmp.ne.s32.totalorder %s182, %s184
      %p188 = scmp.eq.s32.totalorder %s22, 0
      %p189 = por %p187, %p188
      %p190 = scmp.ne.s32.totalorder %s182, %s184
      %p191 = scmp.eq.s32.totalorder %s27, 1
      %p192 = por %p190, %p191
      %p193 = scmp.ne.s32.totalorder %s184, %s185
      %p194 = scmp.eq.s32.totalorder %s27, 0
      %p195 = por %p193, %p194
      %p196 = scmp.ne.s32.totalorder %s184, %s185
      %p197 = scmp.eq.s32.totalorder %s28, 1
      %p198 = por %p196, %p197
      %p200 = scmp.ne.s32.totalorder %s185, %s199
      %p201 = scmp.eq.s32.totalorder %s28, 0
      %p202 = por %p200, %p201
      %s204 = sadd.s32 %s203, 1
      %p207 = scmp.eq.s32.totalorder %s22, 1
      %p208 = scmp.ne.s32.totalorder %s203, %s205
      %p209 = scmp.eq.s32.totalorder %s22, 0
      %p210 = por %p208, %p209
      %p211 = scmp.ne.s32.totalorder %s203, %s205
      %p212 = scmp.eq.s32.totalorder %s27, 1
      %p213 = por %p211, %p212
      %p214 = scmp.ne.s32.totalorder %s205, %s206
      %p215 = scmp.eq.s32.totalorder %s27, 0
      %p216 = por %p214, %p215
      %p217 = scmp.ne.s32.totalorder %s205, %s206
      %p218 = scmp.eq.s32.totalorder %s28, 1
      %p219 = por %p217, %p218
      %p221 = scmp.ne.s32.totalorder %s206, %s220
      %p222 = scmp.eq.s32.totalorder %s28, 0
      %p223 = por %p221, %p222
      %s225 = sadd.s32 %s224, 1
      %p228 = scmp.eq.s32.totalorder %s22, 1
      %p229 = scmp.ne.s32.totalorder %s224, %s226
      %p230 = scmp.eq.s32.totalorder %s22, 0
      %p231 = por %p229, %p230
      %p232 = scmp.ne.s32.totalorder %s224, %s226
      %p233 = scmp.eq.s32.totalorder %s27, 1
      %p234 = por %p232, %p233
      %p235 = scmp.ne.s32.totalorder %s226, %s227
      %p236 = scmp.eq.s32.totalorder %s27, 0
      %p237 = por %p235, %p236
      %p238 = scmp.ne.s32.totalorder %s226, %s227
      %p239 = scmp.eq.s32.totalorder %s28, 1
      %p240 = por %p238, %p239
      %p242 = scmp.ne.s32.totalorder %s227, %s241
      %p243 = scmp.eq.s32.totalorder %s28, 0
      %p244 = por %p242, %p243
      %s246 = sadd.s32 %s245, 1
      %p249 = scmp.eq.s32.totalorder %s22, 1
      %p250 = scmp.ne.s32.totalorder %s245, %s247
      %p251 = scmp.eq.s32.totalorder %s22, 0
      %p252 = por %p250, %p251
      %p253 = scmp.ne.s32.totalorder %s245, %s247
      %p254 = scmp.eq.s32.totalorder %s27, 1
      %p255 = por %p253, %p254
      %p256 = scmp.ne.s32.totalorder %s247, %s248
      %p257 = scmp.eq.s32.totalorder %s27, 0
      %p258 = por %p256, %p257
      %p259 = scmp.ne.s32.totalorder %s247, %s248
      %p260 = scmp.eq.s32.totalorder %s28, 1
      %p261 = por %p259, %p260
      %p263 = scmp.ne.s32.totalorder %s248, %s262
      %p264 = scmp.eq.s32.totalorder %s28, 0
      %p265 = por %p263, %p264
      %s267 = sadd.s32 %s266, 1
      %p270 = scmp.eq.s32.totalorder %s22, 1
      %p271 = scmp.ne.s32.totalorder %s266, %s268
      %p272 = scmp.eq.s32.totalorder %s22, 0
      %p273 = por %p271, %p272
      %p274 = scmp.ne.s32.totalorder %s266, %s268
      %p275 = scmp.eq.s32.totalorder %s27, 1
      %p276 = por %p274, %p275
      %p277 = scmp.ne.s32.totalorder %s268, %s269
      %p278 = scmp.eq.s32.totalorder %s27, 0
      %p279 = por %p277, %p278
      %p280 = scmp.ne.s32.totalorder %s268, %s269
      %p281 = scmp.eq.s32.totalorder %s28, 1
      %p282 = por %p280, %p281
      %p284 = scmp.ne.s32.totalorder %s269, %s283
      %p285 = scmp.eq.s32.totalorder %s28, 0
      %p286 = por %p284, %p285
      %s288 = sadd.s32 %s287, 1
      %p291 = scmp.eq.s32.totalorder %s22, 1
      %p292 = scmp.ne.s32.totalorder %s287, %s289
      %p293 = scmp.eq.s32.totalorder %s22, 0
      %p294 = por %p292, %p293
      %p295 = scmp.ne.s32.totalorder %s287, %s289
      %p296 = scmp.eq.s32.totalorder %s27, 1
      %p297 = por %p295, %p296
      %p298 = scmp.ne.s32.totalorder %s289, %s290
      %p299 = scmp.eq.s32.totalorder %s27, 0
      %p300 = por %p298, %p299
      %p301 = scmp.ne.s32.totalorder %s289, %s290
      %p302 = scmp.eq.s32.totalorder %s28, 1
      %p303 = por %p301, %p302
      %p305 = scmp.ne.s32.totalorder %s290, %s304
      %p306 = scmp.eq.s32.totalorder %s28, 0
      %p307 = por %p305, %p306
      %s308 = ssub.s32 %s22, %s29
      %p309 = scmp.eq.s32.totalorder %s308, 0
      %s311 = sadd.s32 %s310, 1
      %s312 = scalar_select %p309, %s310, %s311
      %p315 = pneg %p309
      %p316 = scmp.eq.s32.totalorder %s22, 1
      %p317 = por %p315, %p316
      %p318 = scmp.ne.s32.totalorder %s310, %s313
      %p319 = scmp.eq.s32.totalorder %s22, 0
      %p320 = por %p318, %p319
      %p321 = scmp.ne.s32.totalorder %s310, %s313
      %p322 = scmp.eq.s32.totalorder %s27, 1
      %p323 = por %p321, %p322
      %p324 = scmp.ne.s32.totalorder %s313, %s314
      %p325 = scmp.eq.s32.totalorder %s27, 0
      %p326 = por %p324, %p325
      %p327 = scmp.ne.s32.totalorder %s313, %s314
      %p328 = scmp.eq.s32.totalorder %s28, 1
      %p329 = por %p327, %p328
      %p331 = scmp.ne.s32.totalorder %s314, %s330
      %p332 = scmp.eq.s32.totalorder %s28, 0
      %p333 = por %p331, %p332
      %p334 = scmp.le.s32.totalorder 1, %s22
      %p335 = scmp.lt.s32.totalorder %s22, 3
      %p336 = pnand %p334, %p335
      %p337 = pneg %p336
      // Predicated region
      $region9: #{transposed_classifier_forward.1} parent=5 // pred_check
        _
      $region10: #{transposed_classifier_forward.1} parent=5 // pred_check_branch
        %339 = sbr.rel (%p336) target = $region12
      $region11: #{transposed_classifier_forward.1} parent=5 // pred_region
        %s340 = ssub.s32 %s22, 1
        // Predicated region
        $region13: #{transposed_classifier_forward.1} parent=11 // pred_check
          %p341 = pneg %p69
        $region14: #{transposed_classifier_forward.1} parent=11 // pred_check_branch
          %343 = sbr.rel (%p341) target = $region16
        $region15: #{transposed_classifier_forward.1} parent=11 // pred_region
          _
        $region16: #{transposed_classifier_forward.1} parent=11 // pred_fallthru
          _
        // Predicated region
        $region17: #{transposed_classifier_forward.1} parent=11 // pred_check
          %p344 = pneg %p90
        $region18: #{transposed_classifier_forward.1} parent=11 // pred_check_branch
          %346 = sbr.rel (%p344) target = $region20
        $region19: #{transposed_classifier_forward.1} parent=11 // pred_region
          _
        $region20: #{transposed_classifier_forward.1} parent=11 // pred_fallthru
          _
        // Predicated region
        $region21: #{transposed_classifier_forward.1} parent=11 // pred_check
          %p347 = pneg %p111
        $region22: #{transposed_classifier_forward.1} parent=11 // pred_check_branch
          %349 = sbr.rel (%p347) target = $region24
        $region23: #{transposed_classifier_forward.1} parent=11 // pred_region
          %351 = vsyncadd [#allocation3], 0
          %s352 = sshll.u32 %s3, 4
          %s353 = int_to_ptr.hbm [resolvable:$true] %s352
          %s354 = sshll.u32 [#allocation2], 4
          %s355 = int_to_ptr.vmem [resolvable:$true] %s354
          %360 = dma.hbm_to_vmem [thread:$0]  %s353, 5120, %s355, [#allocation3], 256, 256, 16
        $region24: #{transposed_classifier_forward.1} parent=11 // pred_fallthru
          _
        // Predicated region
        $region25: #{transposed_classifier_forward.1} parent=11 // pred_check
          %p361 = pneg %p132
        $region26: #{transposed_classifier_forward.1} parent=11 // pred_check_branch
          %363 = sbr.rel (%p361) target = $region28
        $region27: #{transposed_classifier_forward.1} parent=11 // pred_region
          _
        $region28: #{transposed_classifier_forward.1} parent=11 // pred_fallthru
          _
        // Predicated region
        $region29: #{transposed_classifier_forward.1} parent=11 // pred_check
          %p364 = pneg %p153
        $region30: #{transposed_classifier_forward.1} parent=11 // pred_check_branch
          %366 = sbr.rel (%p364) target = $region32
        $region31: #{transposed_classifier_forward.1} parent=11 // pred_region
          _
        $region32: #{transposed_classifier_forward.1} parent=11 // pred_fallthru
          _
        // Predicated region
        $region33: #{transposed_classifier_forward.1} parent=11 // pred_check
          %p367 = pneg %p174
        $region34: #{transposed_classifier_forward.1} parent=11 // pred_check_branch
          %369 = sbr.rel (%p367) target = $region36
        $region35: #{transposed_classifier_forward.1} parent=11 // pred_region
          _
        $region36: #{transposed_classifier_forward.1} parent=11 // pred_fallthru
          _
        // Predicated region
        $region37: #{transposed_classifier_forward.1} parent=11 // pred_check
          %p370 = pneg %p195
        $region38: #{transposed_classifier_forward.1} parent=11 // pred_check_branch
          %372 = sbr.rel (%p370) target = $region40
        $region39: #{transposed_classifier_forward.1} parent=11 // pred_region
          %374 = vsyncadd [#allocation5], 0
          %s375 = sshll.u32 %s7, 4
          %s376 = int_to_ptr.hbm [resolvable:$true] %s375
          %s377 = sshll.u32 [#allocation4], 4
          %s378 = int_to_ptr.vmem [resolvable:$true] %s377
          %383 = dma.hbm_to_vmem [thread:$0]  %s376, 512, %s378, [#allocation5], 256, 256, 16
        $region40: #{transposed_classifier_forward.1} parent=11 // pred_fallthru
          _
        // Predicated region
        $region41: #{transposed_classifier_forward.1} parent=11 // pred_check
          %p384 = pneg %p216
        $region42: #{transposed_classifier_forward.1} parent=11 // pred_check_branch
          %386 = sbr.rel (%p384) target = $region44
        $region43: #{transposed_classifier_forward.1} parent=11 // pred_region
          _
        $region44: #{transposed_classifier_forward.1} parent=11 // pred_fallthru
          _
        // Predicated region
        $region45: #{transposed_classifier_forward.1} parent=11 // pred_check
          %p387 = pneg %p237
        $region46: #{transposed_classifier_forward.1} parent=11 // pred_check_branch
          %389 = sbr.rel (%p387) target = $region48
        $region47: #{transposed_classifier_forward.1} parent=11 // pred_region
          _
        $region48: #{transposed_classifier_forward.1} parent=11 // pred_fallthru
          _
        // Predicated region
        $region49: #{transposed_classifier_forward.1} parent=11 // pred_check
          %p390 = pneg %p258
        $region50: #{transposed_classifier_forward.1} parent=11 // pred_check_branch
          %392 = sbr.rel (%p390) target = $region52
        $region51: #{transposed_classifier_forward.1} parent=11 // pred_region
          %394 = vsyncadd [#allocation5], 0
          %s396 = sshll.u32 %s10, 4
          %s397 = int_to_ptr.hbm [resolvable:$true] %s396
          %s398 = sshll.u32 [#allocation6], 4
          %s399 = int_to_ptr.vmem [resolvable:$true] %s398
          %401 = dma.hbm_to_vmem [thread:$0]  %s397, 32, %s399, [#allocation5]
        $region52: #{transposed_classifier_forward.1} parent=11 // pred_fallthru
          _
        // Predicated region
        $region53: #{transposed_classifier_forward.1} parent=11 // pred_check
          %p402 = pneg %p279
        $region54: #{transposed_classifier_forward.1} parent=11 // pred_check_branch
          %404 = sbr.rel (%p402) target = $region56
        $region55: #{transposed_classifier_forward.1} parent=11 // pred_region
          _
        $region56: #{transposed_classifier_forward.1} parent=11 // pred_fallthru
          _
        // Predicated region
        $region57: #{transposed_classifier_forward.1} parent=11 // pred_check
          %p405 = pneg %p300
        $region58: #{transposed_classifier_forward.1} parent=11 // pred_check_branch
          %407 = sbr.rel (%p405) target = $region60
        $region59: #{transposed_classifier_forward.1} parent=11 // pred_region
          %409 = vsyncadd [#allocation8], 0
          %s411 = sshll.u32 %s12, 4
          %s412 = int_to_ptr.hbm [resolvable:$true] %s411
          %s413 = sshll.u32 [#allocation7], 4
          %s414 = int_to_ptr.vmem [resolvable:$true] %s413
          %416 = dma.hbm_to_vmem [thread:$0]  %s412, 128, %s414, [#allocation8]
        $region60: #{transposed_classifier_forward.1} parent=11 // pred_fallthru
          _
      $region12: #{transposed_classifier_forward.1} parent=5 // pred_fallthru
        _
      %p417 = scmp.lt.s32.totalorder %s22, 2
      // Predicated region
      $region61: #{transposed_classifier_forward.1} parent=5 // pred_check
        %p418 = pneg %p417
      $region62: #{transposed_classifier_forward.1} parent=5 // pred_check_branch
        %420 = sbr.rel (%p418) target = $region64
      $region63: #{transposed_classifier_forward.1} parent=5 // pred_region
        // Predicated region
        $region65: #{transposed_classifier_forward.1} parent=63 // pred_check
          %p421 = pneg %p42
        $region66: #{transposed_classifier_forward.1} parent=63 // pred_check_branch
          %423 = sbr.rel (%p421) target = $region68
        $region67: #{transposed_classifier_forward.1} parent=63 // pred_region
          %p424 = scmp.lt.s32.totalorder %s22, 1
          %s425 = scalar_select %p424, %s22, 1
          %s426 = smul.addr %s425, 2
          %s427 = smul.addr %s426, 8
          %s428 = scalar_lea.vmem %s0, %s427
        $region68: #{transposed_classifier_forward.1} parent=63 // pred_fallthru
          _
      $region64: #{transposed_classifier_forward.1} parent=5 // pred_fallthru
        _
      %p429 = scmp.le.s32.totalorder 1, %s22
      %p430 = scmp.lt.s32.totalorder %s22, 3
      %p431 = pnand %p429, %p430
      %p432 = pneg %p431
      // Predicated region
      $region69: #{transposed_classifier_forward.1} parent=5 // pred_check
        _
      $region70: #{transposed_classifier_forward.1} parent=5 // pred_check_branch
        %434 = sbr.rel (%p431) target = $region72
      $region71: #{transposed_classifier_forward.1} parent=5 // pred_region
        %s435 = ssub.s32 %s22, 1
        // Predicated region
        $region73: #{transposed_classifier_forward.1} parent=71 // pred_check
          %p436 = pneg %p111
        $region74: #{transposed_classifier_forward.1} parent=71 // pred_check_branch
          %438 = sbr.rel (%p436) target = $region76
        $region75: #{transposed_classifier_forward.1} parent=71 // pred_region
          %440 = dma.done [#allocation3], 5120
        $region76: #{transposed_classifier_forward.1} parent=71 // pred_fallthru
          _
        // Predicated region
        $region77: #{transposed_classifier_forward.1} parent=71 // pred_check
          %p441 = pneg %p195
        $region78: #{transposed_classifier_forward.1} parent=71 // pred_check_branch
          %443 = sbr.rel (%p441) target = $region80
        $region79: #{transposed_classifier_forward.1} parent=71 // pred_region
          %445 = dma.done [#allocation5], 512
        $region80: #{transposed_classifier_forward.1} parent=71 // pred_fallthru
          _
        // Predicated region
        $region81: #{transposed_classifier_forward.1} parent=71 // pred_check
          %p446 = pneg %p258
        $region82: #{transposed_classifier_forward.1} parent=71 // pred_check_branch
          %448 = sbr.rel (%p446) target = $region84
        $region83: #{transposed_classifier_forward.1} parent=71 // pred_region
          %450 = dma.done [#allocation5], 32
        $region84: #{transposed_classifier_forward.1} parent=71 // pred_fallthru
          _
        // Predicated region
        $region85: #{transposed_classifier_forward.1} parent=71 // pred_check
          %p451 = pneg %p300
        $region86: #{transposed_classifier_forward.1} parent=71 // pred_check_branch
          %453 = sbr.rel (%p451) target = $region88
        $region87: #{transposed_classifier_forward.1} parent=71 // pred_region
          %455 = dma.done [#allocation8], 128
        $region88: #{transposed_classifier_forward.1} parent=71 // pred_fallthru
          _
        %p456 = scmp.lt.s32.totalorder %s27, 1
        %s457 = scalar_select %p456, %s27, 1
        %s458 = smul.addr %s457, 2
        %s459 = smul.addr %s458, 8
        %s460 = scalar_lea.vmem %s0, %s459
        %p461 = pneg %p48
        %p462 = pneg %p45
        %p463 = pneg %p69
        %p464 = pneg %p66
        %p465 = pneg %p90
        %p466 = pneg %p87
        %p467 = pneg %p111
        %p468 = pneg %p108
        %p469 = pneg %p132
        %p470 = pneg %p129
        %p471 = pneg %p153
        %p472 = pneg %p150
        %p473 = pneg %p174
        %p474 = pneg %p171
        %p475 = pneg %p195
        %p476 = pneg %p192
        %p477 = pneg %p216
        %p478 = pneg %p213
        %p479 = pneg %p237
        %p480 = pneg %p234
        %p481 = pneg %p258
        %p482 = pneg %p255
        %p483 = pneg %p279
        %p484 = pneg %p276
        %p485 = pneg %p300
        %p486 = pneg %p297
        %p487 = pneg %p326
        %p488 = pneg %p323
        %p489 = scmp.lt.s32.totalorder %s27, 1
        %s490 = scalar_select %p489, %s27, 1
        %s491 = smul.addr %s490, 4
        %s492 = smul.addr %s491, 8
        %s493 = scalar_lea.vmem %s13, %s492
        %p494 = scmp.lt.s32.totalorder %s27, 1
        %s495 = scalar_select %p494, %s27, 1
        %s496 = smul.addr %s495, 2
        %s497 = smul.addr %s496, 8
        %s498 = scalar_lea.vmem %s0, %s497
        %p499 = scmp.lt.s32.totalorder %s27, 1
        %s500 = scalar_select %p499, %s27, 1
        %s501 = smul.addr %s500, 4
        %s502 = smul.addr %s501, 8
        %s503 = scalar_lea.vmem %s13, %s502
        %v504 = vld [vmem:[%s498] sm:$0xff]
        %v505 = vld [vmem:[%s498 + $0x8] sm:$0xff]
        %v506 = vld [vmem:[%s1] sm:$0xff]
        %v507 = vld [vmem:[%s1 + $0x8] sm:$0xff]
        %v508 = vld [vmem:[%s1 + $0x10] sm:$0xff]
        %v509 = vld [vmem:[%s1 + $0x18] sm:$0xff]
        %v510 = vld [vmem:[%s1 + $0x20] sm:$0xff]
        %v511 = vld [vmem:[%s1 + $0x28] sm:$0xff]
        %v512 = vld [vmem:[%s1 + $0x30] sm:$0xff]
        %v513 = vld [vmem:[%s1 + $0x38] sm:$0xff]
        %v514 = vld [vmem:[%s1 + $0x40] sm:$0xff]
        %v515 = vld [vmem:[%s1 + $0x48] sm:$0xff]
        %v516 = vld [vmem:[%s1 + $0x50] sm:$0xff]
        %v517 = vld [vmem:[%s1 + $0x58] sm:$0xff]
        %v518 = vld [vmem:[%s1 + $0x60] sm:$0xff]
        %v519 = vld [vmem:[%s1 + $0x68] sm:$0xff]
        %v520 = vld [vmem:[%s1 + $0x70] sm:$0xff]
        %v521 = vld [vmem:[%s1 + $0x78] sm:$0xff]
        %v522 = vld [vmem:[%s2] sm:$0x3]
        %v524 = vperm.slane %v522, 0
        %v525 = vperm.slane %v522, 1
        %vm528 = vcmask 523264
        %v530 = vsel %vm528, %v504, 0
        %v533 = vsel %vm528, %v505, 0
        %535 = vmatpush.msra.mxu0 0.0
        %536 = vmatpush.msra.mxu0 0.0
        %537 = vmatpush.msra.mxu0 0.0
        %538 = vmatpush.msra.mxu0 0.0
        %539 = vmatpush.msra.mxu0 0.0
        %540 = vmatpush.msra.mxu0 0.0
        %541 = vmatpush.msra.mxu0 0.0
        %542 = vmatpush.msra.mxu0 0.0
        %543 = vmatpush.msra.mxu0 %v520
        %544 = vmatpush.msra.mxu0 %v518
        %545 = vmatpush.msra.mxu0 %v516
        %546 = vmatpush.msra.mxu0 %v514
        %547 = vmatpush.msra.mxu0 %v512
        %548 = vmatpush.msra.mxu0 %v510
        %549 = vmatpush.msra.mxu0 %v508
        %550 = vmatpush.msra.mxu0 %v506
        %551 = vmatmul.f32.gmra.mxu0 %v530
        %v552 = vpop.f32.mrf.mxu0
        %v553 = vadd.f32 %v524, %v552
        %554 = vmatmul.f32.gmra.mxu0 %v533
        %v555 = vpop.f32.mrf.mxu0
        %v556 = vadd.f32 %v524, %v555
        %557 = vdwg.mxu0
        %558 = vmatpush.msra.mxu0 0.0
        %559 = vmatpush.msra.mxu0 0.0
        %560 = vmatpush.msra.mxu0 0.0
        %561 = vmatpush.msra.mxu0 0.0
        %562 = vmatpush.msra.mxu0 0.0
        %563 = vmatpush.msra.mxu0 0.0
        %564 = vmatpush.msra.mxu0 0.0
        %565 = vmatpush.msra.mxu0 0.0
        %566 = vmatpush.msra.mxu0 %v521
        %567 = vmatpush.msra.mxu0 %v519
        %568 = vmatpush.msra.mxu0 %v517
        %569 = vmatpush.msra.mxu0 %v515
        %570 = vmatpush.msra.mxu0 %v513
        %571 = vmatpush.msra.mxu0 %v511
        %572 = vmatpush.msra.mxu0 %v509
        %573 = vmatpush.msra.mxu0 %v507
        %574 = vmatmul.f32.gmra.mxu0 %v530
        %v575 = vpop.f32.mrf.mxu0
        %v576 = vadd.f32 %v525, %v575
        %577 = vmatmul.f32.gmra.mxu0 %v533
        %v578 = vpop.f32.mrf.mxu0
        %v579 = vadd.f32 %v525, %v578
        %580 = vdwg.mxu0
        %v581 = vld [vmem:[#allocation2] sm:$0xff]
        %v582 = vld [vmem:[#allocation2 + $0x8] sm:$0xff]
        %v583 = vld [vmem:[#allocation2 + $0x10] sm:$0xff]
        %v584 = vld [vmem:[#allocation2 + $0x18] sm:$0xff]
        %v585 = vld [vmem:[#allocation2 + $0x20] sm:$0xff]
        %v586 = vld [vmem:[#allocation2 + $0x28] sm:$0xff]
        %v587 = vld [vmem:[#allocation2 + $0x30] sm:$0xff]
        %v588 = vld [vmem:[#allocation2 + $0x38] sm:$0xff]
        %v589 = vld [vmem:[#allocation2 + $0x40] sm:$0xff]
        %v590 = vld [vmem:[#allocation2 + $0x48] sm:$0xff]
        %v591 = vld [vmem:[#allocation2 + $0x50] sm:$0xff]
        %v592 = vld [vmem:[#allocation2 + $0x58] sm:$0xff]
        %v593 = vld [vmem:[#allocation2 + $0x60] sm:$0xff]
        %v594 = vld [vmem:[#allocation2 + $0x68] sm:$0xff]
        %v595 = vld [vmem:[#allocation2 + $0x70] sm:$0xff]
        %v596 = vld [vmem:[#allocation2 + $0x78] sm:$0xff]
        %v597 = vld [vmem:[#allocation2 + $0x80] sm:$0xff]
        %v598 = vld [vmem:[#allocation2 + $0x88] sm:$0xff]
        %v599 = vld [vmem:[#allocation2 + $0x90] sm:$0xff]
        %v600 = vld [vmem:[#allocation2 + $0x98] sm:$0xff]
        %v601 = vld [vmem:[#allocation2 + $0xa0] sm:$0xff]
        %v602 = vld [vmem:[#allocation2 + $0xa8] sm:$0xff]
        %v603 = vld [vmem:[#allocation2 + $0xb0] sm:$0xff]
        %v604 = vld [vmem:[#allocation2 + $0xb8] sm:$0xff]
        %v605 = vld [vmem:[#allocation2 + $0xc0] sm:$0xff]
        %v606 = vld [vmem:[#allocation2 + $0xc8] sm:$0xff]
        %v607 = vld [vmem:[#allocation2 + $0xd0] sm:$0xff]
        %v608 = vld [vmem:[#allocation2 + $0xd8] sm:$0xff]
        %v609 = vld [vmem:[#allocation2 + $0xe0] sm:$0xff]
        %v610 = vld [vmem:[#allocation2 + $0xe8] sm:$0xff]
        %v611 = vld [vmem:[#allocation2 + $0xf0] sm:$0xff]
        %v612 = vld [vmem:[#allocation2 + $0xf8] sm:$0xff]
        %v613 = vld [vmem:[#allocation2 + $0x100] sm:$0xff]
        %v614 = vld [vmem:[#allocation2 + $0x108] sm:$0xff]
        %v615 = vld [vmem:[#allocation2 + $0x110] sm:$0xff]
        %v616 = vld [vmem:[#allocation2 + $0x118] sm:$0xff]
        %v617 = vld [vmem:[#allocation2 + $0x120] sm:$0xff]
        %v618 = vld [vmem:[#allocation2 + $0x128] sm:$0xff]
        %v619 = vld [vmem:[#allocation2 + $0x130] sm:$0xff]
        %v620 = vld [vmem:[#allocation2 + $0x138] sm:$0xff]
        %v621 = vld [vmem:[%s4] sm:$0x3]
        %v623 = vperm.slane %v621, 0
        %v624 = vperm.slane %v621, 1
        %vm627 = vcmask 261120
        %v629 = vsel %vm627, %v576, 0
        %v632 = vsel %vm627, %v579, 0
        %634 = vmatpush.msra.mxu0 %v611
        %635 = vmatpush.msra.mxu0 %v609
        %636 = vmatpush.msra.mxu0 %v607
        %637 = vmatpush.msra.mxu0 %v605
        %638 = vmatpush.msra.mxu0 %v603
        %639 = vmatpush.msra.mxu0 %v601
        %640 = vmatpush.msra.mxu0 %v599
        %641 = vmatpush.msra.mxu0 %v597
        %642 = vmatpush.msra.mxu0 %v595
        %643 = vmatpush.msra.mxu0 %v593
        %644 = vmatpush.msra.mxu0 %v591
        %645 = vmatpush.msra.mxu0 %v589
        %646 = vmatpush.msra.mxu0 %v587
        %647 = vmatpush.msra.mxu0 %v585
        %648 = vmatpush.msra.mxu0 %v583
        %649 = vmatpush.msra.mxu0 %v581
        %650 = vmatmul.f32.gmra.mxu0 %v553
        %v651 = vpop.f32.mrf.mxu0
        %v652 = vadd.f32 %v623, %v651
        %653 = vmatmul.f32.gmra.mxu0 %v556
        %v654 = vpop.f32.mrf.mxu0
        %v655 = vadd.f32 %v623, %v654
        %656 = vdwg.mxu0
        %657 = vmatpush.msra.mxu0 0.0
        %658 = vmatpush.msra.mxu0 0.0
        %659 = vmatpush.msra.mxu0 0.0
        %660 = vmatpush.msra.mxu0 0.0
        %661 = vmatpush.msra.mxu0 0.0
        %662 = vmatpush.msra.mxu0 0.0
        %663 = vmatpush.msra.mxu0 0.0
        %664 = vmatpush.msra.mxu0 0.0
        %665 = vmatpush.msra.mxu0 0.0
        %666 = vmatpush.msra.mxu0 0.0
        %667 = vmatpush.msra.mxu0 0.0
        %668 = vmatpush.msra.mxu0 0.0
        %669 = vmatpush.msra.mxu0 %v619
        %670 = vmatpush.msra.mxu0 %v617
        %671 = vmatpush.msra.mxu0 %v615
        %672 = vmatpush.msra.mxu0 %v613
        %673 = vmatmul.f32.gmra.mxu0 %v629
        %v674 = vpop.f32.mrf.mxu0
        %v675 = vadd.f32 %v652, %v674
        %676 = vmatmul.f32.gmra.mxu0 %v632
        %v677 = vpop.f32.mrf.mxu0
        %v678 = vadd.f32 %v655, %v677
        %679 = vdwg.mxu0
        %680 = vmatpush.msra.mxu0 %v612
        %681 = vmatpush.msra.mxu0 %v610
        %682 = vmatpush.msra.mxu0 %v608
        %683 = vmatpush.msra.mxu0 %v606
        %684 = vmatpush.msra.mxu0 %v604
        %685 = vmatpush.msra.mxu0 %v602
        %686 = vmatpush.msra.mxu0 %v600
        %687 = vmatpush.msra.mxu0 %v598
        %688 = vmatpush.msra.mxu0 %v596
        %689 = vmatpush.msra.mxu0 %v594
        %690 = vmatpush.msra.mxu0 %v592
        %691 = vmatpush.msra.mxu0 %v590
        %692 = vmatpush.msra.mxu0 %v588
        %693 = vmatpush.msra.mxu0 %v586
        %694 = vmatpush.msra.mxu0 %v584
        %695 = vmatpush.msra.mxu0 %v582
        %696 = vmatmul.f32.gmra.mxu0 %v553
        %v697 = vpop.f32.mrf.mxu0
        %v698 = vadd.f32 %v624, %v697
        %699 = vmatmul.f32.gmra.mxu0 %v556
        %v700 = vpop.f32.mrf.mxu0
        %v701 = vadd.f32 %v624, %v700
        %702 = vdwg.mxu0
        %703 = vmatpush.msra.mxu0 0.0
        %704 = vmatpush.msra.mxu0 0.0
        %705 = vmatpush.msra.mxu0 0.0
        %706 = vmatpush.msra.mxu0 0.0
        %707 = vmatpush.msra.mxu0 0.0
        %708 = vmatpush.msra.mxu0 0.0
        %709 = vmatpush.msra.mxu0 0.0
        %710 = vmatpush.msra.mxu0 0.0
        %711 = vmatpush.msra.mxu0 0.0
        %712 = vmatpush.msra.mxu0 0.0
        %713 = vmatpush.msra.mxu0 0.0
        %714 = vmatpush.msra.mxu0 0.0
        %715 = vmatpush.msra.mxu0 %v620
        %716 = vmatpush.msra.mxu0 %v618
        %717 = vmatpush.msra.mxu0 %v616
        %718 = vmatpush.msra.mxu0 %v614
        %719 = vmatmul.f32.gmra.mxu0 %v629
        %v720 = vpop.f32.mrf.mxu0
        %v721 = vadd.f32 %v698, %v720
        %722 = vmatmul.f32.gmra.mxu0 %v632
        %v723 = vpop.f32.mrf.mxu0
        %v724 = vadd.f32 %v701, %v723
        %725 = vdwg.mxu0
        %v726 = vld [vmem:[%s5] sm:$0xff]
        %v727 = vld [vmem:[%s5 + $0x8] sm:$0xff]
        %v728 = vld [vmem:[%s5 + $0x10] sm:$0x1]
        %v729 = vld [vmem:[%s5 + $0x18] sm:$0x1]
        %v730 = vld [vmem:[%s6] sm:$0xff]
        %v731 = vld [vmem:[%s6 + $0x8] sm:$0xff]
        %v732 = vld [vmem:[%s6 + $0x10] sm:$0xff]
        %v733 = vld [vmem:[%s6 + $0x18] sm:$0xff]
        %v734 = vld [vmem:[%s6 + $0x20] sm:$0xff]
        %v735 = vld [vmem:[%s6 + $0x28] sm:$0xff]
        %v736 = vld [vmem:[%s6 + $0x30] sm:$0xff]
        %v737 = vld [vmem:[%s6 + $0x38] sm:$0xff]
        %v738 = vld [vmem:[%s6 + $0x40] sm:$0xff]
        %v739 = vld [vmem:[%s6 + $0x48] sm:$0xff]
        %v740 = vld [vmem:[%s6 + $0x50] sm:$0xff]
        %v741 = vld [vmem:[%s6 + $0x58] sm:$0xff]
        %v742 = vld [vmem:[%s6 + $0x60] sm:$0xff]
        %v743 = vld [vmem:[%s6 + $0x68] sm:$0xff]
        %v744 = vld [vmem:[%s6 + $0x70] sm:$0xff]
        %v745 = vld [vmem:[%s6 + $0x78] sm:$0xff]
        %v746 = vld [vmem:[%s6 + $0x80] sm:$0xff]
        %v747 = vld [vmem:[%s6 + $0x88] sm:$0xff]
        %v748 = vld [vmem:[%s6 + $0x90] sm:$0xff]
        %v749 = vld [vmem:[%s6 + $0x98] sm:$0xff]
        %v750 = vld [vmem:[%s6 + $0xa0] sm:$0xff]
        %v751 = vld [vmem:[%s6 + $0xa8] sm:$0xff]
        %v752 = vld [vmem:[%s6 + $0xb0] sm:$0xff]
        %v753 = vld [vmem:[%s6 + $0xb8] sm:$0xff]
        %v754 = vld [vmem:[%s6 + $0xc0] sm:$0xff]
        %v755 = vld [vmem:[%s6 + $0xc8] sm:$0xff]
        %v756 = vld [vmem:[%s6 + $0xd0] sm:$0xff]
        %v757 = vld [vmem:[%s6 + $0xd8] sm:$0xff]
        %v758 = vld [vmem:[%s6 + $0xe0] sm:$0xff]
        %v759 = vld [vmem:[%s6 + $0xe8] sm:$0xff]
        %v760 = vld [vmem:[%s6 + $0xf0] sm:$0xff]
        %v761 = vld [vmem:[%s6 + $0xf8] sm:$0xff]
        %v762 = vld [vmem:[%s6 + $0x100] sm:$0xff]
        %v763 = vld [vmem:[%s6 + $0x108] sm:$0xff]
        %v764 = vld [vmem:[%s6 + $0x110] sm:$0xff]
        %v765 = vld [vmem:[%s6 + $0x118] sm:$0xff]
        %v766 = vld [vmem:[%s6 + $0x120] sm:$0xff]
        %v767 = vld [vmem:[%s6 + $0x128] sm:$0xff]
        %v768 = vld [vmem:[%s6 + $0x130] sm:$0xff]
        %v769 = vld [vmem:[%s6 + $0x138] sm:$0xff]
        %v770 = vld [vmem:[%s6 + $0x140] sm:$0xff]
        %v771 = vld [vmem:[%s6 + $0x148] sm:$0xff]
        %v772 = vld [vmem:[%s6 + $0x150] sm:$0xff]
        %v773 = vld [vmem:[%s6 + $0x158] sm:$0xff]
        %v774 = vld [vmem:[%s6 + $0x160] sm:$0xff]
        %v775 = vld [vmem:[%s6 + $0x168] sm:$0xff]
        %v776 = vld [vmem:[%s6 + $0x170] sm:$0xff]
        %v777 = vld [vmem:[%s6 + $0x178] sm:$0xff]
        %v778 = vld [vmem:[%s6 + $0x180] sm:$0xff]
        %v779 = vld [vmem:[%s6 + $0x188] sm:$0xff]
        %v780 = vld [vmem:[%s6 + $0x190] sm:$0xff]
        %v781 = vld [vmem:[%s6 + $0x198] sm:$0xff]
        %v782 = vld [vmem:[%s6 + $0x1a0] sm:$0xff]
        %v783 = vld [vmem:[%s6 + $0x1a8] sm:$0xff]
        %v784 = vld [vmem:[%s6 + $0x1b0] sm:$0xff]
        %v785 = vld [vmem:[%s6 + $0x1b8] sm:$0xff]
        %v786 = vld [vmem:[%s6 + $0x1c0] sm:$0xff]
        %v787 = vld [vmem:[%s6 + $0x1c8] sm:$0xff]
        %v788 = vld [vmem:[%s6 + $0x1d0] sm:$0xff]
        %v789 = vld [vmem:[%s6 + $0x1d8] sm:$0xff]
        %v790 = vld [vmem:[%s6 + $0x1e0] sm:$0xff]
        %v791 = vld [vmem:[%s6 + $0x1e8] sm:$0xff]
        %v792 = vld [vmem:[%s6 + $0x1f0] sm:$0xff]
        %v793 = vld [vmem:[%s6 + $0x1f8] sm:$0xff]
        %798 = vrot.lane.b32.xlu0 %v675, 4
        %v799 = vpop.permute.xlu0 %798
        %800 = vrot.lane.b32.xlu0 %v721, 4
        %v801 = vpop.permute.xlu0 %800
        %802 = vrot.lane.b32.xlu0 %v678, 4
        %v803 = vpop.permute.xlu0 %802
        %804 = vrot.lane.b32.xlu0 %v724, 4
        %v805 = vpop.permute.xlu0 %804
        %vm806 = vcmask 31744
        %v807 = vsel %vm806, %v799, %v801
        %v808 = vsel %vm806, %v803, %v805
        %v813 = vsel %vm806, 0.0, %v799
        %v814 = vsel %vm806, 0.0, %v803
        %v815 = vsel %vm806, %v801, 0.0
        %v816 = vsel %vm806, %v805, 0.0
        %vm821 = vcmask 1040384
        %v822 = vrot.slane %v813, 7
        %v823 = vrot.slane %v807, 7
        %v824 = vrot.slane %v815, 7
        %v825 = vrot.slane %v814, 7
        %v826 = vsel %vm821, %v822, %v825
        %v827 = vrot.slane %v808, 7
        %v828 = vsel %vm821, %v823, %v827
        %v829 = vrot.slane %v816, 7
        %v830 = vsel %vm821, %v824, %v829
        %v840 = vsel %vm821, 0.0, %v822
        %v841 = vsel %vm821, 0.0, %v823
        %v842 = vsel %vm821, 0.0, %v824
        %v843 = vsel %vm821, %v825, 0.0
        %v844 = vsel %vm821, %v827, 0.0
        %v845 = vsel %vm821, %v829, 0.0
        %v846 = vperm.slane %v726, 0
        %v847 = vperm.slane %v727, 0
        %v848 = vmul.f32 %v840, %v846
        %v849 = vmul.f32 %v841, %v847
        %v850 = vmul.f32 %v826, %v846
        %v851 = vmul.f32 %v828, %v847
        %v852 = vperm.slane %v726, 1
        %v853 = vperm.slane %v727, 1
        %v854 = vmul.f32 %v840, %v852
        %v855 = vmul.f32 %v841, %v853
        %v856 = vmul.f32 %v826, %v852
        %v857 = vmul.f32 %v828, %v853
        %v858 = vmul.f32 %v843, %v852
        %v859 = vmul.f32 %v844, %v853
        %vm866 = vcmask 1046528
        %v867 = vrot.slane %v854, 1
        %v868 = vrot.slane %v856, 1
        %v869 = vsel %vm866, %v867, %v868
        %v870 = vrot.slane %v855, 1
        %v871 = vrot.slane %v857, 1
        %v872 = vsel %vm866, %v870, %v871
        %v873 = vrot.slane %v858, 1
        %v874 = vsel %vm866, %v868, %v873
        %v875 = vrot.slane %v859, 1
        %v876 = vsel %vm866, %v871, %v875
        %v881 = vadd.f32 %v848, %v869
        %v882 = vadd.f32 %v849, %v872
        %v883 = vadd.f32 %v850, %v874
        %v884 = vadd.f32 %v851, %v876
        %v885 = vperm.slane %v726, 2
        %v886 = vperm.slane %v727, 2
        %v887 = vmul.f32 %v840, %v885
        %v888 = vmul.f32 %v841, %v886
        %v889 = vmul.f32 %v826, %v885
        %v890 = vmul.f32 %v828, %v886
        %v891 = vmul.f32 %v843, %v885
        %v892 = vmul.f32 %v844, %v886
        %vm899 = vcmask 1045504
        %v900 = vrot.slane %v887, 2
        %v901 = vrot.slane %v889, 2
        %v902 = vsel %vm899, %v900, %v901
        %v903 = vrot.slane %v888, 2
        %v904 = vrot.slane %v890, 2
        %v905 = vsel %vm899, %v903, %v904
        %v906 = vrot.slane %v891, 2
        %v907 = vsel %vm899, %v901, %v906
        %v908 = vrot.slane %v892, 2
        %v909 = vsel %vm899, %v904, %v908
        %v914 = vadd.f32 %v881, %v902
        %v915 = vadd.f32 %v882, %v905
        %v916 = vadd.f32 %v883, %v907
        %v917 = vadd.f32 %v884, %v909
        %v918 = vperm.slane %v726, 3
        %v919 = vperm.slane %v727, 3
        %922 = vrot.lane.b32.xlu0 %v918, 4
        %v923 = vpop.permute.xlu0 %922
        %924 = vrot.lane.b32.xlu0 %v919, 4
        %v925 = vpop.permute.xlu0 %924
        %v926 = vsel %vm806, %v923, %v925
        %v930 = vmul.f32 %v840, %v923
        %v931 = vmul.f32 %v841, %v926
        %v932 = vmul.f32 %v842, %v925
        %v933 = vmul.f32 %v826, %v923
        %v934 = vmul.f32 %v828, %v926
        %v935 = vmul.f32 %v830, %v925
        %942 = vrot.lane.b32.xlu0 %v930, 124
        %v943 = vpop.permute.xlu0 %942
        %944 = vrot.lane.b32.xlu0 %v931, 124
        %v945 = vpop.permute.xlu0 %944
        %946 = vrot.lane.b32.xlu0 %v932, 124
        %v947 = vpop.permute.xlu0 %946
        %948 = vrot.lane.b32.xlu0 %v933, 124
        %v949 = vpop.permute.xlu0 %948
        %950 = vrot.lane.b32.xlu0 %v934, 124
        %v951 = vpop.permute.xlu0 %950
        %952 = vrot.lane.b32.xlu0 %v935, 124
        %v953 = vpop.permute.xlu0 %952
        %vm954 = vcmask 1014784
        %v955 = vsel %vm954, %v943, %v945
        %v956 = vsel %vm954, %v945, %v947
        %v957 = vsel %vm954, %v949, %v951
        %v958 = vsel %vm954, %v951, %v953
        %v963 = vadd.f32 %v914, %v955
        %v964 = vadd.f32 %v915, %v956
        %v965 = vadd.f32 %v916, %v957
        %v966 = vadd.f32 %v917, %v958
        %v967 = vperm.slane %v726, 4
        %v968 = vperm.slane %v727, 4
        %971 = vrot.lane.b32.xlu0 %v967, 4
        %v972 = vpop.permute.xlu0 %971
        %973 = vrot.lane.b32.xlu0 %v968, 4
        %v974 = vpop.permute.xlu0 %973
        %v975 = vsel %vm806, %v972, %v974
        %v979 = vmul.f32 %v840, %v972
        %v980 = vmul.f32 %v841, %v975
        %v981 = vmul.f32 %v842, %v974
        %v982 = vmul.f32 %v826, %v972
        %v983 = vmul.f32 %v828, %v975
        %v984 = vmul.f32 %v830, %v974
        %v985 = vmul.f32 %v843, %v972
        %v986 = vmul.f32 %v844, %v975
        %v987 = vmul.f32 %v845, %v974
        %v997 = vrot.slane %v979, 1
        %v998 = vrot.slane %v982, 1
        %v999 = vsel %vm866, %v997, %v998
        %v1000 = vrot.slane %v980, 1
        %v1001 = vrot.slane %v983, 1
        %v1002 = vsel %vm866, %v1000, %v1001
        %v1003 = vrot.slane %v981, 1
        %v1004 = vrot.slane %v984, 1
        %v1005 = vsel %vm866, %v1003, %v1004
        %v1006 = vrot.slane %v985, 1
        %v1007 = vsel %vm866, %v998, %v1006
        %v1008 = vrot.slane %v986, 1
        %v1009 = vsel %vm866, %v1001, %v1008
        %v1010 = vrot.slane %v987, 1
        %v1011 = vsel %vm866, %v1004, %v1010
        %1012 = vrot.lane.b32.xlu0 %v999, 124
        %v1013 = vpop.permute.xlu0 %1012
        %1014 = vrot.lane.b32.xlu0 %v1002, 124
        %v1015 = vpop.permute.xlu0 %1014
        %1016 = vrot.lane.b32.xlu0 %v1005, 124
        %v1017 = vpop.permute.xlu0 %1016
        %1018 = vrot.lane.b32.xlu0 %v1007, 124
        %v1019 = vpop.permute.xlu0 %1018
        %1020 = vrot.lane.b32.xlu0 %v1009, 124
        %v1021 = vpop.permute.xlu0 %1020
        %1022 = vrot.lane.b32.xlu0 %v1011, 124
        %v1023 = vpop.permute.xlu0 %1022
        %v1024 = vsel %vm954, %v1013, %v1015
        %v1025 = vsel %vm954, %v1015, %v1017
        %v1026 = vsel %vm954, %v1019, %v1021
        %v1027 = vsel %vm954, %v1021, %v1023
        %v1032 = vadd.f32 %v963, %v1024
        %v1033 = vadd.f32 %v964, %v1025
        %v1034 = vadd.f32 %v965, %v1026
        %v1035 = vadd.f32 %v966, %v1027
        %v1036 = vperm.slane %v726, 5
        %v1037 = vperm.slane %v727, 5
        %1040 = vrot.lane.b32.xlu0 %v1036, 4
        %v1041 = vpop.permute.xlu0 %1040
        %1042 = vrot.lane.b32.xlu0 %v1037, 4
        %v1043 = vpop.permute.xlu0 %1042
        %v1044 = vsel %vm806, %v1041, %v1043
        %v1048 = vmul.f32 %v840, %v1041
        %v1049 = vmul.f32 %v841, %v1044
        %v1050 = vmul.f32 %v842, %v1043
        %v1051 = vmul.f32 %v826, %v1041
        %v1052 = vmul.f32 %v828, %v1044
        %v1053 = vmul.f32 %v830, %v1043
        %v1054 = vmul.f32 %v843, %v1041
        %v1055 = vmul.f32 %v844, %v1044
        %v1056 = vmul.f32 %v845, %v1043
        %v1066 = vrot.slane %v1048, 2
        %v1067 = vrot.slane %v1051, 2
        %v1068 = vsel %vm899, %v1066, %v1067
        %v1069 = vrot.slane %v1049, 2
        %v1070 = vrot.slane %v1052, 2
        %v1071 = vsel %vm899, %v1069, %v1070
        %v1072 = vrot.slane %v1050, 2
        %v1073 = vrot.slane %v1053, 2
        %v1074 = vsel %vm899, %v1072, %v1073
        %v1075 = vrot.slane %v1054, 2
        %v1076 = vsel %vm899, %v1067, %v1075
        %v1077 = vrot.slane %v1055, 2
        %v1078 = vsel %vm899, %v1070, %v1077
        %v1079 = vrot.slane %v1056, 2
        %v1080 = vsel %vm899, %v1073, %v1079
        %1081 = vrot.lane.b32.xlu0 %v1068, 124
        %v1082 = vpop.permute.xlu0 %1081
        %1083 = vrot.lane.b32.xlu0 %v1071, 124
        %v1084 = vpop.permute.xlu0 %1083
        %1085 = vrot.lane.b32.xlu0 %v1074, 124
        %v1086 = vpop.permute.xlu0 %1085
        %1087 = vrot.lane.b32.xlu0 %v1076, 124
        %v1088 = vpop.permute.xlu0 %1087
        %1089 = vrot.lane.b32.xlu0 %v1078, 124
        %v1090 = vpop.permute.xlu0 %1089
        %1091 = vrot.lane.b32.xlu0 %v1080, 124
        %v1092 = vpop.permute.xlu0 %1091
        %v1093 = vsel %vm954, %v1082, %v1084
        %v1094 = vsel %vm954, %v1084, %v1086
        %v1095 = vsel %vm954, %v1088, %v1090
        %v1096 = vsel %vm954, %v1090, %v1092
        %v1101 = vadd.f32 %v1032, %v1093
        %v1102 = vadd.f32 %v1033, %v1094
        %v1103 = vadd.f32 %v1034, %v1095
        %v1104 = vadd.f32 %v1035, %v1096
        %v1105 = vperm.slane %v726, 6
        %v1106 = vperm.slane %v727, 6
        %1109 = vrot.lane.b32.xlu0 %v1105, 8
        %v1110 = vpop.permute.xlu0 %1109
        %1111 = vrot.lane.b32.xlu0 %v1106, 8
        %v1112 = vpop.permute.xlu0 %1111
        %vm1113 = vcmask 64512
        %v1114 = vsel %vm1113, %v1110, %v1112
        %v1118 = vmul.f32 %v840, %v1110
        %v1119 = vmul.f32 %v841, %v1114
        %v1120 = vmul.f32 %v842, %v1112
        %v1121 = vmul.f32 %v826, %v1110
        %v1122 = vmul.f32 %v828, %v1114
        %v1123 = vmul.f32 %v830, %v1112
        %1130 = vrot.lane.b32.xlu0 %v1118, 120
        %v1131 = vpop.permute.xlu0 %1130
        %1132 = vrot.lane.b32.xlu0 %v1119, 120
        %v1133 = vpop.permute.xlu0 %1132
        %1134 = vrot.lane.b32.xlu0 %v1120, 120
        %v1135 = vpop.permute.xlu0 %1134
        %1136 = vrot.lane.b32.xlu0 %v1121, 120
        %v1137 = vpop.permute.xlu0 %1136
        %1138 = vrot.lane.b32.xlu0 %v1122, 120
        %v1139 = vpop.permute.xlu0 %1138
        %1140 = vrot.lane.b32.xlu0 %v1123, 120
        %v1141 = vpop.permute.xlu0 %1140
        %vm1142 = vcmask 982016
        %v1143 = vsel %vm1142, %v1131, %v1133
        %v1144 = vsel %vm1142, %v1133, %v1135
        %v1145 = vsel %vm1142, %v1137, %v1139
        %v1146 = vsel %vm1142, %v1139, %v1141
        %v1151 = vadd.f32 %v1101, %v1143
        %v1152 = vadd.f32 %v1102, %v1144
        %v1153 = vadd.f32 %v1103, %v1145
        %v1154 = vadd.f32 %v1104, %v1146
        %v1155 = vperm.slane %v726, 7
        %v1156 = vperm.slane %v727, 7
        %1159 = vrot.lane.b32.xlu0 %v1155, 8
        %v1160 = vpop.permute.xlu0 %1159
        %1161 = vrot.lane.b32.xlu0 %v1156, 8
        %v1162 = vpop.permute.xlu0 %1161
        %v1163 = vsel %vm1113, %v1160, %v1162
        %v1167 = vmul.f32 %v840, %v1160
        %v1168 = vmul.f32 %v841, %v1163
        %v1169 = vmul.f32 %v842, %v1162
        %v1170 = vmul.f32 %v826, %v1160
        %v1171 = vmul.f32 %v828, %v1163
        %v1172 = vmul.f32 %v830, %v1162
        %v1173 = vmul.f32 %v843, %v1160
        %v1174 = vmul.f32 %v844, %v1163
        %v1175 = vmul.f32 %v845, %v1162
        %v1185 = vrot.slane %v1167, 1
        %v1186 = vrot.slane %v1170, 1
        %v1187 = vsel %vm866, %v1185, %v1186
        %v1188 = vrot.slane %v1168, 1
        %v1189 = vrot.slane %v1171, 1
        %v1190 = vsel %vm866, %v1188, %v1189
        %v1191 = vrot.slane %v1169, 1
        %v1192 = vrot.slane %v1172, 1
        %v1193 = vsel %vm866, %v1191, %v1192
        %v1194 = vrot.slane %v1173, 1
        %v1195 = vsel %vm866, %v1186, %v1194
        %v1196 = vrot.slane %v1174, 1
        %v1197 = vsel %vm866, %v1189, %v1196
        %v1198 = vrot.slane %v1175, 1
        %v1199 = vsel %vm866, %v1192, %v1198
        %1200 = vrot.lane.b32.xlu0 %v1187, 120
        %v1201 = vpop.permute.xlu0 %1200
        %1202 = vrot.lane.b32.xlu0 %v1190, 120
        %v1203 = vpop.permute.xlu0 %1202
        %1204 = vrot.lane.b32.xlu0 %v1193, 120
        %v1205 = vpop.permute.xlu0 %1204
        %1206 = vrot.lane.b32.xlu0 %v1195, 120
        %v1207 = vpop.permute.xlu0 %1206
        %1208 = vrot.lane.b32.xlu0 %v1197, 120
        %v1209 = vpop.permute.xlu0 %1208
        %1210 = vrot.lane.b32.xlu0 %v1199, 120
        %v1211 = vpop.permute.xlu0 %1210
        %v1212 = vsel %vm1142, %v1201, %v1203
        %v1213 = vsel %vm1142, %v1203, %v1205
        %v1214 = vsel %vm1142, %v1207, %v1209
        %v1215 = vsel %vm1142, %v1209, %v1211
        %v1220 = vadd.f32 %v1151, %v1212
        %v1221 = vadd.f32 %v1152, %v1213
        %v1222 = vadd.f32 %v1153, %v1214
        %v1223 = vadd.f32 %v1154, %v1215
        %v1224 = vperm.slane %v728, 0
        %v1225 = vperm.slane %v729, 0
        %1228 = vrot.lane.b32.xlu0 %v1224, 8
        %v1229 = vpop.permute.xlu0 %1228
        %1230 = vrot.lane.b32.xlu0 %v1225, 8
        %v1231 = vpop.permute.xlu0 %1230
        %v1232 = vsel %vm1113, %v1229, %v1231
        %v1236 = vmul.f32 %v840, %v1229
        %v1237 = vmul.f32 %v841, %v1232
        %v1238 = vmul.f32 %v842, %v1231
        %v1239 = vmul.f32 %v826, %v1229
        %v1240 = vmul.f32 %v828, %v1232
        %v1241 = vmul.f32 %v830, %v1231
        %v1242 = vmul.f32 %v843, %v1229
        %v1243 = vmul.f32 %v844, %v1232
        %v1244 = vmul.f32 %v845, %v1231
        %v1254 = vrot.slane %v1236, 2
        %v1255 = vrot.slane %v1239, 2
        %v1256 = vsel %vm899, %v1254, %v1255
        %v1257 = vrot.slane %v1237, 2
        %v1258 = vrot.slane %v1240, 2
        %v1259 = vsel %vm899, %v1257, %v1258
        %v1260 = vrot.slane %v1238, 2
        %v1261 = vrot.slane %v1241, 2
        %v1262 = vsel %vm899, %v1260, %v1261
        %v1263 = vrot.slane %v1242, 2
        %v1264 = vsel %vm899, %v1255, %v1263
        %v1265 = vrot.slane %v1243, 2
        %v1266 = vsel %vm899, %v1258, %v1265
        %v1267 = vrot.slane %v1244, 2
        %v1268 = vsel %vm899, %v1261, %v1267
        %1269 = vrot.lane.b32.xlu0 %v1256, 120
        %v1270 = vpop.permute.xlu0 %1269
        %1271 = vrot.lane.b32.xlu0 %v1259, 120
        %v1272 = vpop.permute.xlu0 %1271
        %1273 = vrot.lane.b32.xlu0 %v1262, 120
        %v1274 = vpop.permute.xlu0 %1273
        %1275 = vrot.lane.b32.xlu0 %v1264, 120
        %v1276 = vpop.permute.xlu0 %1275
        %1277 = vrot.lane.b32.xlu0 %v1266, 120
        %v1278 = vpop.permute.xlu0 %1277
        %1279 = vrot.lane.b32.xlu0 %v1268, 120
        %v1280 = vpop.permute.xlu0 %1279
        %v1281 = vsel %vm1142, %v1270, %v1272
        %v1282 = vsel %vm1142, %v1272, %v1274
        %v1283 = vsel %vm1142, %v1276, %v1278
        %v1284 = vsel %vm1142, %v1278, %v1280
        %v1289 = vadd.f32 %v1220, %v1281
        %v1290 = vadd.f32 %v1221, %v1282
        %v1291 = vadd.f32 %v1222, %v1283
        %v1292 = vadd.f32 %v1223, %v1284
        %v1293 = vadd.f32 %v1289, %v1291
        %v1294 = vrot.slane %v1293, 4
        %v1295 = vadd.f32 %v1293, %v1294
        %v1296 = vrot.slane %v1295, 2
        %v1297 = vadd.f32 %v1295, %v1296
        %v1298 = vrot.slane %v1297, 1
        %v1299 = vadd.f32 %v1297, %v1298
        %v1300 = vadd.f32 %v1290, %v1292
        %v1301 = vrot.slane %v1300, 4
        %v1302 = vadd.f32 %v1300, %v1301
        %v1303 = vrot.slane %v1302, 2
        %v1304 = vadd.f32 %v1302, %v1303
        %v1305 = vrot.slane %v1304, 1
        %v1306 = vadd.f32 %v1304, %v1305
        %v1307 = vmul.f32 %v1289, %v1289
        %v1308 = vmul.f32 %v1290, %v1290
        %v1309 = vmul.f32 %v1291, %v1291
        %v1310 = vmul.f32 %v1292, %v1292
        %v1311 = vadd.f32 %v1307, %v1309
        %v1312 = vrot.slane %v1311, 4
        %v1313 = vadd.f32 %v1311, %v1312
        %v1314 = vrot.slane %v1313, 2
        %v1315 = vadd.f32 %v1313, %v1314
        %v1316 = vrot.slane %v1315, 1
        %v1317 = vadd.f32 %v1315, %v1316
        %v1318 = vadd.f32 %v1308, %v1310
        %v1319 = vrot.slane %v1318, 4
        %v1320 = vadd.f32 %v1318, %v1319
        %v1321 = vrot.slane %v1320, 2
        %v1322 = vadd.f32 %v1320, %v1321
        %v1323 = vrot.slane %v1322, 1
        %v1324 = vadd.f32 %v1322, %v1323
        %v1325 = vsel %vm821, %v1299, %v1317
        %v1326 = vsel %vm821, %v1306, %v1324
        %v1327 = vld [vmem:[%s11] sm:$0xff]
        %v1328 = vld [vmem:[%s11 + $0x8] sm:$0xff]
        %v1329 = vld [vmem:[%s11 + $0x10] sm:$0xff]
        %v1330 = vld [vmem:[%s11 + $0x18] sm:$0xff]
        %v1331 = vld [vmem:[%s11 + $0x20] sm:$0xff]
        %v1332 = vld [vmem:[%s11 + $0x28] sm:$0xff]
        %v1333 = vld [vmem:[%s11 + $0x30] sm:$0xff]
        %v1334 = vld [vmem:[%s11 + $0x38] sm:$0xff]
        %v1335 = vld [vmem:[%s11 + $0x40] sm:$0xff]
        %v1336 = vld [vmem:[%s11 + $0x48] sm:$0xff]
        %v1337 = vld [vmem:[%s11 + $0x50] sm:$0xff]
        %v1338 = vld [vmem:[%s11 + $0x58] sm:$0xff]
        %v1339 = vld [vmem:[%s11 + $0x60] sm:$0xff]
        %v1340 = vld [vmem:[%s11 + $0x68] sm:$0xff]
        %v1341 = vld [vmem:[%s11 + $0x70] sm:$0xff]
        %v1342 = vld [vmem:[%s11 + $0x78] sm:$0xff]
        %v1343 = vld [vmem:[%s11 + $0x80] sm:$0xff]
        %v1344 = vld [vmem:[%s11 + $0x88] sm:$0xff]
        %v1345 = vld [vmem:[%s11 + $0x90] sm:$0xff]
        %v1346 = vld [vmem:[%s11 + $0x98] sm:$0xff]
        %v1347 = vld [vmem:[%s11 + $0xa0] sm:$0xff]
        %v1348 = vld [vmem:[%s11 + $0xa8] sm:$0xff]
        %v1349 = vld [vmem:[%s11 + $0xb0] sm:$0xff]
        %v1350 = vld [vmem:[%s11 + $0xb8] sm:$0xff]
        %v1351 = vld [vmem:[%s11 + $0xc0] sm:$0xff]
        %v1352 = vld [vmem:[%s11 + $0xc8] sm:$0xff]
        %v1353 = vld [vmem:[%s11 + $0xd0] sm:$0xff]
        %v1354 = vld [vmem:[%s11 + $0xd8] sm:$0xff]
        %v1355 = vld [vmem:[%s11 + $0xe0] sm:$0xff]
        %v1356 = vld [vmem:[%s11 + $0xe8] sm:$0xff]
        %v1357 = vld [vmem:[%s11 + $0xf0] sm:$0xff]
        %v1358 = vld [vmem:[%s11 + $0xf8] sm:$0xff]
        %1359 = vmatpush.msra.mxu0 %v1342
        %1360 = vmatpush.msra.mxu0 %v1341
        %1361 = vmatpush.msra.mxu0 %v1340
        %1362 = vmatpush.msra.mxu0 %v1339
        %1363 = vmatpush.msra.mxu0 %v1338
        %1364 = vmatpush.msra.mxu0 %v1337
        %1365 = vmatpush.msra.mxu0 %v1336
        %1366 = vmatpush.msra.mxu0 %v1335
        %1367 = vmatpush.msra.mxu0 %v1334
        %1368 = vmatpush.msra.mxu0 %v1333
        %1369 = vmatpush.msra.mxu0 %v1332
        %1370 = vmatpush.msra.mxu0 %v1331
        %1371 = vmatpush.msra.mxu0 %v1330
        %1372 = vmatpush.msra.mxu0 %v1329
        %1373 = vmatpush.msra.mxu0 %v1328
        %1374 = vmatpush.msra.mxu0 %v1327
        %1375 = vmatmul.f32.gmra.mxu0 %v1325
        %v1376 = vpop.f32.mrf.mxu0
        %v1377 = vadd.f32 0.0, %v1376
        %1378 = vdwg.mxu0
        %1379 = vmatpush.msra.mxu0 %v1358
        %1380 = vmatpush.msra.mxu0 %v1357
        %1381 = vmatpush.msra.mxu0 %v1356
        %1382 = vmatpush.msra.mxu0 %v1355
        %1383 = vmatpush.msra.mxu0 %v1354
        %1384 = vmatpush.msra.mxu0 %v1353
        %1385 = vmatpush.msra.mxu0 %v1352
        %1386 = vmatpush.msra.mxu0 %v1351
        %1387 = vmatpush.msra.mxu0 %v1350
        %1388 = vmatpush.msra.mxu0 %v1349
        %1389 = vmatpush.msra.mxu0 %v1348
        %1390 = vmatpush.msra.mxu0 %v1347
        %1391 = vmatpush.msra.mxu0 %v1346
        %1392 = vmatpush.msra.mxu0 %v1345
        %1393 = vmatpush.msra.mxu0 %v1344
        %1394 = vmatpush.msra.mxu0 %v1343
        %1395 = vmatmul.f32.gmra.mxu0 %v1326
        %v1396 = vpop.f32.mrf.mxu0
        %v1397 = vadd.f32 %v1377, %v1396
        %1398 = vdwg.mxu0
        %v1399 = vmul.f32 %v1397, 0.0009765625
        %v1400 = vmul.f32 %v1399, %v1399
        %v1402 = vrot.slane %v1400, 7
        %v1404 = vsub.f32 %v1399, %v1402
        %v1405 = vadd.f32 %v1404, 1e-05
        %v1406 = vrsqrt.pop %v1405
        %v1407 = vmul.f32 %v1406, %v1405
        %v1408 = vmul.f32 %v1407, %v1406
        %v1409 = vmul.f32 0.5, %v1408
        %v1410 = vsub.f32 1.5, %v1409
        %v1411 = vmul.f32 %v1406, %v1410
        %vm1412 = vweird.f32 %v1405
        %vm1413 = vweird.f32 %v1406
        %vm1414 = vmor %vm1412, %vm1413
        %v1415 = vsel %vm1414, %v1406, %v1411
        %v1416 = vsub.f32 0.0, %v1399
        %v1418 = vrot.slane %v1415, 1
        %v1420 = vmul.f32 %v1416, %v1418
        %v1422 = vrot.slane %v1420, 7
        %v1424 = vsel %vm821, %v1418, %v1422
        %v1425 = vld [vmem:[#allocation7] sm:$0xff]
        %1427 = vst [vmem:[#allocation1] ss:$2 sm:$0xff] %v1425
        %v1428 = vld.sshfl [vmem:[#allocation1] sm:$0xff pattern:$0x75316420]
        %v1429 = vld.sshfl [vmem:[#allocation1 + $0x8] sm:$0xff pattern:$0x75316420]
        %v1431 = vsel %vm806, %v1424, 0
        %vm1433 = vcmask 1043456
        %v1434 = vsel %vm1433, %v1428, 0
        %v1436 = vsel %vm1433, %v1429, 0
        %1438 = vmatpush.msra.mxu0 0.0
        %1439 = vmatpush.msra.mxu0 0.0
        %1440 = vmatpush.msra.mxu0 0.0
        %1441 = vmatpush.msra.mxu0 0.0
        %1442 = vmatpush.msra.mxu0 0.0
        %1443 = vmatpush.msra.mxu0 0.0
        %1444 = vmatpush.msra.mxu0 0.0
        %1445 = vmatpush.msra.mxu0 0.0
        %1446 = vmatpush.msra.mxu0 0.0
        %1447 = vmatpush.msra.mxu0 0.0
        %1448 = vmatpush.msra.mxu0 0.0
        %1449 = vmatpush.msra.mxu0 0.0
        %1450 = vmatpush.msra.mxu0 0.0
        %1451 = vmatpush.msra.mxu0 0.0
        %1452 = vmatpush.msra.mxu0 0.0
        %1453 = vmatpush.msra.mxu0 %v1434
        %1454 = vmatmul.f32.gmra.mxu0 %v1431
        %v1455 = vpop.f32.mrf.mxu0
        %v1456 = vadd.f32 0.0, %v1455
        %1457 = vdwg.mxu0
        %1458 = vmatpush.msra.mxu0 0.0
        %1459 = vmatpush.msra.mxu0 0.0
        %1460 = vmatpush.msra.mxu0 0.0
        %1461 = vmatpush.msra.mxu0 0.0
        %1462 = vmatpush.msra.mxu0 0.0
        %1463 = vmatpush.msra.mxu0 0.0
        %1464 = vmatpush.msra.mxu0 0.0
        %1465 = vmatpush.msra.mxu0 0.0
        %1466 = vmatpush.msra.mxu0 0.0
        %1467 = vmatpush.msra.mxu0 0.0
        %1468 = vmatpush.msra.mxu0 0.0
        %1469 = vmatpush.msra.mxu0 0.0
        %1470 = vmatpush.msra.mxu0 0.0
        %1471 = vmatpush.msra.mxu0 0.0
        %1472 = vmatpush.msra.mxu0 0.0
        %1473 = vmatpush.msra.mxu0 %v1436
        %1474 = vmatmul.f32.gmra.mxu0 %v1431
        %v1475 = vpop.f32.mrf.mxu0
        %v1476 = vadd.f32 0.0, %v1475
        %1477 = vdwg.mxu0
        %v1478 = vperm.slane %v1456, 0
        %v1479 = vperm.slane %v1476, 0
        %v1480 = vmul.f32 %v1289, %v1478
        %v1481 = vmul.f32 %v1290, %v1479
        %v1482 = vmul.f32 %v1291, %v1478
        %v1483 = vmul.f32 %v1292, %v1479
        %v1484 = vperm.slane %v1456, 1
        %v1485 = vperm.slane %v1476, 1
        %v1486 = vadd.f32 %v1480, %v1484
        %v1487 = vadd.f32 %v1481, %v1485
        %v1488 = vadd.f32 %v1482, %v1484
        %v1489 = vadd.f32 %v1483, %v1485
        %v1490 = vmax.f32 %v1486, 0.0
        %v1491 = vmax.f32 %v1487, 0.0
        %v1492 = vmax.f32 %v1488, 0.0
        %v1493 = vmax.f32 %v1489, 0.0
        %1494 = vmatpush.msra.mxu0 %v760
        %1495 = vmatpush.msra.mxu0 %v758
        %1496 = vmatpush.msra.mxu0 %v756
        %1497 = vmatpush.msra.mxu0 %v754
        %1498 = vmatpush.msra.mxu0 %v752
        %1499 = vmatpush.msra.mxu0 %v750
        %1500 = vmatpush.msra.mxu0 %v748
        %1501 = vmatpush.msra.mxu0 %v746
        %1502 = vmatpush.msra.mxu0 %v744
        %1503 = vmatpush.msra.mxu0 %v742
        %1504 = vmatpush.msra.mxu0 %v740
        %1505 = vmatpush.msra.mxu0 %v738
        %1506 = vmatpush.msra.mxu0 %v736
        %1507 = vmatpush.msra.mxu0 %v734
        %1508 = vmatpush.msra.mxu0 %v732
        %1509 = vmatpush.msra.mxu0 %v730
        %1510 = vmatmul.f32.gmra.mxu0 %v1490
        %v1511 = vpop.f32.mrf.mxu0
        %v1512 = vadd.f32 0.0, %v1511
        %1513 = vmatmul.f32.gmra.mxu0 %v1492
        %v1514 = vpop.f32.mrf.mxu0
        %v1515 = vadd.f32 0.0, %v1514
        %1516 = vdwg.mxu0
        %1517 = vmatpush.msra.mxu0 %v792
        %1518 = vmatpush.msra.mxu0 %v790
        %1519 = vmatpush.msra.mxu0 %v788
        %1520 = vmatpush.msra.mxu0 %v786
        %1521 = vmatpush.msra.mxu0 %v784
        %1522 = vmatpush.msra.mxu0 %v782
        %1523 = vmatpush.msra.mxu0 %v780
        %1524 = vmatpush.msra.mxu0 %v778
        %1525 = vmatpush.msra.mxu0 %v776
        %1526 = vmatpush.msra.mxu0 %v774
        %1527 = vmatpush.msra.mxu0 %v772
        %1528 = vmatpush.msra.mxu0 %v770
        %1529 = vmatpush.msra.mxu0 %v768
        %1530 = vmatpush.msra.mxu0 %v766
        %1531 = vmatpush.msra.mxu0 %v764
        %1532 = vmatpush.msra.mxu0 %v762
        %1533 = vmatmul.f32.gmra.mxu0 %v1491
        %v1534 = vpop.f32.mrf.mxu0
        %v1535 = vadd.f32 %v1512, %v1534
        %1536 = vmatmul.f32.gmra.mxu0 %v1493
        %v1537 = vpop.f32.mrf.mxu0
        %v1538 = vadd.f32 %v1515, %v1537
        %1539 = vdwg.mxu0
        %1540 = vmatpush.msra.mxu0 %v761
        %1541 = vmatpush.msra.mxu0 %v759
        %1542 = vmatpush.msra.mxu0 %v757
        %1543 = vmatpush.msra.mxu0 %v755
        %1544 = vmatpush.msra.mxu0 %v753
        %1545 = vmatpush.msra.mxu0 %v751
        %1546 = vmatpush.msra.mxu0 %v749
        %1547 = vmatpush.msra.mxu0 %v747
        %1548 = vmatpush.msra.mxu0 %v745
        %1549 = vmatpush.msra.mxu0 %v743
        %1550 = vmatpush.msra.mxu0 %v741
        %1551 = vmatpush.msra.mxu0 %v739
        %1552 = vmatpush.msra.mxu0 %v737
        %1553 = vmatpush.msra.mxu0 %v735
        %1554 = vmatpush.msra.mxu0 %v733
        %1555 = vmatpush.msra.mxu0 %v731
        %1556 = vmatmul.f32.gmra.mxu0 %v1490
        %v1557 = vpop.f32.mrf.mxu0
        %v1558 = vadd.f32 0.0, %v1557
        %1559 = vmatmul.f32.gmra.mxu0 %v1492
        %v1560 = vpop.f32.mrf.mxu0
        %v1561 = vadd.f32 0.0, %v1560
        %1562 = vdwg.mxu0
        %1563 = vmatpush.msra.mxu0 %v793
        %1564 = vmatpush.msra.mxu0 %v791
        %1565 = vmatpush.msra.mxu0 %v789
        %1566 = vmatpush.msra.mxu0 %v787
        %1567 = vmatpush.msra.mxu0 %v785
        %1568 = vmatpush.msra.mxu0 %v783
        %1569 = vmatpush.msra.mxu0 %v781
        %1570 = vmatpush.msra.mxu0 %v779
        %1571 = vmatpush.msra.mxu0 %v777
        %1572 = vmatpush.msra.mxu0 %v775
        %1573 = vmatpush.msra.mxu0 %v773
        %1574 = vmatpush.msra.mxu0 %v771
        %1575 = vmatpush.msra.mxu0 %v769
        %1576 = vmatpush.msra.mxu0 %v767
        %1577 = vmatpush.msra.mxu0 %v765
        %1578 = vmatpush.msra.mxu0 %v763
        %1579 = vmatmul.f32.gmra.mxu0 %v1491
        %v1580 = vpop.f32.mrf.mxu0
        %v1581 = vadd.f32 %v1558, %v1580
        %1582 = vmatmul.f32.gmra.mxu0 %v1493
        %v1583 = vpop.f32.mrf.mxu0
        %v1584 = vadd.f32 %v1561, %v1583
        %1585 = vdwg.mxu0
        %v1586 = vadd.f32 %v1535, %v1538
        %v1587 = vrot.slane %v1586, 4
        %v1588 = vadd.f32 %v1586, %v1587
        %v1589 = vrot.slane %v1588, 2
        %v1590 = vadd.f32 %v1588, %v1589
        %v1591 = vrot.slane %v1590, 1
        %v1592 = vadd.f32 %v1590, %v1591
        %v1593 = vadd.f32 %v1581, %v1584
        %v1594 = vrot.slane %v1593, 4
        %v1595 = vadd.f32 %v1593, %v1594
        %v1596 = vrot.slane %v1595, 2
        %v1597 = vadd.f32 %v1595, %v1596
        %v1598 = vrot.slane %v1597, 1
        %v1599 = vadd.f32 %v1597, %v1598
        %v1600 = vmul.f32 %v1535, %v1535
        %v1601 = vmul.f32 %v1581, %v1581
        %v1602 = vmul.f32 %v1538, %v1538
        %v1603 = vmul.f32 %v1584, %v1584
        %v1604 = vadd.f32 %v1600, %v1602
        %v1605 = vrot.slane %v1604, 4
        %v1606 = vadd.f32 %v1604, %v1605
        %v1607 = vrot.slane %v1606, 2
        %v1608 = vadd.f32 %v1606, %v1607
        %v1609 = vrot.slane %v1608, 1
        %v1610 = vadd.f32 %v1608, %v1609
        %v1611 = vadd.f32 %v1601, %v1603
        %v1612 = vrot.slane %v1611, 4
        %v1613 = vadd.f32 %v1611, %v1612
        %v1614 = vrot.slane %v1613, 2
        %v1615 = vadd.f32 %v1613, %v1614
        %v1616 = vrot.slane %v1615, 1
        %v1617 = vadd.f32 %v1615, %v1616
        %v1618 = vsel %vm821, %v1592, %v1610
        %v1619 = vsel %vm821, %v1599, %v1617
        %1620 = vmatpush.msra.mxu0 %v1342
        %1621 = vmatpush.msra.mxu0 %v1341
        %1622 = vmatpush.msra.mxu0 %v1340
        %1623 = vmatpush.msra.mxu0 %v1339
        %1624 = vmatpush.msra.mxu0 %v1338
        %1625 = vmatpush.msra.mxu0 %v1337
        %1626 = vmatpush.msra.mxu0 %v1336
        %1627 = vmatpush.msra.mxu0 %v1335
        %1628 = vmatpush.msra.mxu0 %v1334
        %1629 = vmatpush.msra.mxu0 %v1333
        %1630 = vmatpush.msra.mxu0 %v1332
        %1631 = vmatpush.msra.mxu0 %v1331
        %1632 = vmatpush.msra.mxu0 %v1330
        %1633 = vmatpush.msra.mxu0 %v1329
        %1634 = vmatpush.msra.mxu0 %v1328
        %1635 = vmatpush.msra.mxu0 %v1327
        %1636 = vmatmul.f32.gmra.mxu0 %v1618
        %v1637 = vpop.f32.mrf.mxu0
        %v1638 = vadd.f32 0.0, %v1637
        %1639 = vdwg.mxu0
        %1640 = vmatpush.msra.mxu0 %v1358
        %1641 = vmatpush.msra.mxu0 %v1357
        %1642 = vmatpush.msra.mxu0 %v1356
        %1643 = vmatpush.msra.mxu0 %v1355
        %1644 = vmatpush.msra.mxu0 %v1354
        %1645 = vmatpush.msra.mxu0 %v1353
        %1646 = vmatpush.msra.mxu0 %v1352
        %1647 = vmatpush.msra.mxu0 %v1351
        %1648 = vmatpush.msra.mxu0 %v1350
        %1649 = vmatpush.msra.mxu0 %v1349
        %1650 = vmatpush.msra.mxu0 %v1348
        %1651 = vmatpush.msra.mxu0 %v1347
        %1652 = vmatpush.msra.mxu0 %v1346
        %1653 = vmatpush.msra.mxu0 %v1345
        %1654 = vmatpush.msra.mxu0 %v1344
        %1655 = vmatpush.msra.mxu0 %v1343
        %1656 = vmatmul.f32.gmra.mxu0 %v1619
        %v1657 = vpop.f32.mrf.mxu0
        %v1658 = vadd.f32 %v1638, %v1657
        %1659 = vdwg.mxu0
        %v1660 = vmul.f32 %v1658, 0.0009765625
        %v1661 = vmul.f32 %v1660, %v1660
        %v1663 = vrot.slane %v1661, 7
        %v1665 = vsub.f32 %v1660, %v1663
        %v1666 = vadd.f32 %v1665, 1e-05
        %v1667 = vrsqrt.pop %v1666
        %v1668 = vmul.f32 %v1667, %v1666
        %v1669 = vmul.f32 %v1668, %v1667
        %v1670 = vmul.f32 0.5, %v1669
        %v1671 = vsub.f32 1.5, %v1670
        %v1672 = vmul.f32 %v1667, %v1671
        %vm1673 = vweird.f32 %v1666
        %vm1674 = vweird.f32 %v1667
        %vm1675 = vmor %vm1673, %vm1674
        %v1676 = vsel %vm1675, %v1667, %v1672
        %v1677 = vsub.f32 0.0, %v1660
        %v1679 = vrot.slane %v1676, 1
        %v1681 = vmul.f32 %v1677, %v1679
        %v1683 = vrot.slane %v1681, 7
        %v1685 = vsel %vm821, %v1679, %v1683
        %1686 = vst [vmem:[#allocation1] ss:$2 sm:$0xff] %v1425
        %v1687 = vld.sshfl [vmem:[#allocation1] sm:$0xff pattern:$0x75316420]
        %v1688 = vld.sshfl [vmem:[#allocation1 + $0x8] sm:$0xff pattern:$0x75316420]
        %v1690 = vsel %vm806, %v1685, 0
        %v1692 = vsel %vm1433, %v1687, 0
        %v1694 = vsel %vm1433, %v1688, 0
        %1696 = vmatpush.msra.mxu0 0.0
        %1697 = vmatpush.msra.mxu0 0.0
        %1698 = vmatpush.msra.mxu0 0.0
        %1699 = vmatpush.msra.mxu0 0.0
        %1700 = vmatpush.msra.mxu0 0.0
        %1701 = vmatpush.msra.mxu0 0.0
        %1702 = vmatpush.msra.mxu0 0.0
        %1703 = vmatpush.msra.mxu0 0.0
        %1704 = vmatpush.msra.mxu0 0.0
        %1705 = vmatpush.msra.mxu0 0.0
        %1706 = vmatpush.msra.mxu0 0.0
        %1707 = vmatpush.msra.mxu0 0.0
        %1708 = vmatpush.msra.mxu0 0.0
        %1709 = vmatpush.msra.mxu0 0.0
        %1710 = vmatpush.msra.mxu0 0.0
        %1711 = vmatpush.msra.mxu0 %v1692
        %1712 = vmatmul.f32.gmra.mxu0 %v1690
        %v1713 = vpop.f32.mrf.mxu0
        %v1714 = vadd.f32 0.0, %v1713
        %1715 = vdwg.mxu0
        %1716 = vmatpush.msra.mxu0 0.0
        %1717 = vmatpush.msra.mxu0 0.0
        %1718 = vmatpush.msra.mxu0 0.0
        %1719 = vmatpush.msra.mxu0 0.0
        %1720 = vmatpush.msra.mxu0 0.0
        %1721 = vmatpush.msra.mxu0 0.0
        %1722 = vmatpush.msra.mxu0 0.0
        %1723 = vmatpush.msra.mxu0 0.0
        %1724 = vmatpush.msra.mxu0 0.0
        %1725 = vmatpush.msra.mxu0 0.0
        %1726 = vmatpush.msra.mxu0 0.0
        %1727 = vmatpush.msra.mxu0 0.0
        %1728 = vmatpush.msra.mxu0 0.0
        %1729 = vmatpush.msra.mxu0 0.0
        %1730 = vmatpush.msra.mxu0 0.0
        %1731 = vmatpush.msra.mxu0 %v1694
        %1732 = vmatmul.f32.gmra.mxu0 %v1690
        %v1733 = vpop.f32.mrf.mxu0
        %v1734 = vadd.f32 0.0, %v1733
        %1735 = vdwg.mxu0
        %v1736 = vperm.slane %v1714, 0
        %v1737 = vperm.slane %v1734, 0
        %v1738 = vmul.f32 %v1535, %v1736
        %v1739 = vmul.f32 %v1581, %v1737
        %v1740 = vmul.f32 %v1538, %v1736
        %v1741 = vmul.f32 %v1584, %v1737
        %v1742 = vperm.slane %v1714, 1
        %v1743 = vperm.slane %v1734, 1
        %v1744 = vadd.f32 %v1738, %v1742
        %v1745 = vadd.f32 %v1739, %v1743
        %v1746 = vadd.f32 %v1740, %v1742
        %v1747 = vadd.f32 %v1741, %v1743
        %v1748 = vmax.f32 %v1744, 0.0
        %v1749 = vmax.f32 %v1745, 0.0
        %v1750 = vmax.f32 %v1746, 0.0
        %v1751 = vmax.f32 %v1747, 0.0
        %v1752 = vld [vmem:[#allocation4] sm:$0xff]
        %v1753 = vld [vmem:[#allocation4 + $0x8] sm:$0xff]
        %v1754 = vld [vmem:[#allocation4 + $0x10] sm:$0x1]
        %v1755 = vld [vmem:[#allocation4 + $0x18] sm:$0x1]
        %v1756 = vld [vmem:[%s8] sm:$0xff]
        %v1757 = vld [vmem:[%s8 + $0x8] sm:$0xff]
        %v1758 = vld [vmem:[%s8 + $0x10] sm:$0xff]
        %v1759 = vld [vmem:[%s8 + $0x18] sm:$0xff]
        %v1760 = vld [vmem:[%s8 + $0x20] sm:$0xff]
        %v1761 = vld [vmem:[%s8 + $0x28] sm:$0xff]
        %v1762 = vld [vmem:[%s8 + $0x30] sm:$0xff]
        %v1763 = vld [vmem:[%s8 + $0x38] sm:$0xff]
        %v1764 = vld [vmem:[%s8 + $0x40] sm:$0xff]
        %v1765 = vld [vmem:[%s8 + $0x48] sm:$0xff]
        %v1766 = vld [vmem:[%s8 + $0x50] sm:$0xff]
        %v1767 = vld [vmem:[%s8 + $0x58] sm:$0xff]
        %v1768 = vld [vmem:[%s8 + $0x60] sm:$0xff]
        %v1769 = vld [vmem:[%s8 + $0x68] sm:$0xff]
        %v1770 = vld [vmem:[%s8 + $0x70] sm:$0xff]
        %v1771 = vld [vmem:[%s8 + $0x78] sm:$0xff]
        %v1772 = vld [vmem:[%s8 + $0x80] sm:$0xff]
        %v1773 = vld [vmem:[%s8 + $0x88] sm:$0xff]
        %v1774 = vld [vmem:[%s8 + $0x90] sm:$0xff]
        %v1775 = vld [vmem:[%s8 + $0x98] sm:$0xff]
        %v1776 = vld [vmem:[%s8 + $0xa0] sm:$0xff]
        %v1777 = vld [vmem:[%s8 + $0xa8] sm:$0xff]
        %v1778 = vld [vmem:[%s8 + $0xb0] sm:$0xff]
        %v1779 = vld [vmem:[%s8 + $0xb8] sm:$0xff]
        %v1780 = vld [vmem:[%s8 + $0xc0] sm:$0xff]
        %v1781 = vld [vmem:[%s8 + $0xc8] sm:$0xff]
        %v1782 = vld [vmem:[%s8 + $0xd0] sm:$0xff]
        %v1783 = vld [vmem:[%s8 + $0xd8] sm:$0xff]
        %v1784 = vld [vmem:[%s8 + $0xe0] sm:$0xff]
        %v1785 = vld [vmem:[%s8 + $0xe8] sm:$0xff]
        %v1786 = vld [vmem:[%s8 + $0xf0] sm:$0xff]
        %v1787 = vld [vmem:[%s8 + $0xf8] sm:$0xff]
        %v1788 = vld [vmem:[%s8 + $0x100] sm:$0xff]
        %v1789 = vld [vmem:[%s8 + $0x108] sm:$0xff]
        %v1790 = vld [vmem:[%s8 + $0x110] sm:$0xff]
        %v1791 = vld [vmem:[%s8 + $0x118] sm:$0xff]
        %v1792 = vld [vmem:[%s8 + $0x120] sm:$0xff]
        %v1793 = vld [vmem:[%s8 + $0x128] sm:$0xff]
        %v1794 = vld [vmem:[%s8 + $0x130] sm:$0xff]
        %v1795 = vld [vmem:[%s8 + $0x138] sm:$0xff]
        %v1796 = vld [vmem:[%s8 + $0x140] sm:$0xff]
        %v1797 = vld [vmem:[%s8 + $0x148] sm:$0xff]
        %v1798 = vld [vmem:[%s8 + $0x150] sm:$0xff]
        %v1799 = vld [vmem:[%s8 + $0x158] sm:$0xff]
        %v1800 = vld [vmem:[%s8 + $0x160] sm:$0xff]
        %v1801 = vld [vmem:[%s8 + $0x168] sm:$0xff]
        %v1802 = vld [vmem:[%s8 + $0x170] sm:$0xff]
        %v1803 = vld [vmem:[%s8 + $0x178] sm:$0xff]
        %v1804 = vld [vmem:[%s8 + $0x180] sm:$0xff]
        %v1805 = vld [vmem:[%s8 + $0x188] sm:$0xff]
        %v1806 = vld [vmem:[%s8 + $0x190] sm:$0xff]
        %v1807 = vld [vmem:[%s8 + $0x198] sm:$0xff]
        %v1808 = vld [vmem:[%s8 + $0x1a0] sm:$0xff]
        %v1809 = vld [vmem:[%s8 + $0x1a8] sm:$0xff]
        %v1810 = vld [vmem:[%s8 + $0x1b0] sm:$0xff]
        %v1811 = vld [vmem:[%s8 + $0x1b8] sm:$0xff]
        %v1812 = vld [vmem:[%s8 + $0x1c0] sm:$0xff]
        %v1813 = vld [vmem:[%s8 + $0x1c8] sm:$0xff]
        %v1814 = vld [vmem:[%s8 + $0x1d0] sm:$0xff]
        %v1815 = vld [vmem:[%s8 + $0x1d8] sm:$0xff]
        %v1816 = vld [vmem:[%s8 + $0x1e0] sm:$0xff]
        %v1817 = vld [vmem:[%s8 + $0x1e8] sm:$0xff]
        %v1818 = vld [vmem:[%s8 + $0x1f0] sm:$0xff]
        %v1819 = vld [vmem:[%s8 + $0x1f8] sm:$0xff]
        %1824 = vrot.lane.b32.xlu0 %v1748, 4
        %v1825 = vpop.permute.xlu0 %1824
        %1826 = vrot.lane.b32.xlu0 %v1749, 4
        %v1827 = vpop.permute.xlu0 %1826
        %1828 = vrot.lane.b32.xlu0 %v1750, 4
        %v1829 = vpop.permute.xlu0 %1828
        %1830 = vrot.lane.b32.xlu0 %v1751, 4
        %v1831 = vpop.permute.xlu0 %1830
        %v1832 = vsel %vm806, %v1825, %v1827
        %v1833 = vsel %vm806, %v1829, %v1831
        %v1838 = vsel %vm806, 0.0, %v1825
        %v1839 = vsel %vm806, 0.0, %v1829
        %v1840 = vsel %vm806, %v1827, 0.0
        %v1841 = vsel %vm806, %v1831, 0.0
        %v1846 = vrot.slane %v1838, 7
        %v1847 = vrot.slane %v1832, 7
        %v1848 = vrot.slane %v1840, 7
        %v1849 = vrot.slane %v1839, 7
        %v1850 = vsel %vm821, %v1846, %v1849
        %v1851 = vrot.slane %v1833, 7
        %v1852 = vsel %vm821, %v1847, %v1851
        %v1853 = vrot.slane %v1841, 7
        %v1854 = vsel %vm821, %v1848, %v1853
        %v1864 = vsel %vm821, 0.0, %v1846
        %v1865 = vsel %vm821, 0.0, %v1847
        %v1866 = vsel %vm821, 0.0, %v1848
        %v1867 = vsel %vm821, %v1849, 0.0
        %v1868 = vsel %vm821, %v1851, 0.0
        %v1869 = vsel %vm821, %v1853, 0.0
        %v1870 = vperm.slane %v1752, 0
        %v1871 = vperm.slane %v1753, 0
        %v1872 = vmul.f32 %v1864, %v1870
        %v1873 = vmul.f32 %v1865, %v1871
        %v1874 = vmul.f32 %v1850, %v1870
        %v1875 = vmul.f32 %v1852, %v1871
        %v1876 = vperm.slane %v1752, 1
        %v1877 = vperm.slane %v1753, 1
        %v1878 = vmul.f32 %v1864, %v1876
        %v1879 = vmul.f32 %v1865, %v1877
        %v1880 = vmul.f32 %v1850, %v1876
        %v1881 = vmul.f32 %v1852, %v1877
        %v1882 = vmul.f32 %v1867, %v1876
        %v1883 = vmul.f32 %v1868, %v1877
        %v1890 = vrot.slane %v1878, 1
        %v1891 = vrot.slane %v1880, 1
        %v1892 = vsel %vm866, %v1890, %v1891
        %v1893 = vrot.slane %v1879, 1
        %v1894 = vrot.slane %v1881, 1
        %v1895 = vsel %vm866, %v1893, %v1894
        %v1896 = vrot.slane %v1882, 1
        %v1897 = vsel %vm866, %v1891, %v1896
        %v1898 = vrot.slane %v1883, 1
        %v1899 = vsel %vm866, %v1894, %v1898
        %v1904 = vadd.f32 %v1872, %v1892
        %v1905 = vadd.f32 %v1873, %v1895
        %v1906 = vadd.f32 %v1874, %v1897
        %v1907 = vadd.f32 %v1875, %v1899
        %v1908 = vperm.slane %v1752, 2
        %v1909 = vperm.slane %v1753, 2
        %v1910 = vmul.f32 %v1864, %v1908
        %v1911 = vmul.f32 %v1865, %v1909
        %v1912 = vmul.f32 %v1850, %v1908
        %v1913 = vmul.f32 %v1852, %v1909
        %v1914 = vmul.f32 %v1867, %v1908
        %v1915 = vmul.f32 %v1868, %v1909
        %v1922 = vrot.slane %v1910, 2
        %v1923 = vrot.slane %v1912, 2
        %v1924 = vsel %vm899, %v1922, %v1923
        %v1925 = vrot.slane %v1911, 2
        %v1926 = vrot.slane %v1913, 2
        %v1927 = vsel %vm899, %v1925, %v1926
        %v1928 = vrot.slane %v1914, 2
        %v1929 = vsel %vm899, %v1923, %v1928
        %v1930 = vrot.slane %v1915, 2
        %v1931 = vsel %vm899, %v1926, %v1930
        %v1936 = vadd.f32 %v1904, %v1924
        %v1937 = vadd.f32 %v1905, %v1927
        %v1938 = vadd.f32 %v1906, %v1929
        %v1939 = vadd.f32 %v1907, %v1931
        %v1940 = vperm.slane %v1752, 3
        %v1941 = vperm.slane %v1753, 3
        %1944 = vrot.lane.b32.xlu0 %v1940, 4
        %v1945 = vpop.permute.xlu0 %1944
        %1946 = vrot.lane.b32.xlu0 %v1941, 4
        %v1947 = vpop.permute.xlu0 %1946
        %v1948 = vsel %vm806, %v1945, %v1947
        %v1952 = vmul.f32 %v1864, %v1945
        %v1953 = vmul.f32 %v1865, %v1948
        %v1954 = vmul.f32 %v1866, %v1947
        %v1955 = vmul.f32 %v1850, %v1945
        %v1956 = vmul.f32 %v1852, %v1948
        %v1957 = vmul.f32 %v1854, %v1947
        %1964 = vrot.lane.b32.xlu0 %v1952, 124
        %v1965 = vpop.permute.xlu0 %1964
        %1966 = vrot.lane.b32.xlu0 %v1953, 124
        %v1967 = vpop.permute.xlu0 %1966
        %1968 = vrot.lane.b32.xlu0 %v1954, 124
        %v1969 = vpop.permute.xlu0 %1968
        %1970 = vrot.lane.b32.xlu0 %v1955, 124
        %v1971 = vpop.permute.xlu0 %1970
        %1972 = vrot.lane.b32.xlu0 %v1956, 124
        %v1973 = vpop.permute.xlu0 %1972
        %1974 = vrot.lane.b32.xlu0 %v1957, 124
        %v1975 = vpop.permute.xlu0 %1974
        %v1976 = vsel %vm954, %v1965, %v1967
        %v1977 = vsel %vm954, %v1967, %v1969
        %v1978 = vsel %vm954, %v1971, %v1973
        %v1979 = vsel %vm954, %v1973, %v1975
        %v1984 = vadd.f32 %v1936, %v1976
        %v1985 = vadd.f32 %v1937, %v1977
        %v1986 = vadd.f32 %v1938, %v1978
        %v1987 = vadd.f32 %v1939, %v1979
        %v1988 = vperm.slane %v1752, 4
        %v1989 = vperm.slane %v1753, 4
        %1992 = vrot.lane.b32.xlu0 %v1988, 4
        %v1993 = vpop.permute.xlu0 %1992
        %1994 = vrot.lane.b32.xlu0 %v1989, 4
        %v1995 = vpop.permute.xlu0 %1994
        %v1996 = vsel %vm806, %v1993, %v1995
        %v2000 = vmul.f32 %v1864, %v1993
        %v2001 = vmul.f32 %v1865, %v1996
        %v2002 = vmul.f32 %v1866, %v1995
        %v2003 = vmul.f32 %v1850, %v1993
        %v2004 = vmul.f32 %v1852, %v1996
        %v2005 = vmul.f32 %v1854, %v1995
        %v2006 = vmul.f32 %v1867, %v1993
        %v2007 = vmul.f32 %v1868, %v1996
        %v2008 = vmul.f32 %v1869, %v1995
        %v2018 = vrot.slane %v2000, 1
        %v2019 = vrot.slane %v2003, 1
        %v2020 = vsel %vm866, %v2018, %v2019
        %v2021 = vrot.slane %v2001, 1
        %v2022 = vrot.slane %v2004, 1
        %v2023 = vsel %vm866, %v2021, %v2022
        %v2024 = vrot.slane %v2002, 1
        %v2025 = vrot.slane %v2005, 1
        %v2026 = vsel %vm866, %v2024, %v2025
        %v2027 = vrot.slane %v2006, 1
        %v2028 = vsel %vm866, %v2019, %v2027
        %v2029 = vrot.slane %v2007, 1
        %v2030 = vsel %vm866, %v2022, %v2029
        %v2031 = vrot.slane %v2008, 1
        %v2032 = vsel %vm866, %v2025, %v2031
        %2033 = vrot.lane.b32.xlu0 %v2020, 124
        %v2034 = vpop.permute.xlu0 %2033
        %2035 = vrot.lane.b32.xlu0 %v2023, 124
        %v2036 = vpop.permute.xlu0 %2035
        %2037 = vrot.lane.b32.xlu0 %v2026, 124
        %v2038 = vpop.permute.xlu0 %2037
        %2039 = vrot.lane.b32.xlu0 %v2028, 124
        %v2040 = vpop.permute.xlu0 %2039
        %2041 = vrot.lane.b32.xlu0 %v2030, 124
        %v2042 = vpop.permute.xlu0 %2041
        %2043 = vrot.lane.b32.xlu0 %v2032, 124
        %v2044 = vpop.permute.xlu0 %2043
        %v2045 = vsel %vm954, %v2034, %v2036
        %v2046 = vsel %vm954, %v2036, %v2038
        %v2047 = vsel %vm954, %v2040, %v2042
        %v2048 = vsel %vm954, %v2042, %v2044
        %v2053 = vadd.f32 %v1984, %v2045
        %v2054 = vadd.f32 %v1985, %v2046
        %v2055 = vadd.f32 %v1986, %v2047
        %v2056 = vadd.f32 %v1987, %v2048
        %v2057 = vperm.slane %v1752, 5
        %v2058 = vperm.slane %v1753, 5
        %2061 = vrot.lane.b32.xlu0 %v2057, 4
        %v2062 = vpop.permute.xlu0 %2061
        %2063 = vrot.lane.b32.xlu0 %v2058, 4
        %v2064 = vpop.permute.xlu0 %2063
        %v2065 = vsel %vm806, %v2062, %v2064
        %v2069 = vmul.f32 %v1864, %v2062
        %v2070 = vmul.f32 %v1865, %v2065
        %v2071 = vmul.f32 %v1866, %v2064
        %v2072 = vmul.f32 %v1850, %v2062
        %v2073 = vmul.f32 %v1852, %v2065
        %v2074 = vmul.f32 %v1854, %v2064
        %v2075 = vmul.f32 %v1867, %v2062
        %v2076 = vmul.f32 %v1868, %v2065
        %v2077 = vmul.f32 %v1869, %v2064
        %v2087 = vrot.slane %v2069, 2
        %v2088 = vrot.slane %v2072, 2
        %v2089 = vsel %vm899, %v2087, %v2088
        %v2090 = vrot.slane %v2070, 2
        %v2091 = vrot.slane %v2073, 2
        %v2092 = vsel %vm899, %v2090, %v2091
        %v2093 = vrot.slane %v2071, 2
        %v2094 = vrot.slane %v2074, 2
        %v2095 = vsel %vm899, %v2093, %v2094
        %v2096 = vrot.slane %v2075, 2
        %v2097 = vsel %vm899, %v2088, %v2096
        %v2098 = vrot.slane %v2076, 2
        %v2099 = vsel %vm899, %v2091, %v2098
        %v2100 = vrot.slane %v2077, 2
        %v2101 = vsel %vm899, %v2094, %v2100
        %2102 = vrot.lane.b32.xlu0 %v2089, 124
        %v2103 = vpop.permute.xlu0 %2102
        %2104 = vrot.lane.b32.xlu0 %v2092, 124
        %v2105 = vpop.permute.xlu0 %2104
        %2106 = vrot.lane.b32.xlu0 %v2095, 124
        %v2107 = vpop.permute.xlu0 %2106
        %2108 = vrot.lane.b32.xlu0 %v2097, 124
        %v2109 = vpop.permute.xlu0 %2108
        %2110 = vrot.lane.b32.xlu0 %v2099, 124
        %v2111 = vpop.permute.xlu0 %2110
        %2112 = vrot.lane.b32.xlu0 %v2101, 124
        %v2113 = vpop.permute.xlu0 %2112
        %v2114 = vsel %vm954, %v2103, %v2105
        %v2115 = vsel %vm954, %v2105, %v2107
        %v2116 = vsel %vm954, %v2109, %v2111
        %v2117 = vsel %vm954, %v2111, %v2113
        %v2122 = vadd.f32 %v2053, %v2114
        %v2123 = vadd.f32 %v2054, %v2115
        %v2124 = vadd.f32 %v2055, %v2116
        %v2125 = vadd.f32 %v2056, %v2117
        %v2126 = vperm.slane %v1752, 6
        %v2127 = vperm.slane %v1753, 6
        %2130 = vrot.lane.b32.xlu0 %v2126, 8
        %v2131 = vpop.permute.xlu0 %2130
        %2132 = vrot.lane.b32.xlu0 %v2127, 8
        %v2133 = vpop.permute.xlu0 %2132
        %v2134 = vsel %vm1113, %v2131, %v2133
        %v2138 = vmul.f32 %v1864, %v2131
        %v2139 = vmul.f32 %v1865, %v2134
        %v2140 = vmul.f32 %v1866, %v2133
        %v2141 = vmul.f32 %v1850, %v2131
        %v2142 = vmul.f32 %v1852, %v2134
        %v2143 = vmul.f32 %v1854, %v2133
        %2150 = vrot.lane.b32.xlu0 %v2138, 120
        %v2151 = vpop.permute.xlu0 %2150
        %2152 = vrot.lane.b32.xlu0 %v2139, 120
        %v2153 = vpop.permute.xlu0 %2152
        %2154 = vrot.lane.b32.xlu0 %v2140, 120
        %v2155 = vpop.permute.xlu0 %2154
        %2156 = vrot.lane.b32.xlu0 %v2141, 120
        %v2157 = vpop.permute.xlu0 %2156
        %2158 = vrot.lane.b32.xlu0 %v2142, 120
        %v2159 = vpop.permute.xlu0 %2158
        %2160 = vrot.lane.b32.xlu0 %v2143, 120
        %v2161 = vpop.permute.xlu0 %2160
        %v2162 = vsel %vm1142, %v2151, %v2153
        %v2163 = vsel %vm1142, %v2153, %v2155
        %v2164 = vsel %vm1142, %v2157, %v2159
        %v2165 = vsel %vm1142, %v2159, %v2161
        %v2170 = vadd.f32 %v2122, %v2162
        %v2171 = vadd.f32 %v2123, %v2163
        %v2172 = vadd.f32 %v2124, %v2164
        %v2173 = vadd.f32 %v2125, %v2165
        %v2174 = vperm.slane %v1752, 7
        %v2175 = vperm.slane %v1753, 7
        %2178 = vrot.lane.b32.xlu0 %v2174, 8
        %v2179 = vpop.permute.xlu0 %2178
        %2180 = vrot.lane.b32.xlu0 %v2175, 8
        %v2181 = vpop.permute.xlu0 %2180
        %v2182 = vsel %vm1113, %v2179, %v2181
        %v2186 = vmul.f32 %v1864, %v2179
        %v2187 = vmul.f32 %v1865, %v2182
        %v2188 = vmul.f32 %v1866, %v2181
        %v2189 = vmul.f32 %v1850, %v2179
        %v2190 = vmul.f32 %v1852, %v2182
        %v2191 = vmul.f32 %v1854, %v2181
        %v2192 = vmul.f32 %v1867, %v2179
        %v2193 = vmul.f32 %v1868, %v2182
        %v2194 = vmul.f32 %v1869, %v2181
        %v2204 = vrot.slane %v2186, 1
        %v2205 = vrot.slane %v2189, 1
        %v2206 = vsel %vm866, %v2204, %v2205
        %v2207 = vrot.slane %v2187, 1
        %v2208 = vrot.slane %v2190, 1
        %v2209 = vsel %vm866, %v2207, %v2208
        %v2210 = vrot.slane %v2188, 1
        %v2211 = vrot.slane %v2191, 1
        %v2212 = vsel %vm866, %v2210, %v2211
        %v2213 = vrot.slane %v2192, 1
        %v2214 = vsel %vm866, %v2205, %v2213
        %v2215 = vrot.slane %v2193, 1
        %v2216 = vsel %vm866, %v2208, %v2215
        %v2217 = vrot.slane %v2194, 1
        %v2218 = vsel %vm866, %v2211, %v2217
        %2219 = vrot.lane.b32.xlu0 %v2206, 120
        %v2220 = vpop.permute.xlu0 %2219
        %2221 = vrot.lane.b32.xlu0 %v2209, 120
        %v2222 = vpop.permute.xlu0 %2221
        %2223 = vrot.lane.b32.xlu0 %v2212, 120
        %v2224 = vpop.permute.xlu0 %2223
        %2225 = vrot.lane.b32.xlu0 %v2214, 120
        %v2226 = vpop.permute.xlu0 %2225
        %2227 = vrot.lane.b32.xlu0 %v2216, 120
        %v2228 = vpop.permute.xlu0 %2227
        %2229 = vrot.lane.b32.xlu0 %v2218, 120
        %v2230 = vpop.permute.xlu0 %2229
        %v2231 = vsel %vm1142, %v2220, %v2222
        %v2232 = vsel %vm1142, %v2222, %v2224
        %v2233 = vsel %vm1142, %v2226, %v2228
        %v2234 = vsel %vm1142, %v2228, %v2230
        %v2239 = vadd.f32 %v2170, %v2231
        %v2240 = vadd.f32 %v2171, %v2232
        %v2241 = vadd.f32 %v2172, %v2233
        %v2242 = vadd.f32 %v2173, %v2234
        %v2243 = vperm.slane %v1754, 0
        %v2244 = vperm.slane %v1755, 0
        %2247 = vrot.lane.b32.xlu0 %v2243, 8
        %v2248 = vpop.permute.xlu0 %2247
        %2249 = vrot.lane.b32.xlu0 %v2244, 8
        %v2250 = vpop.permute.xlu0 %2249
        %v2251 = vsel %vm1113, %v2248, %v2250
        %v2255 = vmul.f32 %v1864, %v2248
        %v2256 = vmul.f32 %v1865, %v2251
        %v2257 = vmul.f32 %v1866, %v2250
        %v2258 = vmul.f32 %v1850, %v2248
        %v2259 = vmul.f32 %v1852, %v2251
        %v2260 = vmul.f32 %v1854, %v2250
        %v2261 = vmul.f32 %v1867, %v2248
        %v2262 = vmul.f32 %v1868, %v2251
        %v2263 = vmul.f32 %v1869, %v2250
        %v2273 = vrot.slane %v2255, 2
        %v2274 = vrot.slane %v2258, 2
        %v2275 = vsel %vm899, %v2273, %v2274
        %v2276 = vrot.slane %v2256, 2
        %v2277 = vrot.slane %v2259, 2
        %v2278 = vsel %vm899, %v2276, %v2277
        %v2279 = vrot.slane %v2257, 2
        %v2280 = vrot.slane %v2260, 2
        %v2281 = vsel %vm899, %v2279, %v2280
        %v2282 = vrot.slane %v2261, 2
        %v2283 = vsel %vm899, %v2274, %v2282
        %v2284 = vrot.slane %v2262, 2
        %v2285 = vsel %vm899, %v2277, %v2284
        %v2286 = vrot.slane %v2263, 2
        %v2287 = vsel %vm899, %v2280, %v2286
        %2288 = vrot.lane.b32.xlu0 %v2275, 120
        %v2289 = vpop.permute.xlu0 %2288
        %2290 = vrot.lane.b32.xlu0 %v2278, 120
        %v2291 = vpop.permute.xlu0 %2290
        %2292 = vrot.lane.b32.xlu0 %v2281, 120
        %v2293 = vpop.permute.xlu0 %2292
        %2294 = vrot.lane.b32.xlu0 %v2283, 120
        %v2295 = vpop.permute.xlu0 %2294
        %2296 = vrot.lane.b32.xlu0 %v2285, 120
        %v2297 = vpop.permute.xlu0 %2296
        %2298 = vrot.lane.b32.xlu0 %v2287, 120
        %v2299 = vpop.permute.xlu0 %2298
        %v2300 = vsel %vm1142, %v2289, %v2291
        %v2301 = vsel %vm1142, %v2291, %v2293
        %v2302 = vsel %vm1142, %v2295, %v2297
        %v2303 = vsel %vm1142, %v2297, %v2299
        %v2308 = vadd.f32 %v2239, %v2300
        %v2309 = vadd.f32 %v2240, %v2301
        %v2310 = vadd.f32 %v2241, %v2302
        %v2311 = vadd.f32 %v2242, %v2303
        %v2312 = vadd.f32 %v2308, %v2310
        %v2313 = vrot.slane %v2312, 4
        %v2314 = vadd.f32 %v2312, %v2313
        %v2315 = vrot.slane %v2314, 2
        %v2316 = vadd.f32 %v2314, %v2315
        %v2317 = vrot.slane %v2316, 1
        %v2318 = vadd.f32 %v2316, %v2317
        %v2319 = vadd.f32 %v2309, %v2311
        %v2320 = vrot.slane %v2319, 4
        %v2321 = vadd.f32 %v2319, %v2320
        %v2322 = vrot.slane %v2321, 2
        %v2323 = vadd.f32 %v2321, %v2322
        %v2324 = vrot.slane %v2323, 1
        %v2325 = vadd.f32 %v2323, %v2324
        %v2326 = vmul.f32 %v2308, %v2308
        %v2327 = vmul.f32 %v2309, %v2309
        %v2328 = vmul.f32 %v2310, %v2310
        %v2329 = vmul.f32 %v2311, %v2311
        %v2330 = vadd.f32 %v2326, %v2328
        %v2331 = vrot.slane %v2330, 4
        %v2332 = vadd.f32 %v2330, %v2331
        %v2333 = vrot.slane %v2332, 2
        %v2334 = vadd.f32 %v2332, %v2333
        %v2335 = vrot.slane %v2334, 1
        %v2336 = vadd.f32 %v2334, %v2335
        %v2337 = vadd.f32 %v2327, %v2329
        %v2338 = vrot.slane %v2337, 4
        %v2339 = vadd.f32 %v2337, %v2338
        %v2340 = vrot.slane %v2339, 2
        %v2341 = vadd.f32 %v2339, %v2340
        %v2342 = vrot.slane %v2341, 1
        %v2343 = vadd.f32 %v2341, %v2342
        %v2344 = vsel %vm821, %v2318, %v2336
        %v2345 = vsel %vm821, %v2325, %v2343
        %2346 = vmatpush.msra.mxu0 %v1342
        %2347 = vmatpush.msra.mxu0 %v1341
        %2348 = vmatpush.msra.mxu0 %v1340
        %2349 = vmatpush.msra.mxu0 %v1339
        %2350 = vmatpush.msra.mxu0 %v1338
        %2351 = vmatpush.msra.mxu0 %v1337
        %2352 = vmatpush.msra.mxu0 %v1336
        %2353 = vmatpush.msra.mxu0 %v1335
        %2354 = vmatpush.msra.mxu0 %v1334
        %2355 = vmatpush.msra.mxu0 %v1333
        %2356 = vmatpush.msra.mxu0 %v1332
        %2357 = vmatpush.msra.mxu0 %v1331
        %2358 = vmatpush.msra.mxu0 %v1330
        %2359 = vmatpush.msra.mxu0 %v1329
        %2360 = vmatpush.msra.mxu0 %v1328
        %2361 = vmatpush.msra.mxu0 %v1327
        %2362 = vmatmul.f32.gmra.mxu0 %v2344
        %v2363 = vpop.f32.mrf.mxu0
        %v2364 = vadd.f32 0.0, %v2363
        %2365 = vdwg.mxu0
        %2366 = vmatpush.msra.mxu0 %v1358
        %2367 = vmatpush.msra.mxu0 %v1357
        %2368 = vmatpush.msra.mxu0 %v1356
        %2369 = vmatpush.msra.mxu0 %v1355
        %2370 = vmatpush.msra.mxu0 %v1354
        %2371 = vmatpush.msra.mxu0 %v1353
        %2372 = vmatpush.msra.mxu0 %v1352
        %2373 = vmatpush.msra.mxu0 %v1351
        %2374 = vmatpush.msra.mxu0 %v1350
        %2375 = vmatpush.msra.mxu0 %v1349
        %2376 = vmatpush.msra.mxu0 %v1348
        %2377 = vmatpush.msra.mxu0 %v1347
        %2378 = vmatpush.msra.mxu0 %v1346
        %2379 = vmatpush.msra.mxu0 %v1345
        %2380 = vmatpush.msra.mxu0 %v1344
        %2381 = vmatpush.msra.mxu0 %v1343
        %2382 = vmatmul.f32.gmra.mxu0 %v2345
        %v2383 = vpop.f32.mrf.mxu0
        %v2384 = vadd.f32 %v2364, %v2383
        %2385 = vdwg.mxu0
        %v2386 = vmul.f32 %v2384, 0.0009765625
        %v2387 = vmul.f32 %v2386, %v2386
        %v2389 = vrot.slane %v2387, 7
        %v2391 = vsub.f32 %v2386, %v2389
        %v2392 = vadd.f32 %v2391, 1e-05
        %v2393 = vrsqrt.pop %v2392
        %v2394 = vmul.f32 %v2393, %v2392
        %v2395 = vmul.f32 %v2394, %v2393
        %v2396 = vmul.f32 0.5, %v2395
        %v2397 = vsub.f32 1.5, %v2396
        %v2398 = vmul.f32 %v2393, %v2397
        %vm2399 = vweird.f32 %v2392
        %vm2400 = vweird.f32 %v2393
        %vm2401 = vmor %vm2399, %vm2400
        %v2402 = vsel %vm2401, %v2393, %v2398
        %v2403 = vsub.f32 0.0, %v2386
        %v2405 = vrot.slane %v2402, 1
        %v2407 = vmul.f32 %v2403, %v2405
        %v2409 = vrot.slane %v2407, 7
        %v2411 = vsel %vm821, %v2405, %v2409
        %2412 = vst [vmem:[#allocation1] ss:$2 sm:$0xff] %v1425
        %v2413 = vld.sshfl [vmem:[#allocation1] sm:$0xff pattern:$0x75316420]
        %v2414 = vld.sshfl [vmem:[#allocation1 + $0x8] sm:$0xff pattern:$0x75316420]
        %v2416 = vsel %vm806, %v2411, 0
        %v2418 = vsel %vm1433, %v2413, 0
        %v2420 = vsel %vm1433, %v2414, 0
        %2422 = vmatpush.msra.mxu0 0.0
        %2423 = vmatpush.msra.mxu0 0.0
        %2424 = vmatpush.msra.mxu0 0.0
        %2425 = vmatpush.msra.mxu0 0.0
        %2426 = vmatpush.msra.mxu0 0.0
        %2427 = vmatpush.msra.mxu0 0.0
        %2428 = vmatpush.msra.mxu0 0.0
        %2429 = vmatpush.msra.mxu0 0.0
        %2430 = vmatpush.msra.mxu0 0.0
        %2431 = vmatpush.msra.mxu0 0.0
        %2432 = vmatpush.msra.mxu0 0.0
        %2433 = vmatpush.msra.mxu0 0.0
        %2434 = vmatpush.msra.mxu0 0.0
        %2435 = vmatpush.msra.mxu0 0.0
        %2436 = vmatpush.msra.mxu0 0.0
        %2437 = vmatpush.msra.mxu0 %v2418
        %2438 = vmatmul.f32.gmra.mxu0 %v2416
        %v2439 = vpop.f32.mrf.mxu0
        %v2440 = vadd.f32 0.0, %v2439
        %2441 = vdwg.mxu0
        %2442 = vmatpush.msra.mxu0 0.0
        %2443 = vmatpush.msra.mxu0 0.0
        %2444 = vmatpush.msra.mxu0 0.0
        %2445 = vmatpush.msra.mxu0 0.0
        %2446 = vmatpush.msra.mxu0 0.0
        %2447 = vmatpush.msra.mxu0 0.0
        %2448 = vmatpush.msra.mxu0 0.0
        %2449 = vmatpush.msra.mxu0 0.0
        %2450 = vmatpush.msra.mxu0 0.0
        %2451 = vmatpush.msra.mxu0 0.0
        %2452 = vmatpush.msra.mxu0 0.0
        %2453 = vmatpush.msra.mxu0 0.0
        %2454 = vmatpush.msra.mxu0 0.0
        %2455 = vmatpush.msra.mxu0 0.0
        %2456 = vmatpush.msra.mxu0 0.0
        %2457 = vmatpush.msra.mxu0 %v2420
        %2458 = vmatmul.f32.gmra.mxu0 %v2416
        %v2459 = vpop.f32.mrf.mxu0
        %v2460 = vadd.f32 0.0, %v2459
        %2461 = vdwg.mxu0
        %v2462 = vperm.slane %v2440, 0
        %v2463 = vperm.slane %v2460, 0
        %v2464 = vmul.f32 %v2308, %v2462
        %v2465 = vmul.f32 %v2309, %v2463
        %v2466 = vmul.f32 %v2310, %v2462
        %v2467 = vmul.f32 %v2311, %v2463
        %v2468 = vperm.slane %v2440, 1
        %v2469 = vperm.slane %v2460, 1
        %v2470 = vadd.f32 %v2464, %v2468
        %v2471 = vadd.f32 %v2465, %v2469
        %v2472 = vadd.f32 %v2466, %v2468
        %v2473 = vadd.f32 %v2467, %v2469
        %v2474 = vmax.f32 %v2470, 0.0
        %v2475 = vmax.f32 %v2471, 0.0
        %v2476 = vmax.f32 %v2472, 0.0
        %v2477 = vmax.f32 %v2473, 0.0
        %2478 = vmatpush.msra.mxu0 %v1786
        %2479 = vmatpush.msra.mxu0 %v1784
        %2480 = vmatpush.msra.mxu0 %v1782
        %2481 = vmatpush.msra.mxu0 %v1780
        %2482 = vmatpush.msra.mxu0 %v1778
        %2483 = vmatpush.msra.mxu0 %v1776
        %2484 = vmatpush.msra.mxu0 %v1774
        %2485 = vmatpush.msra.mxu0 %v1772
        %2486 = vmatpush.msra.mxu0 %v1770
        %2487 = vmatpush.msra.mxu0 %v1768
        %2488 = vmatpush.msra.mxu0 %v1766
        %2489 = vmatpush.msra.mxu0 %v1764
        %2490 = vmatpush.msra.mxu0 %v1762
        %2491 = vmatpush.msra.mxu0 %v1760
        %2492 = vmatpush.msra.mxu0 %v1758
        %2493 = vmatpush.msra.mxu0 %v1756
        %2494 = vmatmul.f32.gmra.mxu0 %v2474
        %v2495 = vpop.f32.mrf.mxu0
        %v2496 = vadd.f32 0.0, %v2495
        %2497 = vmatmul.f32.gmra.mxu0 %v2476
        %v2498 = vpop.f32.mrf.mxu0
        %v2499 = vadd.f32 0.0, %v2498
        %2500 = vdwg.mxu0
        %2501 = vmatpush.msra.mxu0 %v1818
        %2502 = vmatpush.msra.mxu0 %v1816
        %2503 = vmatpush.msra.mxu0 %v1814
        %2504 = vmatpush.msra.mxu0 %v1812
        %2505 = vmatpush.msra.mxu0 %v1810
        %2506 = vmatpush.msra.mxu0 %v1808
        %2507 = vmatpush.msra.mxu0 %v1806
        %2508 = vmatpush.msra.mxu0 %v1804
        %2509 = vmatpush.msra.mxu0 %v1802
        %2510 = vmatpush.msra.mxu0 %v1800
        %2511 = vmatpush.msra.mxu0 %v1798
        %2512 = vmatpush.msra.mxu0 %v1796
        %2513 = vmatpush.msra.mxu0 %v1794
        %2514 = vmatpush.msra.mxu0 %v1792
        %2515 = vmatpush.msra.mxu0 %v1790
        %2516 = vmatpush.msra.mxu0 %v1788
        %2517 = vmatmul.f32.gmra.mxu0 %v2475
        %v2518 = vpop.f32.mrf.mxu0
        %v2519 = vadd.f32 %v2496, %v2518
        %2520 = vmatmul.f32.gmra.mxu0 %v2477
        %v2521 = vpop.f32.mrf.mxu0
        %v2522 = vadd.f32 %v2499, %v2521
        %2523 = vdwg.mxu0
        %2524 = vmatpush.msra.mxu0 %v1787
        %2525 = vmatpush.msra.mxu0 %v1785
        %2526 = vmatpush.msra.mxu0 %v1783
        %2527 = vmatpush.msra.mxu0 %v1781
        %2528 = vmatpush.msra.mxu0 %v1779
        %2529 = vmatpush.msra.mxu0 %v1777
        %2530 = vmatpush.msra.mxu0 %v1775
        %2531 = vmatpush.msra.mxu0 %v1773
        %2532 = vmatpush.msra.mxu0 %v1771
        %2533 = vmatpush.msra.mxu0 %v1769
        %2534 = vmatpush.msra.mxu0 %v1767
        %2535 = vmatpush.msra.mxu0 %v1765
        %2536 = vmatpush.msra.mxu0 %v1763
        %2537 = vmatpush.msra.mxu0 %v1761
        %2538 = vmatpush.msra.mxu0 %v1759
        %2539 = vmatpush.msra.mxu0 %v1757
        %2540 = vmatmul.f32.gmra.mxu0 %v2474
        %v2541 = vpop.f32.mrf.mxu0
        %v2542 = vadd.f32 0.0, %v2541
        %2543 = vmatmul.f32.gmra.mxu0 %v2476
        %v2544 = vpop.f32.mrf.mxu0
        %v2545 = vadd.f32 0.0, %v2544
        %2546 = vdwg.mxu0
        %2547 = vmatpush.msra.mxu0 %v1819
        %2548 = vmatpush.msra.mxu0 %v1817
        %2549 = vmatpush.msra.mxu0 %v1815
        %2550 = vmatpush.msra.mxu0 %v1813
        %2551 = vmatpush.msra.mxu0 %v1811
        %2552 = vmatpush.msra.mxu0 %v1809
        %2553 = vmatpush.msra.mxu0 %v1807
        %2554 = vmatpush.msra.mxu0 %v1805
        %2555 = vmatpush.msra.mxu0 %v1803
        %2556 = vmatpush.msra.mxu0 %v1801
        %2557 = vmatpush.msra.mxu0 %v1799
        %2558 = vmatpush.msra.mxu0 %v1797
        %2559 = vmatpush.msra.mxu0 %v1795
        %2560 = vmatpush.msra.mxu0 %v1793
        %2561 = vmatpush.msra.mxu0 %v1791
        %2562 = vmatpush.msra.mxu0 %v1789
        %2563 = vmatmul.f32.gmra.mxu0 %v2475
        %v2564 = vpop.f32.mrf.mxu0
        %v2565 = vadd.f32 %v2542, %v2564
        %2566 = vmatmul.f32.gmra.mxu0 %v2477
        %v2567 = vpop.f32.mrf.mxu0
        %v2568 = vadd.f32 %v2545, %v2567
        %2569 = vdwg.mxu0
        %v2570 = vadd.f32 %v2519, %v2522
        %v2571 = vrot.slane %v2570, 4
        %v2572 = vadd.f32 %v2570, %v2571
        %v2573 = vrot.slane %v2572, 2
        %v2574 = vadd.f32 %v2572, %v2573
        %v2575 = vrot.slane %v2574, 1
        %v2576 = vadd.f32 %v2574, %v2575
        %v2577 = vadd.f32 %v2565, %v2568
        %v2578 = vrot.slane %v2577, 4
        %v2579 = vadd.f32 %v2577, %v2578
        %v2580 = vrot.slane %v2579, 2
        %v2581 = vadd.f32 %v2579, %v2580
        %v2582 = vrot.slane %v2581, 1
        %v2583 = vadd.f32 %v2581, %v2582
        %v2584 = vmul.f32 %v2519, %v2519
        %v2585 = vmul.f32 %v2565, %v2565
        %v2586 = vmul.f32 %v2522, %v2522
        %v2587 = vmul.f32 %v2568, %v2568
        %v2588 = vadd.f32 %v2584, %v2586
        %v2589 = vrot.slane %v2588, 4
        %v2590 = vadd.f32 %v2588, %v2589
        %v2591 = vrot.slane %v2590, 2
        %v2592 = vadd.f32 %v2590, %v2591
        %v2593 = vrot.slane %v2592, 1
        %v2594 = vadd.f32 %v2592, %v2593
        %v2595 = vadd.f32 %v2585, %v2587
        %v2596 = vrot.slane %v2595, 4
        %v2597 = vadd.f32 %v2595, %v2596
        %v2598 = vrot.slane %v2597, 2
        %v2599 = vadd.f32 %v2597, %v2598
        %v2600 = vrot.slane %v2599, 1
        %v2601 = vadd.f32 %v2599, %v2600
        %v2602 = vsel %vm821, %v2576, %v2594
        %v2603 = vsel %vm821, %v2583, %v2601
        %2604 = vmatpush.msra.mxu0 %v1342
        %2605 = vmatpush.msra.mxu0 %v1341
        %2606 = vmatpush.msra.mxu0 %v1340
        %2607 = vmatpush.msra.mxu0 %v1339
        %2608 = vmatpush.msra.mxu0 %v1338
        %2609 = vmatpush.msra.mxu0 %v1337
        %2610 = vmatpush.msra.mxu0 %v1336
        %2611 = vmatpush.msra.mxu0 %v1335
        %2612 = vmatpush.msra.mxu0 %v1334
        %2613 = vmatpush.msra.mxu0 %v1333
        %2614 = vmatpush.msra.mxu0 %v1332
        %2615 = vmatpush.msra.mxu0 %v1331
        %2616 = vmatpush.msra.mxu0 %v1330
        %2617 = vmatpush.msra.mxu0 %v1329
        %2618 = vmatpush.msra.mxu0 %v1328
        %2619 = vmatpush.msra.mxu0 %v1327
        %2620 = vmatmul.f32.gmra.mxu0 %v2602
        %v2621 = vpop.f32.mrf.mxu0
        %v2622 = vadd.f32 0.0, %v2621
        %2623 = vdwg.mxu0
        %2624 = vmatpush.msra.mxu0 %v1358
        %2625 = vmatpush.msra.mxu0 %v1357
        %2626 = vmatpush.msra.mxu0 %v1356
        %2627 = vmatpush.msra.mxu0 %v1355
        %2628 = vmatpush.msra.mxu0 %v1354
        %2629 = vmatpush.msra.mxu0 %v1353
        %2630 = vmatpush.msra.mxu0 %v1352
        %2631 = vmatpush.msra.mxu0 %v1351
        %2632 = vmatpush.msra.mxu0 %v1350
        %2633 = vmatpush.msra.mxu0 %v1349
        %2634 = vmatpush.msra.mxu0 %v1348
        %2635 = vmatpush.msra.mxu0 %v1347
        %2636 = vmatpush.msra.mxu0 %v1346
        %2637 = vmatpush.msra.mxu0 %v1345
        %2638 = vmatpush.msra.mxu0 %v1344
        %2639 = vmatpush.msra.mxu0 %v1343
        %2640 = vmatmul.f32.gmra.mxu0 %v2603
        %v2641 = vpop.f32.mrf.mxu0
        %v2642 = vadd.f32 %v2622, %v2641
        %2643 = vdwg.mxu0
        %v2644 = vmul.f32 %v2642, 0.0009765625
        %v2645 = vmul.f32 %v2644, %v2644
        %v2647 = vrot.slane %v2645, 7
        %v2649 = vsub.f32 %v2644, %v2647
        %v2650 = vadd.f32 %v2649, 1e-05
        %v2651 = vrsqrt.pop %v2650
        %v2652 = vmul.f32 %v2651, %v2650
        %v2653 = vmul.f32 %v2652, %v2651
        %v2654 = vmul.f32 0.5, %v2653
        %v2655 = vsub.f32 1.5, %v2654
        %v2656 = vmul.f32 %v2651, %v2655
        %vm2657 = vweird.f32 %v2650
        %vm2658 = vweird.f32 %v2651
        %vm2659 = vmor %vm2657, %vm2658
        %v2660 = vsel %vm2659, %v2651, %v2656
        %v2661 = vsub.f32 0.0, %v2644
        %v2663 = vrot.slane %v2660, 1
        %v2665 = vmul.f32 %v2661, %v2663
        %v2667 = vrot.slane %v2665, 7
        %v2669 = vsel %vm821, %v2663, %v2667
        %2670 = vst [vmem:[#allocation1] ss:$2 sm:$0xff] %v1425
        %v2671 = vld.sshfl [vmem:[#allocation1] sm:$0xff pattern:$0x75316420]
        %v2672 = vld.sshfl [vmem:[#allocation1 + $0x8] sm:$0xff pattern:$0x75316420]
        %v2674 = vsel %vm806, %v2669, 0
        %v2676 = vsel %vm1433, %v2671, 0
        %v2678 = vsel %vm1433, %v2672, 0
        %2680 = vmatpush.msra.mxu0 0.0
        %2681 = vmatpush.msra.mxu0 0.0
        %2682 = vmatpush.msra.mxu0 0.0
        %2683 = vmatpush.msra.mxu0 0.0
        %2684 = vmatpush.msra.mxu0 0.0
        %2685 = vmatpush.msra.mxu0 0.0
        %2686 = vmatpush.msra.mxu0 0.0
        %2687 = vmatpush.msra.mxu0 0.0
        %2688 = vmatpush.msra.mxu0 0.0
        %2689 = vmatpush.msra.mxu0 0.0
        %2690 = vmatpush.msra.mxu0 0.0
        %2691 = vmatpush.msra.mxu0 0.0
        %2692 = vmatpush.msra.mxu0 0.0
        %2693 = vmatpush.msra.mxu0 0.0
        %2694 = vmatpush.msra.mxu0 0.0
        %2695 = vmatpush.msra.mxu0 %v2676
        %2696 = vmatmul.f32.gmra.mxu0 %v2674
        %v2697 = vpop.f32.mrf.mxu0
        %v2698 = vadd.f32 0.0, %v2697
        %2699 = vdwg.mxu0
        %2700 = vmatpush.msra.mxu0 0.0
        %2701 = vmatpush.msra.mxu0 0.0
        %2702 = vmatpush.msra.mxu0 0.0
        %2703 = vmatpush.msra.mxu0 0.0
        %2704 = vmatpush.msra.mxu0 0.0
        %2705 = vmatpush.msra.mxu0 0.0
        %2706 = vmatpush.msra.mxu0 0.0
        %2707 = vmatpush.msra.mxu0 0.0
        %2708 = vmatpush.msra.mxu0 0.0
        %2709 = vmatpush.msra.mxu0 0.0
        %2710 = vmatpush.msra.mxu0 0.0
        %2711 = vmatpush.msra.mxu0 0.0
        %2712 = vmatpush.msra.mxu0 0.0
        %2713 = vmatpush.msra.mxu0 0.0
        %2714 = vmatpush.msra.mxu0 0.0
        %2715 = vmatpush.msra.mxu0 %v2678
        %2716 = vmatmul.f32.gmra.mxu0 %v2674
        %v2717 = vpop.f32.mrf.mxu0
        %v2718 = vadd.f32 0.0, %v2717
        %2719 = vdwg.mxu0
        %v2720 = vperm.slane %v2698, 0
        %v2721 = vperm.slane %v2718, 0
        %v2722 = vmul.f32 %v2519, %v2720
        %v2723 = vmul.f32 %v2565, %v2721
        %v2724 = vmul.f32 %v2522, %v2720
        %v2725 = vmul.f32 %v2568, %v2721
        %v2726 = vperm.slane %v2698, 1
        %v2727 = vperm.slane %v2718, 1
        %v2728 = vadd.f32 %v2722, %v2726
        %v2729 = vadd.f32 %v2723, %v2727
        %v2730 = vadd.f32 %v2724, %v2726
        %v2731 = vadd.f32 %v2725, %v2727
        %v2732 = vmax.f32 %v2728, 0.0
        %v2733 = vmax.f32 %v2729, 0.0
        %v2734 = vmax.f32 %v2730, 0.0
        %v2735 = vmax.f32 %v2731, 0.0
        %v2736 = vld [vmem:[%s9] sm:$0xff]
        %v2737 = vld [vmem:[%s9 + $0x8] sm:$0xff]
        %v2738 = vld [vmem:[%s9 + $0x10] sm:$0xff]
        %v2739 = vld [vmem:[%s9 + $0x18] sm:$0xff]
        %v2740 = vld [vmem:[%s9 + $0x20] sm:$0xff]
        %v2741 = vld [vmem:[%s9 + $0x28] sm:$0xff]
        %v2742 = vld [vmem:[%s9 + $0x30] sm:$0xff]
        %v2743 = vld [vmem:[%s9 + $0x38] sm:$0xff]
        %v2744 = vld [vmem:[%s9 + $0x40] sm:$0xff]
        %v2745 = vld [vmem:[%s9 + $0x48] sm:$0xff]
        %v2746 = vld [vmem:[%s9 + $0x50] sm:$0xff]
        %v2747 = vld [vmem:[%s9 + $0x58] sm:$0xff]
        %v2748 = vld [vmem:[%s9 + $0x60] sm:$0xff]
        %v2749 = vld [vmem:[%s9 + $0x68] sm:$0xff]
        %v2750 = vld [vmem:[%s9 + $0x70] sm:$0xff]
        %v2751 = vld [vmem:[%s9 + $0x78] sm:$0xff]
        %v2752 = vld [vmem:[%s9 + $0x80] sm:$0xff]
        %v2753 = vld [vmem:[%s9 + $0x88] sm:$0xff]
        %v2754 = vld [vmem:[%s9 + $0x90] sm:$0xff]
        %v2755 = vld [vmem:[%s9 + $0x98] sm:$0xff]
        %v2756 = vld [vmem:[%s9 + $0xa0] sm:$0xff]
        %v2757 = vld [vmem:[%s9 + $0xa8] sm:$0xff]
        %v2758 = vld [vmem:[%s9 + $0xb0] sm:$0xff]
        %v2759 = vld [vmem:[%s9 + $0xb8] sm:$0xff]
        %v2760 = vld [vmem:[%s9 + $0xc0] sm:$0xff]
        %v2761 = vld [vmem:[%s9 + $0xc8] sm:$0xff]
        %v2762 = vld [vmem:[%s9 + $0xd0] sm:$0xff]
        %v2763 = vld [vmem:[%s9 + $0xd8] sm:$0xff]
        %v2764 = vld [vmem:[%s9 + $0xe0] sm:$0xff]
        %v2765 = vld [vmem:[%s9 + $0xe8] sm:$0xff]
        %v2766 = vld [vmem:[%s9 + $0xf0] sm:$0xff]
        %v2767 = vld [vmem:[%s9 + $0xf8] sm:$0xff]
        %v2768 = vld [vmem:[%s9 + $0x100] sm:$0xff]
        %v2769 = vld [vmem:[%s9 + $0x108] sm:$0xff]
        %v2770 = vld [vmem:[%s9 + $0x110] sm:$0xff]
        %v2771 = vld [vmem:[%s9 + $0x118] sm:$0xff]
        %v2772 = vld [vmem:[%s9 + $0x120] sm:$0xff]
        %v2773 = vld [vmem:[%s9 + $0x128] sm:$0xff]
        %v2774 = vld [vmem:[%s9 + $0x130] sm:$0xff]
        %v2775 = vld [vmem:[%s9 + $0x138] sm:$0xff]
        %v2776 = vld [vmem:[%s9 + $0x140] sm:$0xff]
        %v2777 = vld [vmem:[%s9 + $0x148] sm:$0xff]
        %v2778 = vld [vmem:[%s9 + $0x150] sm:$0xff]
        %v2779 = vld [vmem:[%s9 + $0x158] sm:$0xff]
        %v2780 = vld [vmem:[%s9 + $0x160] sm:$0xff]
        %v2781 = vld [vmem:[%s9 + $0x168] sm:$0xff]
        %v2782 = vld [vmem:[%s9 + $0x170] sm:$0xff]
        %v2783 = vld [vmem:[%s9 + $0x178] sm:$0xff]
        %v2784 = vld [vmem:[%s9 + $0x180] sm:$0xff]
        %v2785 = vld [vmem:[%s9 + $0x188] sm:$0xff]
        %v2786 = vld [vmem:[%s9 + $0x190] sm:$0xff]
        %v2787 = vld [vmem:[%s9 + $0x198] sm:$0xff]
        %v2788 = vld [vmem:[%s9 + $0x1a0] sm:$0xff]
        %v2789 = vld [vmem:[%s9 + $0x1a8] sm:$0xff]
        %v2790 = vld [vmem:[%s9 + $0x1b0] sm:$0xff]
        %v2791 = vld [vmem:[%s9 + $0x1b8] sm:$0xff]
        %v2792 = vld [vmem:[%s9 + $0x1c0] sm:$0xff]
        %v2793 = vld [vmem:[%s9 + $0x1c8] sm:$0xff]
        %v2794 = vld [vmem:[%s9 + $0x1d0] sm:$0xff]
        %v2795 = vld [vmem:[%s9 + $0x1d8] sm:$0xff]
        %v2796 = vld [vmem:[%s9 + $0x1e0] sm:$0xff]
        %v2797 = vld [vmem:[%s9 + $0x1e8] sm:$0xff]
        %v2798 = vld [vmem:[%s9 + $0x1f0] sm:$0xff]
        %v2799 = vld [vmem:[%s9 + $0x1f8] sm:$0xff]
        %v2800 = vld [vmem:[#allocation6] sm:$0x3]
        %v2802 = vperm.slane %v2800, 0
        %v2803 = vperm.slane %v2800, 1
        %2806 = vmatpush.msra.mxu0 %v2766
        %2807 = vmatpush.msra.mxu0 %v2764
        %2808 = vmatpush.msra.mxu0 %v2762
        %2809 = vmatpush.msra.mxu0 %v2760
        %2810 = vmatpush.msra.mxu0 %v2758
        %2811 = vmatpush.msra.mxu0 %v2756
        %2812 = vmatpush.msra.mxu0 %v2754
        %2813 = vmatpush.msra.mxu0 %v2752
        %2814 = vmatpush.msra.mxu0 %v2750
        %2815 = vmatpush.msra.mxu0 %v2748
        %2816 = vmatpush.msra.mxu0 %v2746
        %2817 = vmatpush.msra.mxu0 %v2744
        %2818 = vmatpush.msra.mxu0 %v2742
        %2819 = vmatpush.msra.mxu0 %v2740
        %2820 = vmatpush.msra.mxu0 %v2738
        %2821 = vmatpush.msra.mxu0 %v2736
        %2822 = vmatmul.f32.gmra.mxu0 %v2732
        %v2823 = vpop.f32.mrf.mxu0
        %v2824 = vadd.f32 %v2802, %v2823
        %2825 = vmatmul.f32.gmra.mxu0 %v2734
        %v2826 = vpop.f32.mrf.mxu0
        %v2827 = vadd.f32 %v2802, %v2826
        %2828 = vdwg.mxu0
        %2829 = vmatpush.msra.mxu0 %v2798
        %2830 = vmatpush.msra.mxu0 %v2796
        %2831 = vmatpush.msra.mxu0 %v2794
        %2832 = vmatpush.msra.mxu0 %v2792
        %2833 = vmatpush.msra.mxu0 %v2790
        %2834 = vmatpush.msra.mxu0 %v2788
        %2835 = vmatpush.msra.mxu0 %v2786
        %2836 = vmatpush.msra.mxu0 %v2784
        %2837 = vmatpush.msra.mxu0 %v2782
        %2838 = vmatpush.msra.mxu0 %v2780
        %2839 = vmatpush.msra.mxu0 %v2778
        %2840 = vmatpush.msra.mxu0 %v2776
        %2841 = vmatpush.msra.mxu0 %v2774
        %2842 = vmatpush.msra.mxu0 %v2772
        %2843 = vmatpush.msra.mxu0 %v2770
        %2844 = vmatpush.msra.mxu0 %v2768
        %2845 = vmatmul.f32.gmra.mxu0 %v2733
        %v2846 = vpop.f32.mrf.mxu0
        %v2847 = vadd.f32 %v2824, %v2846
        %2848 = vmatmul.f32.gmra.mxu0 %v2735
        %v2849 = vpop.f32.mrf.mxu0
        %v2850 = vadd.f32 %v2827, %v2849
        %2851 = vdwg.mxu0
        %2852 = vmatpush.msra.mxu0 %v2767
        %2853 = vmatpush.msra.mxu0 %v2765
        %2854 = vmatpush.msra.mxu0 %v2763
        %2855 = vmatpush.msra.mxu0 %v2761
        %2856 = vmatpush.msra.mxu0 %v2759
        %2857 = vmatpush.msra.mxu0 %v2757
        %2858 = vmatpush.msra.mxu0 %v2755
        %2859 = vmatpush.msra.mxu0 %v2753
        %2860 = vmatpush.msra.mxu0 %v2751
        %2861 = vmatpush.msra.mxu0 %v2749
        %2862 = vmatpush.msra.mxu0 %v2747
        %2863 = vmatpush.msra.mxu0 %v2745
        %2864 = vmatpush.msra.mxu0 %v2743
        %2865 = vmatpush.msra.mxu0 %v2741
        %2866 = vmatpush.msra.mxu0 %v2739
        %2867 = vmatpush.msra.mxu0 %v2737
        %2868 = vmatmul.f32.gmra.mxu0 %v2732
        %v2869 = vpop.f32.mrf.mxu0
        %v2870 = vadd.f32 %v2803, %v2869
        %2871 = vmatmul.f32.gmra.mxu0 %v2734
        %v2872 = vpop.f32.mrf.mxu0
        %v2873 = vadd.f32 %v2803, %v2872
        %2874 = vdwg.mxu0
        %2875 = vmatpush.msra.mxu0 %v2799
        %2876 = vmatpush.msra.mxu0 %v2797
        %2877 = vmatpush.msra.mxu0 %v2795
        %2878 = vmatpush.msra.mxu0 %v2793
        %2879 = vmatpush.msra.mxu0 %v2791
        %2880 = vmatpush.msra.mxu0 %v2789
        %2881 = vmatpush.msra.mxu0 %v2787
        %2882 = vmatpush.msra.mxu0 %v2785
        %2883 = vmatpush.msra.mxu0 %v2783
        %2884 = vmatpush.msra.mxu0 %v2781
        %2885 = vmatpush.msra.mxu0 %v2779
        %2886 = vmatpush.msra.mxu0 %v2777
        %2887 = vmatpush.msra.mxu0 %v2775
        %2888 = vmatpush.msra.mxu0 %v2773
        %2889 = vmatpush.msra.mxu0 %v2771
        %2890 = vmatpush.msra.mxu0 %v2769
        %2891 = vmatmul.f32.gmra.mxu0 %v2733
        %v2892 = vpop.f32.mrf.mxu0
        %v2893 = vadd.f32 %v2870, %v2892
        %2894 = vmatmul.f32.gmra.mxu0 %v2735
        %v2895 = vpop.f32.mrf.mxu0
        %v2896 = vadd.f32 %v2873, %v2895
        %2897 = vdwg.mxu0
        %2898 = vst [vmem:[%s503] sm:$0xff] %v2847
        %2899 = vst.msk [vmem:[%s503 + $0x8] sm:$0xff] %vm528, %v2893
        %2900 = vst [vmem:[%s503 + $0x10] sm:$0xff] %v2850
        %2901 = vst.msk [vmem:[%s503 + $0x18] sm:$0xff] %vm528, %v2896
        %p2902 = scmp.lt.s32.totalorder %s27, 1
        %s2903 = scalar_select %p2902, %s27, 1
        %s2904 = smul.addr %s2903, 4
        %s2905 = smul.addr %s2904, 8
        %s2906 = scalar_lea.vmem %s13, %s2905
        // Predicated region
        $region89: #{transposed_classifier_forward.1} parent=71 // pred_check
          %p2907 = pneg %p323
        $region90: #{transposed_classifier_forward.1} parent=71 // pred_check_branch
          %2909 = sbr.rel (%p2907) target = $region92
        $region91: #{transposed_classifier_forward.1} parent=71 // pred_region
          _
        $region92: #{transposed_classifier_forward.1} parent=71 // pred_fallthru
          _
      $region72: #{transposed_classifier_forward.1} parent=5 // pred_fallthru
        _
      %p2910 = scmp.le.s32.totalorder 2, %s22
      // Predicated region
      $region93: #{transposed_classifier_forward.1} parent=5 // pred_check
        %p2911 = pneg %p2910
      $region94: #{transposed_classifier_forward.1} parent=5 // pred_check_branch
        %2913 = sbr.rel (%p2911) target = $region96
      $region95: #{transposed_classifier_forward.1} parent=5 // pred_region
        %s2914 = ssub.s32 %s22, 2
        // Predicated region
        $region97: #{transposed_classifier_forward.1} parent=95 // pred_check
          %p2915 = pneg %p329
        $region98: #{transposed_classifier_forward.1} parent=95 // pred_check_branch
          %2917 = sbr.rel (%p2915) target = $region100
        $region99: #{transposed_classifier_forward.1} parent=95 // pred_region
          %p2918 = scmp.lt.s32.totalorder %s28, 1
          %s2919 = scalar_select %p2918, %s28, 1
          %s2920 = smul.addr %s2919, 4
          %s2921 = smul.addr %s2920, 8
          %s2922 = scalar_lea.vmem %s13, %s2921
        $region100: #{transposed_classifier_forward.1} parent=95 // pred_fallthru
          _
      $region96: #{transposed_classifier_forward.1} parent=5 // pred_fallthru
        _
    $region6: #{transposed_classifier_forward.1} parent=1 // loop_footer
      %s26 = sadd.s32 1, %s22
    $region7: #{transposed_classifier_forward.1} parent=1 // loop_footer_branch
      %21 = sbr.rel target = $region3
    $region8: #{transposed_classifier_forward.1} parent=1 // loop_exit
      _
    %2923 = vsyncpa [#allocation3], 1
    %s2924 = scalar_lea.sflag [#allocation3], 1
    %2925 = vsyncpa %s2924, 1
    %2926 = vsyncpa [#allocation5], 1
    %2927 = vsyncpa [#allocation8], 1

</llo_original>
